<compile_context>
chip_gen: v7x
topology: tpu7x:2x2x1
jax: 0.10.0
libtpu: 0.0.40
codegen_flags: <defaults>
</compile_context>

<pallas_src>
import functools

import numpy as np
import jax
import jax.numpy as jnp
from jax.experimental import pallas as pl
from jax.experimental.pallas import tpu as pltpu


def _round_up(x, m):
    return (x + m - 1) // m * m


def _vmem_limit_bytes():
    """Generation-aware scoped-VMEM limit: large on 128 MiB parts, conservative on v7x."""
    phys = 64 << 20
    try:
        info = pltpu.get_tpu_info()
        for name in ("vmem_capacity_bytes", "vmem_size_bytes", "vmem_bytes"):
            val = getattr(info, name, None)
            if val:
                phys = int(val)
                break
    except Exception:
        pass
    return (80 << 20) if phys >= (100 << 20) else (32 << 20)


def _pick_row_tile(Ho, Wo, Cin, Chid, Cout, Hp, Wp, k, stride, budget):
    """Largest output-row tile (a divisor of Ho) whose per-step working set fits `budget`."""
    min_tr = max(1, -(-max(1, k // 2) // stride))   # middle tiles must clear the top halo

    def step_bytes(tr):
        band_h = (tr - 1) * stride + k
        resident = 2 * Hp * Wp * Cin * 2                          # bf16 input block, 2 buffers
        weights = 2 * (2 * (Cin * Chid + Chid * Cout)
                       + 4 * (k * k * Chid + 2 * Chid + 2 * Cout))
        out_blk = 2 * (tr * Wo * Cout * 2 + Cout * 4)
        band = band_h * Wp * Chid * 4                             # halo-band scratch (f32)
        tmps = 3 * band + 5 * tr * Wo * Chid * 4 + 3 * tr * Wo * Cout * 4
        return resident + weights + out_blk + band + tmps

    divisors = [d for d in range(Ho, 0, -1) if Ho % d == 0 and d >= min_tr]
    if not divisors:
        divisors = [Ho]
    for prefer_aligned in (True, False):
        for d in divisors:
            if prefer_aligned and not (d == Ho or d % 8 == 0):
                continue
            if step_bytes(d) <= budget:
                return d
    return divisors[-1]


# ---------------------------------------------------------------------------
# Kernel A: expand 1x1 + BN1 + SiLU  ->  depthwise kxk + BN2 + SiLU  ->  1x1 proj + BN3,
# plus per-tile partial spatial sums for the SE pool.  Grid = (batch, row tiles), both parallel.
# ---------------------------------------------------------------------------
def _mbconv_main_kernel(*refs, k, stride, pad, TR, Wo, bot_rows, do_expand):
    if do_expand:
        (xpad_ref, we_ref, s1_ref, b1_ref, wdw_ref, s2_ref, b2_ref,
         wp_ref, s3_ref, b3_ref, v_ref, pool_ref, band_ref) = refs
    else:
        (xpad_ref, wdw_ref, s2_ref, b2_ref,
         wp_ref, s3_ref, b3_ref, v_ref, pool_ref) = refs
        band_ref = None

    C = wdw_ref.shape[1]                       # hidden (depthwise) channel count
    Cout = s3_ref.shape[1]
    Wp = xpad_ref.shape[1]                     # padded width
    band_h = (TR - 1) * stride + k             # input rows feeding this output-row tile
    r = pl.program_id(1)
    row0 = r * (TR * stride)
    if (TR * stride) % 8 == 0:
        row0 = pl.multiple_of(row0, 8)

    if do_expand:
        # 1x1 expand conv + folded BN1 + SiLU for just this tile's input band (bf16 operands
        # on the MXU, f32 epilogue); the expanded activation never touches HBM and no
        # full-image halo slab is kept resident.
        xband = xpad_ref[pl.ds(row0, band_h), :, :]            # (band_h, Wp, Cin) bf16
        x2d = xband.reshape(band_h * Wp, xband.shape[-1])
        u = jnp.dot(x2d, we_ref[...], preferred_element_type=jnp.float32)
        u = u * s1_ref[...] + b1_ref[...]
        u = u * jax.nn.sigmoid(u)                              # SiLU, f32
        band_ref[...] = u.reshape(band_h, Wp, C)
        # Re-impose the depthwise conv's zero padding: expand(0)+BN+SiLU != 0 on the border.
        if pad > 0:
            zc = jnp.zeros((band_h, pad, C), jnp.float32)
            band_ref[:, 0:pad, :] = zc
            band_ref[:, Wp - pad:Wp, :] = zc

            @pl.when(r == 0)
            def _zero_top():
                band_ref[0:pad, :, :] = jnp.zeros((pad, Wp, C), jnp.float32)

            if bot_rows > 0:
                @pl.when(r == pl.num_programs(1) - 1)
                def _zero_bottom():
                    band_ref[band_h - bot_rows:band_h, :, :] = (
                        jnp.zeros((bot_rows, Wp, C), jnp.float32))

    def tap(dy, dx):
        # One depthwise-conv tap: a (TR, Wo, C) window of the (expanded) padded input band.
        # TODO(synk): for stride=2 stages decimate the band once per (row, col) parity instead
        # of issuing k*k sublane-strided reads.
        if do_expand:
            if stride == 1:
                return band_ref[dy:dy + TR, dx:dx + Wo, :]
            return band_ref[pl.ds(dy, TR, stride=stride),
                            pl.ds(dx, Wo, stride=stride), :]
        if stride == 1:
            pt = xpad_ref[pl.ds(row0 + dy, TR), pl.ds(dx, Wo), :]
        else:
            pt = xpad_ref[pl.ds(row0 + dy, TR, stride=stride),
                          pl.ds(dx, Wo, stride=stride), :]
        return pt.astype(jnp.float32)

    # Depthwise k x k conv: k*k VPU FMAs with f32 accumulation; taps are (re)loaded from VMEM
    # so only one (TR, Wo, C) patch is live at a time (bounds vreg pressure).
    wdw = wdw_ref[...]                                         # (k*k, C) f32
    acc = jnp.zeros((TR, Wo, C), jnp.float32)
    for dy in range(k):
        for dx in range(k):
            i = dy * k + dx
            acc = acc + tap(dy, dx) * wdw[i:i + 1, :]

    y = acc * s2_ref[...] + b2_ref[...]                        # folded BN2
    y = y * jax.nn.sigmoid(y)                                  # SiLU, f32

    # Fused 1x1 projection + folded BN3 (bf16 MXU operands, f32 accumulation).
    yp = jnp.dot(y.reshape(TR * Wo, C).astype(jnp.bfloat16), wp_ref[...],
                 preferred_element_type=jnp.float32)
    yp = yp * s3_ref[...] + b3_ref[...]                        # (TR*Wo, Cout) f32

    v_ref[0] = yp.reshape(TR, Wo, Cout).astype(v_ref.dtype)
    # Per-tile partial spatial sum for the SE global-average pool; keeping it per (n, r)
    # keeps both grid axes "parallel" (v7x dual-TensorCore friendly).
    pool_ref[0] = jnp.sum(yp, axis=0, keepdims=True)


def _mbconv_main(x_pad, p, *, k, stride, pad, H, W, Ho, Wo, TR, do_expand, vmem_limit):
    N, Hp, Wp, Cin = x_pad.shape
    Chid = p["w_dw"].shape[-1]
    Cout = p["w_proj"].shape[1]
    nR = Ho // TR
    band_h = (TR - 1) * stride + k
    bot_rows = max(0, (Ho - 1) * stride + k - pad - H)
    wdw2d = p["w_dw"].reshape(k * k, Chid).astype(jnp.float32)

    kern = functools.partial(_mbconv_main_kernel, k=k, stride=stride, pad=pad,
                             TR=TR, Wo=Wo, bot_rows=bot_rows, do_expand=do_expand)

    in_specs = [pl.BlockSpec((None, Hp, Wp, Cin), lambda n, r: (n, 0, 0, 0))]
    args = [x_pad]
    if do_expand:
        in_specs += [pl.BlockSpec((Cin, Chid), lambda n, r: (0, 0)),
                     pl.BlockSpec((1, Chid), lambda n, r: (0, 0)),
                     pl.BlockSpec((1, Chid), lambda n, r: (0, 0))]
        args += [p["w_exp"].astype(jnp.bfloat16), p["bn1_scale"], p["bn1_bias"]]
    in_specs += [pl.BlockSpec((k * k, Chid), lambda n, r: (0, 0)),
                 pl.BlockSpec((1, Chid), lambda n, r: (0, 0)),
                 pl.BlockSpec((1, Chid), lambda n, r: (0, 0)),
                 pl.BlockSpec((Chid, Cout), lambda n, r: (0, 0)),
                 pl.BlockSpec((1, Cout), lambda n, r: (0, 0)),
                 pl.BlockSpec((1, Cout), lambda n, r: (0, 0))]
    args += [wdw2d, p["bn2_scale"], p["bn2_bias"],
             p["w_proj"].astype(jnp.bfloat16), p["bn3_scale"], p["bn3_bias"]]

    scratch = [pltpu.VMEM((band_h, Wp, Chid), jnp.float32)] if do_expand else []

    return pl.pallas_call(
        kern,
        out_shape=(jax.ShapeDtypeStruct((N, Ho, Wo, Cout), jnp.bfloat16),
                   jax.ShapeDtypeStruct((N, nR, Cout), jnp.float32)),
        grid_spec=pltpu.PrefetchScalarGridSpec(
            num_scalar_prefetch=0,
            grid=(N, nR),
            in_specs=in_specs,
            out_specs=[pl.BlockSpec((1, TR, Wo, Cout), lambda n, r: (n, r, 0, 0)),
                       pl.BlockSpec((1, 1, Cout), lambda n, r: (n, r, 0))],
            scratch_shapes=scratch,
        ),
        compiler_params=pltpu.CompilerParams(
            dimension_semantics=("parallel", "parallel"),
            vmem_limit_bytes=vmem_limit),
    )(*args)


# ---------------------------------------------------------------------------
# Kernel B: SE gate, computed once per image (hoisted out of the per-tile grid).
# ---------------------------------------------------------------------------
def _se_gate_kernel(pool_ref, w1_ref, b1_ref, w2_ref, b2_ref, gate_ref, *, inv_hw):
    pooled = jnp.sum(pool_ref[...], axis=1) * inv_hw           # (Np, Cout) f32 global-avg pool
    h = jnp.dot(pooled.astype(jnp.bfloat16), w1_ref[...],
                preferred_element_type=jnp.float32) + b1_ref[...]
    h = h * jax.nn.sigmoid(h)                                  # SiLU
    g = jnp.dot(h.astype(jnp.bfloat16), w2_ref[...],
                preferred_element_type=jnp.float32) + b2_ref[...]
    gate_ref[...] = jax.nn.sigmoid(g)


def _se_gate(pool_parts, w1, b1, w2, b2, *, inv_hw, vmem_limit):
    N, nR, Cout = pool_parts.shape
    Cse = w1.shape[1]
    # Pad the SE bottleneck to a multiple of 8: exact no-op numerically (zero w1 cols / b1
    # -> SiLU(0)=0; zero w2 rows contribute nothing).
    Cse_p = max(8, _round_up(Cse, 8))
    pc = Cse_p - Cse
    w1p = jnp.pad(w1, ((0, 0), (0, pc))).astype(jnp.bfloat16)
    b1p = jnp.pad(b1, ((0, 0), (0, pc)))
    w2p = jnp.pad(w2, ((0, pc), (0, 0))).astype(jnp.bfloat16)
    # Pad the (tiny) batch dim to 8 rows so the two FCs stay sublane-aligned.
    Np = max(8, _round_up(N, 8))
    pp = pool_parts if Np == N else jnp.pad(pool_parts, ((0, Np - N), (0, 0), (0, 0)))

    kern = functools.partial(_se_gate_kernel, inv_hw=inv_hw)
    gate = pl.pallas_call(
        kern,
        out_shape=jax.ShapeDtypeStruct((Np, Cout), jnp.float32),
        grid_spec=pltpu.PrefetchScalarGridSpec(
            num_scalar_prefetch=0,
            grid=(1,),
            in_specs=[pl.BlockSpec((Np, nR, Cout), lambda i: (0, 0, 0)),
                      pl.BlockSpec((Cout, Cse_p), lambda i: (0, 0)),
                      pl.BlockSpec((1, Cse_p), lambda i: (0, 0)),
                      pl.BlockSpec((Cse_p, Cout), lambda i: (0, 0)),
                      pl.BlockSpec((1, Cout), lambda i: (0, 0))],
            out_specs=pl.BlockSpec((Np, Cout), lambda i: (0, 0)),
        ),
        compiler_params=pltpu.CompilerParams(vmem_limit_bytes=vmem_limit),
    )(pp, w1p, b1p, w2p, b2)
    return gate[:N]


# ---------------------------------------------------------------------------
# Kernel C: channel rescale (SE gate) + residual add over a lane-dense (N, Ho, Wo*Cout) view.
# ---------------------------------------------------------------------------
def _scale_res_kernel(v_ref, g_ref, *rest, use_residual):
    if use_residual:
        x_ref, o_ref = rest
    else:
        (o_ref,) = rest
    out = v_ref[0].astype(jnp.float32) * g_ref[...]            # (TR, Wo*Cout) * (1, Wo*Cout)
    if use_residual:
        out = out + x_ref[0].astype(jnp.float32)               # eval mode: no drop_connect
    o_ref[0] = out.astype(o_ref.dtype)


def _se_scale_residual(v2, gate_tiled, x_res2, *, TR, out_dtype, vmem_limit):
    N, Ho, L = v2.shape
    nR = Ho // TR
    use_residual = x_res2 is not None
    kern = functools.partial(_scale_res_kernel, use_residual=use_residual)
    in_specs = [pl.BlockSpec((1, TR, L), lambda n, r: (n, r, 0)),
                pl.BlockSpec((1, L), lambda n, r: (n, 0))]
    args = [v2, gate_tiled]
    if use_residual:
        in_specs.append(pl.BlockSpec((1, TR, L), lambda n, r: (n, r, 0)))
        args.append(x_res2)
    return pl.pallas_call(
        kern,
        out_shape=jax.ShapeDtypeStruct((N, Ho, L), out_dtype),
        grid_spec=pltpu.PrefetchScalarGridSpec(
            num_scalar_prefetch=0,
            grid=(N, nR),
            in_specs=in_specs,
            out_specs=pl.BlockSpec((1, TR, L), lambda n, r: (n, r, 0)),
        ),
        compiler_params=pltpu.CompilerParams(
            dimension_semantics=("parallel", "parallel"),
            vmem_limit_bytes=vmem_limit),
    )(*args)


# ---------------------------------------------------------------------------
# Full MBConvBlock forward (eval mode).
# ---------------------------------------------------------------------------
def mbconv_forward_nhwc(x_nhwc, p, *, expand_ratio, kernel_size, stride, use_residual,
                        out_dtype=jnp.float32):
    """Eval-mode MBConv forward in NHWC (the kernels' native layout).

    out_dtype: use jnp.bfloat16 when the consumer accepts it to halve the final HBM write;
    defaults to f32 to match the PyTorch module's output dtype.
    """
    N, H, W, Cin = x_nhwc.shape
    k = kernel_size
    pad = k // 2
    Ho = (H + 2 * pad - k) // stride + 1
    Wo = (W + 2 * pad - k) // stride + 1
    do_expand = expand_ratio != 1
    Chid = p["w_dw"].shape[-1]
    Cout = p["w_proj"].shape[1]

    if p["se_w1"].shape[0] != Cout:
        raise ValueError(
            "MBConvBlock applies its SE block (hidden_dim input channels) to the projected "
            f"output; this requires out_channels == hidden_dim (got hidden={p['se_w1'].shape[0]}"
            f", out={Cout}).")
    if use_residual and (stride != 1 or Cin != Cout):
        raise ValueError("use_residual requires stride == 1 and in_channels == out_channels")

    vmem_limit = _vmem_limit_bytes()
    TR = _pick_row_tile(Ho, Wo, Cin, Chid, Cout, H + 2 * pad, W + 2 * pad, k, stride,
                        budget=int(vmem_limit * 0.6))

    xb = x_nhwc.astype(jnp.bfloat16)            # bf16 activations everywhere off-chip
    # Zero-pad once in HBM (the Cin-wide input is the smallest tensor); each kernel-A step
    # then reads only its own (TR*stride + k - 1)-row input band -- no full-image halo scratch.
    x_pad = jnp.pad(xb, ((0, 0), (pad, pad), (pad, pad), (0, 0)))

    v, pool_parts = _mbconv_main(x_pad, p, k=k, stride=stride, pad=pad, H=H, W=W,
                                 Ho=Ho, Wo=Wo, TR=TR, do_expand=do_expand,
                                 vmem_limit=vmem_limit)

    gate = _se_gate(pool_parts, p["se_w1"], p["se_b1"], p["se_w2"], p["se_b2"],
                    inv_hw=1.0 / float(Ho * Wo), vmem_limit=vmem_limit)     # (N, Cout) f32
    gate_tiled = jnp.tile(gate, (1, Wo))        # lane-dense (N, Wo*Cout) gate row (tiny)

    # Free (layout-preserving) reshapes: fold (Wo, Cout) into the lane axis so kernel C's
    # loads/stores are unmasked even when Cout < 128.
    v2 = v.reshape(N, Ho, Wo * Cout)
    x_res2 = xb.reshape(N, H, W * Cin) if use_residual else None
    out2 = _se_scale_residual(v2, gate_tiled, x_res2, TR=TR, out_dtype=out_dtype,
                              vmem_limit=vmem_limit)
    return out2.reshape(N, Ho, Wo, Cout)


def mbconv_forward(x_nchw, p, *, expand_ratio, kernel_size, stride, use_residual):
    # Thin NCHW (PyTorch-convention) wrapper; in a full NHWC model call mbconv_forward_nhwc
    # directly (optionally with out_dtype=jnp.bfloat16) and skip both transposes.
    x = jnp.transpose(x_nchw, (0, 2, 3, 1))
    out = mbconv_forward_nhwc(x, p, expand_ratio=expand_ratio, kernel_size=kernel_size,
                              stride=stride, use_residual=use_residual)
    return jnp.transpose(out, (0, 3, 1, 2))


# ---------------------------------------------------------------------------
# Pure-JAX reference mirroring the kernels' bf16 cast points (lax convolutions).
# ---------------------------------------------------------------------------
def mbconv_reference(x_nchw, p, *, expand_ratio, kernel_size, stride, use_residual):
    dn = ("NHWC", "HWIO", "NHWC")
    f32, bf16 = jnp.float32, jnp.bfloat16
    x = jnp.transpose(x_nchw, (0, 2, 3, 1)).astype(bf16)
    if expand_ratio != 1:
        out = jax.lax.conv_general_dilated(x, p["w_exp"].astype(bf16)[None, None], (1, 1),
                                           "VALID", dimension_numbers=dn,
                                           preferred_element_type=f32)
        out = out * p["bn1_scale"] + p["bn1_bias"]
        out = out * jax.nn.sigmoid(out)            # stays f32 into the depthwise conv
    else:
        out = x.astype(f32)
    k = kernel_size
    pad = k // 2
    C = out.shape[-1]
    out = jax.lax.conv_general_dilated(out, p["w_dw"].reshape(k, k, 1, C).astype(f32),
                                       (stride, stride), [(pad, pad), (pad, pad)],
                                       dimension_numbers=dn, feature_group_count=C,
                                       precision=jax.lax.Precision.HIGHEST)
    out = out * p["bn2_scale"] + p["bn2_bias"]
    out = out * jax.nn.sigmoid(out)
    out = jax.lax.conv_general_dilated(out.astype(bf16), p["w_proj"].astype(bf16)[None, None],
                                       (1, 1), "VALID", dimension_numbers=dn,
                                       preferred_element_type=f32)
    v = out * p["bn3_scale"] + p["bn3_bias"]
    pooled = jnp.mean(v, axis=(1, 2))                                   # (N, Cout) f32
    h = jnp.dot(pooled.astype(bf16), p["se_w1"].astype(bf16),
                preferred_element_type=f32) + p["se_b1"]
    h = h * jax.nn.sigmoid(h)
    g = jax.nn.sigmoid(jnp.dot(h.astype(bf16), p["se_w2"].astype(bf16),
                               preferred_element_type=f32) + p["se_b2"])
    out = v.astype(bf16).astype(f32) * g[:, None, None, :]
    if use_residual:
        out = out + x.astype(f32)
    return jnp.transpose(out, (0, 3, 1, 2))


# ---------------------------------------------------------------------------
# Deterministic parameter init (folded eval-mode BatchNorm)
# ---------------------------------------------------------------------------
def _fold_bn(key, c, eps=1e-5):
    k1, k2, k3, k4 = jax.random.split(key, 4)
    gamma = jax.random.uniform(k1, (c,), minval=0.5, maxval=1.5)
    beta = jax.random.normal(k2, (c,)) * 0.1
    mean = jax.random.normal(k3, (c,)) * 0.1
    var = jax.random.uniform(k4, (c,), minval=0.5, maxval=1.5)
    scale = gamma / jnp.sqrt(var + eps)
    bias = beta - mean * scale
    return (scale.reshape(1, c).astype(jnp.float32),
            bias.reshape(1, c).astype(jnp.float32))


def init_params(key, in_channels, out_channels, expand_ratio, kernel_size, se_ratio):
    hidden = int(in_channels * expand_ratio)
    se_ch = max(1, int(in_channels * se_ratio))
    keys = jax.random.split(key, 12)
    p = {}
    if expand_ratio != 1:
        # torch weight (hidden, in, 1, 1) stored directly as (in, hidden) matmul form
        p["w_exp"] = (jax.random.normal(keys[0], (in_channels, hidden)) * 0.3).astype(jnp.float32)
        p["bn1_scale"], p["bn1_bias"] = _fold_bn(keys[1], hidden)
    # torch weight (hidden, 1, k, k) stored as (k, k, hidden)
    p["w_dw"] = (jax.random.normal(keys[2], (kernel_size, kernel_size, hidden)) * 0.3).astype(jnp.float32)
    p["bn2_scale"], p["bn2_bias"] = _fold_bn(keys[3], hidden)
    # torch weight (out, hidden, 1, 1) stored as (hidden, out)
    p["w_proj"] = (jax.random.normal(keys[4], (hidden, out_channels)) * 0.3).astype(jnp.float32)
    p["bn3_scale"], p["bn3_bias"] = _fold_bn(keys[5], out_channels)
    # SE: Conv2d(hidden, se_ch, 1) and Conv2d(se_ch, hidden, 1), with biases
    p["se_w1"] = (jax.random.normal(keys[6], (hidden, se_ch)) * 0.3).astype(jnp.float32)
    p["se_b1"] = (jax.random.normal(keys[7], (1, se_ch)) * 0.1).astype(jnp.float32)
    p["se_w2"] = (jax.random.normal(keys[8], (se_ch, hidden)) * 0.3).astype(jnp.float32)
    p["se_b2"] = (jax.random.normal(keys[9], (1, hidden)) * 0.1).astype(jnp.float32)
    return p


if __name__ == "__main__":
    key = jax.random.PRNGKey(0)
    kp, kx, kp2 = jax.random.split(key, 3)

    # Config A: expansion path exercised (in=4, expand=2 -> hidden=8 == out=8), no residual.
    N, Cin, H, W = 2, 4, 16, 16
    Cout, expand_ratio, kernel_size, stride, se_ratio = 8, 2, 3, 1, 0.25
    use_residual = (Cin == Cout) and (stride == 1)
    params = init_params(kp, Cin, Cout, expand_ratio, kernel_size, se_ratio)
    x = jax.random.normal(kx, (N, Cin, H, W), jnp.float32)

    out = mbconv_forward(x, params, expand_ratio=expand_ratio, kernel_size=kernel_size,
                         stride=stride, use_residual=use_residual)
    out = jax.block_until_ready(out)
    assert out.shape == (N, Cout, H, W)
    ref = mbconv_reference(x, params, expand_ratio=expand_ratio, kernel_size=kernel_size,
                           stride=stride, use_residual=use_residual)
    np.testing.assert_allclose(np.asarray(out), np.asarray(ref), rtol=5e-3, atol=5e-3)

    # Config B: residual path exercised (in=out=8, expand=1, stride=1).
    Cin2 = Cout2 = 8
    params2 = init_params(kp2, Cin2, Cout2, 1, kernel_size, se_ratio)
    x2 = jax.random.normal(jax.random.PRNGKey(1), (N, Cin2, H, W), jnp.float32)
    out2 = mbconv_forward(x2, params2, expand_ratio=1, kernel_size=kernel_size,
                          stride=1, use_residual=True)
    out2 = jax.block_until_ready(out2)
    ref2 = mbconv_reference(x2, params2, expand_ratio=1, kernel_size=kernel_size,
                            stride=1, use_residual=True)
    np.testing.assert_allclose(np.asarray(out2), np.asarray(ref2), rtol=5e-3, atol=5e-3)

    print("KERNEL_OK")
</pallas_src>

<mosaic_0001>
module attributes {stable_mosaic.version = 11 : i64} {
  func.func @_mbconv_main_kernel(%arg0: i32, %arg1: i32, %arg2: memref<1x18x18x4xbf16, #tpu.memory_space<vmem>>, %arg3: memref<4x8xbf16, #tpu.memory_space<vmem>>, %arg4: memref<1x8xf32, #tpu.memory_space<vmem>>, %arg5: memref<1x8xf32, #tpu.memory_space<vmem>>, %arg6: memref<9x8xf32, #tpu.memory_space<vmem>>, %arg7: memref<1x8xf32, #tpu.memory_space<vmem>>, %arg8: memref<1x8xf32, #tpu.memory_space<vmem>>, %arg9: memref<8x8xbf16, #tpu.memory_space<vmem>>, %arg10: memref<1x8xf32, #tpu.memory_space<vmem>>, %arg11: memref<1x8xf32, #tpu.memory_space<vmem>>, %arg12: memref<1x16x16x8xbf16, #tpu.memory_space<vmem>>, %arg13: memref<1x1x8xf32, #tpu.memory_space<vmem>>, %arg14: memref<18x18x8xf32, #tpu.memory_space<vmem>>) attributes {dimension_semantics = [#tpu.dimension_semantics<parallel>, #tpu.dimension_semantics<parallel>], iteration_bounds = array<i64: 2, 1>, scalar_prefetch = 0 : i64, scratch_operands = 1 : i64, tpu.core_type = #tpu.core_type<tc>, window_params = [{transform_indices = @transform_0, window_bounds = array<i64: 1, 18, 18, 4>}, {pipeline_mode = #tpu.pipeline_mode<synchronous>, transform_indices = @transform_1, window_bounds = array<i64: 4, 8>}, {pipeline_mode = #tpu.pipeline_mode<synchronous>, transform_indices = @transform_2, window_bounds = array<i64: 1, 8>}, {pipeline_mode = #tpu.pipeline_mode<synchronous>, transform_indices = @transform_3, window_bounds = array<i64: 1, 8>}, {pipeline_mode = #tpu.pipeline_mode<synchronous>, transform_indices = @transform_4, window_bounds = array<i64: 9, 8>}, {pipeline_mode = #tpu.pipeline_mode<synchronous>, transform_indices = @transform_5, window_bounds = array<i64: 1, 8>}, {pipeline_mode = #tpu.pipeline_mode<synchronous>, transform_indices = @transform_6, window_bounds = array<i64: 1, 8>}, {pipeline_mode = #tpu.pipeline_mode<synchronous>, transform_indices = @transform_7, window_bounds = array<i64: 8, 8>}, {pipeline_mode = #tpu.pipeline_mode<synchronous>, transform_indices = @transform_8, window_bounds = array<i64: 1, 8>}, {pipeline_mode = #tpu.pipeline_mode<synchronous>, transform_indices = @transform_9, window_bounds = array<i64: 1, 8>}, {transform_indices = @transform_10, window_bounds = array<i64: 1, 16, 16, 8>}, {transform_indices = @transform_11, window_bounds = array<i64: 1, 1, 8>}]} {
    %c16_i32 = arith.constant 16 : i32
    %0 = arith.muli %arg1, %c16_i32 : i32
    %1 = tpu.assume_multiple %0, 8 : i32
    %c0 = arith.constant 0 : index
    %2 = arith.index_cast %1 : i32 to index
    %c0_0 = arith.constant 0 : index
    %c0_1 = arith.constant 0 : index
    %3 = vector.load %arg2[%c0, %2, %c0_0, %c0_1] : memref<1x18x18x4xbf16, #tpu.memory_space<vmem>>, vector<1x18x18x4xbf16>
    %4 = vector.shape_cast %3 : vector<1x18x18x4xbf16> to vector<18x18x4xbf16>
    %5 = vector.shape_cast %4 : vector<18x18x4xbf16> to vector<324x4xbf16>
    %c0_2 = arith.constant 0 : index
    %c0_3 = arith.constant 0 : index
    %6 = vector.load %arg3[%c0_2, %c0_3] : memref<4x8xbf16, #tpu.memory_space<vmem>>, vector<4x8xbf16>
    %cst = arith.constant dense<0.000000e+00> : vector<324x8xf32>
    %7 = tpu.matmul %5, %6, %cst {dimension_numbers = #tpu.dot_dimension_numbers<[1], [0], [0], [1], [0, 0, 1, 1], [], []>} : vector<324x4xbf16>, vector<4x8xbf16>, vector<324x8xf32> -> vector<324x8xf32>
    %c0_4 = arith.constant 0 : index
    %c0_5 = arith.constant 0 : index
    %8 = vector.load %arg4[%c0_4, %c0_5] : memref<1x8xf32, #tpu.memory_space<vmem>>, vector<1x8xf32>
    %9 = vector.broadcast %8 : vector<1x8xf32> to vector<324x8xf32>
    %10 = arith.mulf %7, %9 : vector<324x8xf32>
    %c0_6 = arith.constant 0 : index
    %c0_7 = arith.constant 0 : index
    %11 = vector.load %arg5[%c0_6, %c0_7] : memref<1x8xf32, #tpu.memory_space<vmem>>, vector<1x8xf32>
    %12 = vector.broadcast %11 : vector<1x8xf32> to vector<324x8xf32>
    %13 = arith.addf %10, %12 : vector<324x8xf32>
    %14 = arith.negf %13 : vector<324x8xf32>
    %15 = math.exp %14 : vector<324x8xf32>
    %cst_8 = arith.constant 1.000000e+00 : f32
    %16 = vector.broadcast %cst_8 : f32 to vector<324x8xf32>
    %17 = arith.addf %16, %15 : vector<324x8xf32>
    %18 = arith.divf %16, %17 : vector<324x8xf32>
    %19 = arith.mulf %13, %18 : vector<324x8xf32>
    %20 = vector.shape_cast %19 : vector<324x8xf32> to vector<18x18x8xf32>
    %c0_9 = arith.constant 0 : index
    %c0_10 = arith.constant 0 : index
    %c0_11 = arith.constant 0 : index
    %21 = vector.load %arg14[%c0_9, %c0_10, %c0_11] : memref<18x18x8xf32, #tpu.memory_space<vmem>>, vector<18x18x8xf32>
    tpu.vector_store %arg14[%c0_9, %c0_10, %c0_11], %20 {strides = array<i32>} : memref<18x18x8xf32, #tpu.memory_space<vmem>>, vector<18x18x8xf32>,
    %cst_12 = arith.constant 0.000000e+00 : f32
    %22 = vector.broadcast %cst_12 : f32 to vector<18x1x8xf32>
    %c0_13 = arith.constant 0 : index
    %c0_14 = arith.constant 0 : index
    %c0_15 = arith.constant 0 : index
    %23 = vector.load %arg14[%c0_13, %c0_14, %c0_15] : memref<18x18x8xf32, #tpu.memory_space<vmem>>, vector<18x1x8xf32>
    tpu.vector_store %arg14[%c0_13, %c0_14, %c0_15], %22 {strides = array<i32>} : memref<18x18x8xf32, #tpu.memory_space<vmem>>, vector<18x1x8xf32>,
    %c0_16 = arith.constant 0 : index
    %c17 = arith.constant 17 : index
    %c0_17 = arith.constant 0 : index
    %24 = vector.load %arg14[%c0_16, %c17, %c0_17] : memref<18x18x8xf32, #tpu.memory_space<vmem>>, vector<18x1x8xf32>
    tpu.vector_store %arg14[%c0_16, %c17, %c0_17], %22 {strides = array<i32>} : memref<18x18x8xf32, #tpu.memory_space<vmem>>, vector<18x1x8xf32>,
    %c0_i32 = arith.constant 0 : i32
    %25 = arith.cmpi eq, %arg1, %c0_i32 : i32
    %26 = arith.extui %25 : i1 to i32
    %c0_i32_18 = arith.constant 0 : i32
    %27 = arith.cmpi ne, %26, %c0_i32_18 : i32
    scf.if %27 {
      %cst_69 = arith.constant 0.000000e+00 : f32
      %121 = vector.broadcast %cst_69 : f32 to vector<1x18x8xf32>
      %c0_70 = arith.constant 0 : index
      %c0_71 = arith.constant 0 : index
      %c0_72 = arith.constant 0 : index
      %122 = vector.load %arg14[%c0_70, %c0_71, %c0_72] : memref<18x18x8xf32, #tpu.memory_space<vmem>>, vector<1x18x8xf32>
      tpu.vector_store %arg14[%c0_70, %c0_71, %c0_72], %121 {strides = array<i32>} : memref<18x18x8xf32, #tpu.memory_space<vmem>>, vector<1x18x8xf32>,
    } else {
    }
    %c0_i32_19 = arith.constant 0 : i32
    %28 = arith.cmpi eq, %arg1, %c0_i32_19 : i32
    %29 = arith.extui %28 : i1 to i32
    %c0_i32_20 = arith.constant 0 : i32
    %30 = arith.cmpi ne, %29, %c0_i32_20 : i32
    scf.if %30 {
      %cst_69 = arith.constant 0.000000e+00 : f32
      %121 = vector.broadcast %cst_69 : f32 to vector<1x18x8xf32>
      %c17_70 = arith.constant 17 : index
      %c0_71 = arith.constant 0 : index
      %c0_72 = arith.constant 0 : index
      %122 = vector.load %arg14[%c17_70, %c0_71, %c0_72] : memref<18x18x8xf32, #tpu.memory_space<vmem>>, vector<1x18x8xf32>
      tpu.vector_store %arg14[%c17_70, %c0_71, %c0_72], %121 {strides = array<i32>} : memref<18x18x8xf32, #tpu.memory_space<vmem>>, vector<1x18x8xf32>,
    } else {
    }
    %c0_21 = arith.constant 0 : index
    %c0_22 = arith.constant 0 : index
    %31 = vector.load %arg6[%c0_21, %c0_22] : memref<9x8xf32, #tpu.memory_space<vmem>>, vector<9x8xf32>
    %cst_23 = arith.constant 0.000000e+00 : f32
    %32 = vector.broadcast %cst_23 : f32 to vector<16x16x8xf32>
    %c0_24 = arith.constant 0 : index
    %c0_25 = arith.constant 0 : index
    %c0_26 = arith.constant 0 : index
    %33 = vector.load %arg14[%c0_24, %c0_25, %c0_26] : memref<18x18x8xf32, #tpu.memory_space<vmem>>, vector<16x16x8xf32>
    %34 = vector.extract_strided_slice %31 {offsets = [0, 0], sizes = [1, 8], strides = [1, 1]} : vector<9x8xf32> to vector<1x8xf32>
    %35 = vector.shape_cast %34 : vector<1x8xf32> to vector<1x1x8xf32>
    %36 = vector.broadcast %35 : vector<1x1x8xf32> to vector<16x16x8xf32>
    %37 = arith.mulf %33, %36 : vector<16x16x8xf32>
    %38 = arith.addf %32, %37 : vector<16x16x8xf32>
    %c0_27 = arith.constant 0 : index
    %c1 = arith.constant 1 : index
    %c0_28 = arith.constant 0 : index
    %39 = vector.load %arg14[%c0_27, %c1, %c0_28] : memref<18x18x8xf32, #tpu.memory_space<vmem>>, vector<16x16x8xf32>
    %40 = vector.extract_strided_slice %31 {offsets = [1, 0], sizes = [1, 8], strides = [1, 1]} : vector<9x8xf32> to vector<1x8xf32>
    %41 = vector.shape_cast %40 : vector<1x8xf32> to vector<1x1x8xf32>
    %42 = vector.broadcast %41 : vector<1x1x8xf32> to vector<16x16x8xf32>
    %43 = arith.mulf %39, %42 : vector<16x16x8xf32>
    %44 = arith.addf %38, %43 : vector<16x16x8xf32>
    %c0_29 = arith.constant 0 : index
    %c2 = arith.constant 2 : index
    %c0_30 = arith.constant 0 : index
    %45 = vector.load %arg14[%c0_29, %c2, %c0_30] : memref<18x18x8xf32, #tpu.memory_space<vmem>>, vector<16x16x8xf32>
    %46 = vector.extract_strided_slice %31 {offsets = [2, 0], sizes = [1, 8], strides = [1, 1]} : vector<9x8xf32> to vector<1x8xf32>
    %47 = vector.shape_cast %46 : vector<1x8xf32> to vector<1x1x8xf32>
    %48 = vector.broadcast %47 : vector<1x1x8xf32> to vector<16x16x8xf32>
    %49 = arith.mulf %45, %48 : vector<16x16x8xf32>
    %50 = arith.addf %44, %49 : vector<16x16x8xf32>
    %c1_31 = arith.constant 1 : index
    %c0_32 = arith.constant 0 : index
    %c0_33 = arith.constant 0 : index
    %51 = vector.load %arg14[%c1_31, %c0_32, %c0_33] : memref<18x18x8xf32, #tpu.memory_space<vmem>>, vector<16x16x8xf32>
    %52 = vector.extract_strided_slice %31 {offsets = [3, 0], sizes = [1, 8], strides = [1, 1]} : vector<9x8xf32> to vector<1x8xf32>
    %53 = vector.shape_cast %52 : vector<1x8xf32> to vector<1x1x8xf32>
    %54 = vector.broadcast %53 : vector<1x1x8xf32> to vector<16x16x8xf32>
    %55 = arith.mulf %51, %54 : vector<16x16x8xf32>
    %56 = arith.addf %50, %55 : vector<16x16x8xf32>
    %c1_34 = arith.constant 1 : index
    %c1_35 = arith.constant 1 : index
    %c0_36 = arith.constant 0 : index
    %57 = vector.load %arg14[%c1_34, %c1_35, %c0_36] : memref<18x18x8xf32, #tpu.memory_space<vmem>>, vector<16x16x8xf32>
    %58 = vector.extract_strided_slice %31 {offsets = [4, 0], sizes = [1, 8], strides = [1, 1]} : vector<9x8xf32> to vector<1x8xf32>
    %59 = vector.shape_cast %58 : vector<1x8xf32> to vector<1x1x8xf32>
    %60 = vector.broadcast %59 : vector<1x1x8xf32> to vector<16x16x8xf32>
    %61 = arith.mulf %57, %60 : vector<16x16x8xf32>
    %62 = arith.addf %56, %61 : vector<16x16x8xf32>
    %c1_37 = arith.constant 1 : index
    %c2_38 = arith.constant 2 : index
    %c0_39 = arith.constant 0 : index
    %63 = vector.load %arg14[%c1_37, %c2_38, %c0_39] : memref<18x18x8xf32, #tpu.memory_space<vmem>>, vector<16x16x8xf32>
    %64 = vector.extract_strided_slice %31 {offsets = [5, 0], sizes = [1, 8], strides = [1, 1]} : vector<9x8xf32> to vector<1x8xf32>
    %65 = vector.shape_cast %64 : vector<1x8xf32> to vector<1x1x8xf32>
    %66 = vector.broadcast %65 : vector<1x1x8xf32> to vector<16x16x8xf32>
    %67 = arith.mulf %63, %66 : vector<16x16x8xf32>
    %68 = arith.addf %62, %67 : vector<16x16x8xf32>
    %c2_40 = arith.constant 2 : index
    %c0_41 = arith.constant 0 : index
    %c0_42 = arith.constant 0 : index
    %69 = vector.load %arg14[%c2_40, %c0_41, %c0_42] : memref<18x18x8xf32, #tpu.memory_space<vmem>>, vector<16x16x8xf32>
    %70 = vector.extract_strided_slice %31 {offsets = [6, 0], sizes = [1, 8], strides = [1, 1]} : vector<9x8xf32> to vector<1x8xf32>
    %71 = vector.shape_cast %70 : vector<1x8xf32> to vector<1x1x8xf32>
    %72 = vector.broadcast %71 : vector<1x1x8xf32> to vector<16x16x8xf32>
    %73 = arith.mulf %69, %72 : vector<16x16x8xf32>
    %74 = arith.addf %68, %73 : vector<16x16x8xf32>
    %c2_43 = arith.constant 2 : index
    %c1_44 = arith.constant 1 : index
    %c0_45 = arith.constant 0 : index
    %75 = vector.load %arg14[%c2_43, %c1_44, %c0_45] : memref<18x18x8xf32, #tpu.memory_space<vmem>>, vector<16x16x8xf32>
    %76 = vector.extract_strided_slice %31 {offsets = [7, 0], sizes = [1, 8], strides = [1, 1]} : vector<9x8xf32> to vector<1x8xf32>
    %77 = vector.shape_cast %76 : vector<1x8xf32> to vector<1x1x8xf32>
    %78 = vector.broadcast %77 : vector<1x1x8xf32> to vector<16x16x8xf32>
    %79 = arith.mulf %75, %78 : vector<16x16x8xf32>
    %80 = arith.addf %74, %79 : vector<16x16x8xf32>
    %c2_46 = arith.constant 2 : index
    %c2_47 = arith.constant 2 : index
    %c0_48 = arith.constant 0 : index
    %81 = vector.load %arg14[%c2_46, %c2_47, %c0_48] : memref<18x18x8xf32, #tpu.memory_space<vmem>>, vector<16x16x8xf32>
    %82 = vector.extract_strided_slice %31 {offsets = [8, 0], sizes = [1, 8], strides = [1, 1]} : vector<9x8xf32> to vector<1x8xf32>
    %83 = vector.shape_cast %82 : vector<1x8xf32> to vector<1x1x8xf32>
    %84 = vector.broadcast %83 : vector<1x1x8xf32> to vector<16x16x8xf32>
    %85 = arith.mulf %81, %84 : vector<16x16x8xf32>
    %86 = arith.addf %80, %85 : vector<16x16x8xf32>
    %c0_49 = arith.constant 0 : index
    %c0_50 = arith.constant 0 : index
    %87 = vector.load %arg7[%c0_49, %c0_50] : memref<1x8xf32, #tpu.memory_space<vmem>>, vector<1x8xf32>
    %88 = vector.shape_cast %87 : vector<1x8xf32> to vector<1x1x8xf32>
    %89 = vector.broadcast %88 : vector<1x1x8xf32> to vector<16x16x8xf32>
    %90 = arith.mulf %86, %89 : vector<16x16x8xf32>
    %c0_51 = arith.constant 0 : index
    %c0_52 = arith.constant 0 : index
    %91 = vector.load %arg8[%c0_51, %c0_52] : memref<1x8xf32, #tpu.memory_space<vmem>>, vector<1x8xf32>
    %92 = vector.shape_cast %91 : vector<1x8xf32> to vector<1x1x8xf32>
    %93 = vector.broadcast %92 : vector<1x1x8xf32> to vector<16x16x8xf32>
    %94 = arith.addf %90, %93 : vector<16x16x8xf32>
    %95 = arith.negf %94 : vector<16x16x8xf32>
    %96 = math.exp %95 : vector<16x16x8xf32>
    %cst_53 = arith.constant 1.000000e+00 : f32
    %97 = vector.broadcast %cst_53 : f32 to vector<16x16x8xf32>
    %98 = arith.addf %97, %96 : vector<16x16x8xf32>
    %99 = arith.divf %97, %98 : vector<16x16x8xf32>
    %100 = arith.mulf %94, %99 : vector<16x16x8xf32>
    %101 = vector.shape_cast %100 : vector<16x16x8xf32> to vector<256x8xf32>
    %102 = arith.truncf %101 : vector<256x8xf32> to vector<256x8xbf16>
    %c0_54 = arith.constant 0 : index
    %c0_55 = arith.constant 0 : index
    %103 = vector.load %arg9[%c0_54, %c0_55] : memref<8x8xbf16, #tpu.memory_space<vmem>>, vector<8x8xbf16>
    %cst_56 = arith.constant dense<0.000000e+00> : vector<256x8xf32>
    %104 = tpu.matmul %102, %103, %cst_56 {dimension_numbers = #tpu.dot_dimension_numbers<[1], [0], [0], [1], [0, 0, 1, 1], [], []>} : vector<256x8xbf16>, vector<8x8xbf16>, vector<256x8xf32> -> vector<256x8xf32>
    %c0_57 = arith.constant 0 : index
    %c0_58 = arith.constant 0 : index
    %105 = vector.load %arg10[%c0_57, %c0_58] : memref<1x8xf32, #tpu.memory_space<vmem>>, vector<1x8xf32>
    %106 = vector.broadcast %105 : vector<1x8xf32> to vector<256x8xf32>
    %107 = arith.mulf %104, %106 : vector<256x8xf32>
    %c0_59 = arith.constant 0 : index
    %c0_60 = arith.constant 0 : index
    %108 = vector.load %arg11[%c0_59, %c0_60] : memref<1x8xf32, #tpu.memory_space<vmem>>, vector<1x8xf32>
    %109 = vector.broadcast %108 : vector<1x8xf32> to vector<256x8xf32>
    %110 = arith.addf %107, %109 : vector<256x8xf32>
    %111 = vector.shape_cast %110 : vector<256x8xf32> to vector<16x16x8xf32>
    %112 = arith.truncf %111 : vector<16x16x8xf32> to vector<16x16x8xbf16>
    %c0_61 = arith.constant 0 : index
    %c0_62 = arith.constant 0 : index
    %c0_63 = arith.constant 0 : index
    %c0_64 = arith.constant 0 : index
    %113 = vector.load %arg12[%c0_61, %c0_62, %c0_63, %c0_64] : memref<1x16x16x8xbf16, #tpu.memory_space<vmem>>, vector<1x16x16x8xbf16>
    %114 = vector.shape_cast %113 : vector<1x16x16x8xbf16> to vector<16x16x8xbf16>
    %115 = vector.shape_cast %112 : vector<16x16x8xbf16> to vector<1x16x16x8xbf16>
    tpu.vector_store %arg12[%c0_61, %c0_62, %c0_63, %c0_64], %115 {strides = array<i32>} : memref<1x16x16x8xbf16, #tpu.memory_space<vmem>>, vector<1x16x16x8xbf16>,
    %cst_65 = arith.constant dense<0.000000e+00> : vector<8xf32>
    %116 = vector.multi_reduction <add>, %110, %cst_65 [0] : vector<256x8xf32> to vector<8xf32>
    %117 = vector.shape_cast %116 : vector<8xf32> to vector<1x8xf32>
    %c0_66 = arith.constant 0 : index
    %c0_67 = arith.constant 0 : index
    %c0_68 = arith.constant 0 : index
    %118 = vector.load %arg13[%c0_66, %c0_67, %c0_68] : memref<1x1x8xf32, #tpu.memory_space<vmem>>, vector<1x1x8xf32>
    %119 = vector.shape_cast %118 : vector<1x1x8xf32> to vector<1x8xf32>
    %120 = vector.shape_cast %117 : vector<1x8xf32> to vector<1x1x8xf32>
    tpu.vector_store %arg13[%c0_66, %c0_67, %c0_68], %120 {strides = array<i32>} : memref<1x1x8xf32, #tpu.memory_space<vmem>>, vector<1x1x8xf32>,
    return
  }
  func.func @transform_0(%arg0: i32, %arg1: i32) -> (i32, i32, i32, i32) {
    %c0_i32 = arith.constant 0 : i32
    %c0_i32_0 = arith.constant 0 : i32
    %c0_i32_1 = arith.constant 0 : i32
    %c0_i32_2 = arith.constant 0 : i32
    return %arg0, %c0_i32, %c0_i32_0, %c0_i32_1 : i32, i32, i32, i32
  }
  func.func @transform_1(%arg0: i32, %arg1: i32) -> (i32, i32) {
    %c0_i32 = arith.constant 0 : i32
    %c0_i32_0 = arith.constant 0 : i32
    %c0_i32_1 = arith.constant 0 : i32
    return %c0_i32, %c0_i32_0 : i32, i32
  }
  func.func @transform_2(%arg0: i32, %arg1: i32) -> (i32, i32) {
    %c0_i32 = arith.constant 0 : i32
    %c0_i32_0 = arith.constant 0 : i32
    %c0_i32_1 = arith.constant 0 : i32
    return %c0_i32, %c0_i32_0 : i32, i32
  }
  func.func @transform_3(%arg0: i32, %arg1: i32) -> (i32, i32) {
    %c0_i32 = arith.constant 0 : i32
    %c0_i32_0 = arith.constant 0 : i32
    %c0_i32_1 = arith.constant 0 : i32
    return %c0_i32, %c0_i32_0 : i32, i32
  }
  func.func @transform_4(%arg0: i32, %arg1: i32) -> (i32, i32) {
    %c0_i32 = arith.constant 0 : i32
    %c0_i32_0 = arith.constant 0 : i32
    %c0_i32_1 = arith.constant 0 : i32
    return %c0_i32, %c0_i32_0 : i32, i32
  }
  func.func @transform_5(%arg0: i32, %arg1: i32) -> (i32, i32) {
    %c0_i32 = arith.constant 0 : i32
    %c0_i32_0 = arith.constant 0 : i32
    %c0_i32_1 = arith.constant 0 : i32
    return %c0_i32, %c0_i32_0 : i32, i32
  }
  func.func @transform_6(%arg0: i32, %arg1: i32) -> (i32, i32) {
    %c0_i32 = arith.constant 0 : i32
    %c0_i32_0 = arith.constant 0 : i32
    %c0_i32_1 = arith.constant 0 : i32
    return %c0_i32, %c0_i32_0 : i32, i32
  }
  func.func @transform_7(%arg0: i32, %arg1: i32) -> (i32, i32) {
    %c0_i32 = arith.constant 0 : i32
    %c0_i32_0 = arith.constant 0 : i32
    %c0_i32_1 = arith.constant 0 : i32
    return %c0_i32, %c0_i32_0 : i32, i32
  }
  func.func @transform_8(%arg0: i32, %arg1: i32) -> (i32, i32) {
    %c0_i32 = arith.constant 0 : i32
    %c0_i32_0 = arith.constant 0 : i32
    %c0_i32_1 = arith.constant 0 : i32
    return %c0_i32, %c0_i32_0 : i32, i32
  }
  func.func @transform_9(%arg0: i32, %arg1: i32) -> (i32, i32) {
    %c0_i32 = arith.constant 0 : i32
    %c0_i32_0 = arith.constant 0 : i32
    %c0_i32_1 = arith.constant 0 : i32
    return %c0_i32, %c0_i32_0 : i32, i32
  }
  func.func @transform_10(%arg0: i32, %arg1: i32) -> (i32, i32, i32, i32) {
    %c0_i32 = arith.constant 0 : i32
    %c0_i32_0 = arith.constant 0 : i32
    %c0_i32_1 = arith.constant 0 : i32
    return %arg0, %arg1, %c0_i32, %c0_i32_0 : i32, i32, i32, i32
  }
  func.func @transform_11(%arg0: i32, %arg1: i32) -> (i32, i32, i32) {
    %c0_i32 = arith.constant 0 : i32
    %c0_i32_0 = arith.constant 0 : i32
    return %arg0, %arg1, %c0_i32 : i32, i32, i32
  }
}

</mosaic_0001>

<llo_original>
// kernel: tpu_custom_call.1
$region0: #{tpu_custom_call.1}
  #allocation0 [shape = 'u32[]', space=smem, size = 0x4, offset = 0x4, fixed_abs, tag = 'smem constant byte address 0x4 - core index']
  #allocation1 [shape = 'u32[144,128]{1,0:T(1,128)}', space=vmem, size = 0x12000, scoped, tag = 'internal scratch']
  #allocation2 [shape = 'f32[18,18,8]{2,1,0:T(8,128)}', space=vmem, size = 0x36000, scoped, tag = 'scratch operand']
  %s0 = inlined_call_operand.vmem [shape: bf16[2,18,18,4], index: 0, kind: input, shape index: {}]
  %s1 = inlined_call_operand.vmem [shape: bf16[4,8], index: 1, kind: input, shape index: {}]
  %s2 = inlined_call_operand.vmem [shape: f32[1,8], index: 2, kind: input, shape index: {}]
  %s3 = inlined_call_operand.vmem [shape: f32[1,8], index: 3, kind: input, shape index: {}]
  %s4 = inlined_call_operand.vmem [shape: f32[9,8], index: 4, kind: input, shape index: {}]
  %s5 = inlined_call_operand.vmem [shape: f32[1,8], index: 5, kind: input, shape index: {}]
  %s6 = inlined_call_operand.vmem [shape: f32[1,8], index: 6, kind: input, shape index: {}]
  %s7 = inlined_call_operand.vmem [shape: bf16[8,8], index: 7, kind: input, shape index: {}]
  %s8 = inlined_call_operand.vmem [shape: f32[1,8], index: 8, kind: input, shape index: {}]
  %s9 = inlined_call_operand.vmem [shape: f32[1,8], index: 9, kind: input, shape index: {}]
  %s10 = inlined_call_operand.vmem [shape: bf16[2,16,16,8], index: 10, kind: output, shape index: {0}]
  %s11 = inlined_call_operand.hbm [shape: f32[2,1,8], index: 11, kind: output, shape index: {1}]
  %12 = xla_tuple %s10, %s11
  %s13 = sld [smem:[#allocation0]]
  $region85: #{tpu_custom_call.1} parent=0
    _
  %s15 = ssub.s32 1, %s13
  %s16 = scalar_select 0, %s15, %s13
  $region1: #{tpu_custom_call.1} parent=0
    #allocation3 [shape = 'u8[1024]{0}', space=vmem, size = 0x400, scoped, tag = 'output window, operand 1']
    #allocation4 [shape = 's32[2]{0}', space=sflag, size = 0x8, scoped, tag = 'scoped memory for tpu_custom_call.1']
    %17 = vsyncpa [#allocation4], 0
    %s18 = scalar_lea.sflag [#allocation4], 1
    %19 = vsyncpa %s18, 0
    loop: start=0, step=1, limit=4
    $region2: #{tpu_custom_call.1} parent=1 // loop_pre_header
      _
    $region3: #{tpu_custom_call.1} parent=1 // loop_header
      %s21 = sphi 0, %s25
      %p22 = scmp.ge.s32.totalorder %s21, 4
      %s28 = sphi 0, %s40
      %s29 = sphi 0, %s36
      %s30 = sphi 0, %s28
      %s31 = sphi 0, %s29
      %s32 = sphi 0, %s30
      %s33 = sphi 0, %s31
      %s43 = sphi 0, %s45
      %s46 = sphi 0, %s43
      %s47 = sphi 0, %s46
      %s63 = sphi 0, %s47
      %s67 = sphi 0, %s67
      %s69 = sphi 0, %s67
      %s70 = sphi 0, %s69
      %s84 = sphi 0, %s70
      %s88 = sphi 0, %s88
      %s90 = sphi 0, %s88
      %s91 = sphi 0, %s90
      %s105 = sphi 0, %s91
      %s109 = sphi 0, %s109
      %s111 = sphi 0, %s109
      %s112 = sphi 0, %s111
      %s126 = sphi 0, %s112
      %s130 = sphi 0, %s130
      %s132 = sphi 0, %s130
      %s133 = sphi 0, %s132
      %s147 = sphi 0, %s133
      %s151 = sphi 0, %s151
      %s153 = sphi 0, %s151
      %s154 = sphi 0, %s153
      %s168 = sphi 0, %s154
      %s172 = sphi 0, %s172
      %s174 = sphi 0, %s172
      %s175 = sphi 0, %s174
      %s189 = sphi 0, %s175
      %s193 = sphi 0, %s193
      %s195 = sphi 0, %s193
      %s196 = sphi 0, %s195
      %s210 = sphi 0, %s196
      %s214 = sphi 0, %s214
      %s216 = sphi 0, %s214
      %s217 = sphi 0, %s216
      %s231 = sphi 0, %s217
      %s235 = sphi 0, %s235
      %s237 = sphi 0, %s235
      %s238 = sphi 0, %s237
      %s252 = sphi 0, %s238
      %s260 = sphi 0, %s262
      %s263 = sphi 0, %s260
      %s264 = sphi 0, %s263
      %s280 = sphi 0, %s264
      %s288 = sphi 0, %s290
      %s291 = sphi 0, %s288
      %s292 = sphi 0, %s291
      %s308 = sphi 0, %s292
    $region4: #{tpu_custom_call.1} parent=1 // loop_header_branch
      %24 = sbr.rel (%p22) target = $region8
    $region5: #{tpu_custom_call.1} parent=1 // loop_body
      %s26 = ssub.s32 %s21, 1
      %s27 = ssub.s32 %s21, 2
      %s34 = sadd.s32 1, %s29
      %p35 = scmp.ge.s32.totalorder %s34, 1
      %s36 = scalar_select %p35, 0, %s34
      %s37 = sadd.s32 1, %s28
      %s38 = scalar_select %p35, %s37, %s28
      %p39 = scmp.ge.s32.totalorder %s38, 2
      %s40 = scalar_select %p39, 0, %s38
      %s41 = ssub.s32 %s28, %s40
      %p42 = scmp.eq.s32.totalorder %s41, 0
      %s44 = sadd.s32 %s43, 1
      %s45 = scalar_select %p42, %s43, %s44
      %p48 = pneg %p42
      %p49 = scmp.eq.s32.totalorder %s21, 1
      %p50 = por %p48, %p49
      %p51 = scmp.ne.s32.totalorder %s43, %s46
      %p52 = scmp.eq.s32.totalorder %s21, 0
      %p53 = por %p51, %p52
      %p54 = scmp.ne.s32.totalorder %s43, %s46
      %p55 = scmp.eq.s32.totalorder %s26, 1
      %p56 = por %p54, %p55
      %p57 = scmp.ne.s32.totalorder %s46, %s47
      %p58 = scmp.eq.s32.totalorder %s26, 0
      %p59 = por %p57, %p58
      %p60 = scmp.ne.s32.totalorder %s46, %s47
      %p61 = scmp.eq.s32.totalorder %s27, 1
      %p62 = por %p60, %p61
      %p64 = scmp.ne.s32.totalorder %s47, %s63
      %p65 = scmp.eq.s32.totalorder %s27, 0
      %p66 = por %p64, %p65
      %s68 = sadd.s32 %s67, 1
      %p71 = scmp.eq.s32.totalorder %s21, 1
      %p72 = scmp.ne.s32.totalorder %s67, %s69
      %p73 = scmp.eq.s32.totalorder %s21, 0
      %p74 = por %p72, %p73
      %p75 = scmp.ne.s32.totalorder %s67, %s69
      %p76 = scmp.eq.s32.totalorder %s26, 1
      %p77 = por %p75, %p76
      %p78 = scmp.ne.s32.totalorder %s69, %s70
      %p79 = scmp.eq.s32.totalorder %s26, 0
      %p80 = por %p78, %p79
      %p81 = scmp.ne.s32.totalorder %s69, %s70
      %p82 = scmp.eq.s32.totalorder %s27, 1
      %p83 = por %p81, %p82
      %p85 = scmp.ne.s32.totalorder %s70, %s84
      %p86 = scmp.eq.s32.totalorder %s27, 0
      %p87 = por %p85, %p86
      %s89 = sadd.s32 %s88, 1
      %p92 = scmp.eq.s32.totalorder %s21, 1
      %p93 = scmp.ne.s32.totalorder %s88, %s90
      %p94 = scmp.eq.s32.totalorder %s21, 0
      %p95 = por %p93, %p94
      %p96 = scmp.ne.s32.totalorder %s88, %s90
      %p97 = scmp.eq.s32.totalorder %s26, 1
      %p98 = por %p96, %p97
      %p99 = scmp.ne.s32.totalorder %s90, %s91
      %p100 = scmp.eq.s32.totalorder %s26, 0
      %p101 = por %p99, %p100
      %p102 = scmp.ne.s32.totalorder %s90, %s91
      %p103 = scmp.eq.s32.totalorder %s27, 1
      %p104 = por %p102, %p103
      %p106 = scmp.ne.s32.totalorder %s91, %s105
      %p107 = scmp.eq.s32.totalorder %s27, 0
      %p108 = por %p106, %p107
      %s110 = sadd.s32 %s109, 1
      %p113 = scmp.eq.s32.totalorder %s21, 1
      %p114 = scmp.ne.s32.totalorder %s109, %s111
      %p115 = scmp.eq.s32.totalorder %s21, 0
      %p116 = por %p114, %p115
      %p117 = scmp.ne.s32.totalorder %s109, %s111
      %p118 = scmp.eq.s32.totalorder %s26, 1
      %p119 = por %p117, %p118
      %p120 = scmp.ne.s32.totalorder %s111, %s112
      %p121 = scmp.eq.s32.totalorder %s26, 0
      %p122 = por %p120, %p121
      %p123 = scmp.ne.s32.totalorder %s111, %s112
      %p124 = scmp.eq.s32.totalorder %s27, 1
      %p125 = por %p123, %p124
      %p127 = scmp.ne.s32.totalorder %s112, %s126
      %p128 = scmp.eq.s32.totalorder %s27, 0
      %p129 = por %p127, %p128
      %s131 = sadd.s32 %s130, 1
      %p134 = scmp.eq.s32.totalorder %s21, 1
      %p135 = scmp.ne.s32.totalorder %s130, %s132
      %p136 = scmp.eq.s32.totalorder %s21, 0
      %p137 = por %p135, %p136
      %p138 = scmp.ne.s32.totalorder %s130, %s132
      %p139 = scmp.eq.s32.totalorder %s26, 1
      %p140 = por %p138, %p139
      %p141 = scmp.ne.s32.totalorder %s132, %s133
      %p142 = scmp.eq.s32.totalorder %s26, 0
      %p143 = por %p141, %p142
      %p144 = scmp.ne.s32.totalorder %s132, %s133
      %p145 = scmp.eq.s32.totalorder %s27, 1
      %p146 = por %p144, %p145
      %p148 = scmp.ne.s32.totalorder %s133, %s147
      %p149 = scmp.eq.s32.totalorder %s27, 0
      %p150 = por %p148, %p149
      %s152 = sadd.s32 %s151, 1
      %p155 = scmp.eq.s32.totalorder %s21, 1
      %p156 = scmp.ne.s32.totalorder %s151, %s153
      %p157 = scmp.eq.s32.totalorder %s21, 0
      %p158 = por %p156, %p157
      %p159 = scmp.ne.s32.totalorder %s151, %s153
      %p160 = scmp.eq.s32.totalorder %s26, 1
      %p161 = por %p159, %p160
      %p162 = scmp.ne.s32.totalorder %s153, %s154
      %p163 = scmp.eq.s32.totalorder %s26, 0
      %p164 = por %p162, %p163
      %p165 = scmp.ne.s32.totalorder %s153, %s154
      %p166 = scmp.eq.s32.totalorder %s27, 1
      %p167 = por %p165, %p166
      %p169 = scmp.ne.s32.totalorder %s154, %s168
      %p170 = scmp.eq.s32.totalorder %s27, 0
      %p171 = por %p169, %p170
      %s173 = sadd.s32 %s172, 1
      %p176 = scmp.eq.s32.totalorder %s21, 1
      %p177 = scmp.ne.s32.totalorder %s172, %s174
      %p178 = scmp.eq.s32.totalorder %s21, 0
      %p179 = por %p177, %p178
      %p180 = scmp.ne.s32.totalorder %s172, %s174
      %p181 = scmp.eq.s32.totalorder %s26, 1
      %p182 = por %p180, %p181
      %p183 = scmp.ne.s32.totalorder %s174, %s175
      %p184 = scmp.eq.s32.totalorder %s26, 0
      %p185 = por %p183, %p184
      %p186 = scmp.ne.s32.totalorder %s174, %s175
      %p187 = scmp.eq.s32.totalorder %s27, 1
      %p188 = por %p186, %p187
      %p190 = scmp.ne.s32.totalorder %s175, %s189
      %p191 = scmp.eq.s32.totalorder %s27, 0
      %p192 = por %p190, %p191
      %s194 = sadd.s32 %s193, 1
      %p197 = scmp.eq.s32.totalorder %s21, 1
      %p198 = scmp.ne.s32.totalorder %s193, %s195
      %p199 = scmp.eq.s32.totalorder %s21, 0
      %p200 = por %p198, %p199
      %p201 = scmp.ne.s32.totalorder %s193, %s195
      %p202 = scmp.eq.s32.totalorder %s26, 1
      %p203 = por %p201, %p202
      %p204 = scmp.ne.s32.totalorder %s195, %s196
      %p205 = scmp.eq.s32.totalorder %s26, 0
      %p206 = por %p204, %p205
      %p207 = scmp.ne.s32.totalorder %s195, %s196
      %p208 = scmp.eq.s32.totalorder %s27, 1
      %p209 = por %p207, %p208
      %p211 = scmp.ne.s32.totalorder %s196, %s210
      %p212 = scmp.eq.s32.totalorder %s27, 0
      %p213 = por %p211, %p212
      %s215 = sadd.s32 %s214, 1
      %p218 = scmp.eq.s32.totalorder %s21, 1
      %p219 = scmp.ne.s32.totalorder %s214, %s216
      %p220 = scmp.eq.s32.totalorder %s21, 0
      %p221 = por %p219, %p220
      %p222 = scmp.ne.s32.totalorder %s214, %s216
      %p223 = scmp.eq.s32.totalorder %s26, 1
      %p224 = por %p222, %p223
      %p225 = scmp.ne.s32.totalorder %s216, %s217
      %p226 = scmp.eq.s32.totalorder %s26, 0
      %p227 = por %p225, %p226
      %p228 = scmp.ne.s32.totalorder %s216, %s217
      %p229 = scmp.eq.s32.totalorder %s27, 1
      %p230 = por %p228, %p229
      %p232 = scmp.ne.s32.totalorder %s217, %s231
      %p233 = scmp.eq.s32.totalorder %s27, 0
      %p234 = por %p232, %p233
      %s236 = sadd.s32 %s235, 1
      %p239 = scmp.eq.s32.totalorder %s21, 1
      %p240 = scmp.ne.s32.totalorder %s235, %s237
      %p241 = scmp.eq.s32.totalorder %s21, 0
      %p242 = por %p240, %p241
      %p243 = scmp.ne.s32.totalorder %s235, %s237
      %p244 = scmp.eq.s32.totalorder %s26, 1
      %p245 = por %p243, %p244
      %p246 = scmp.ne.s32.totalorder %s237, %s238
      %p247 = scmp.eq.s32.totalorder %s26, 0
      %p248 = por %p246, %p247
      %p249 = scmp.ne.s32.totalorder %s237, %s238
      %p250 = scmp.eq.s32.totalorder %s27, 1
      %p251 = por %p249, %p250
      %p253 = scmp.ne.s32.totalorder %s238, %s252
      %p254 = scmp.eq.s32.totalorder %s27, 0
      %p255 = por %p253, %p254
      %s256 = ssub.s32 %s28, %s40
      %s257 = ssub.s32 %s29, %s36
      %s258 = sor.u32 %s256, %s257
      %p259 = scmp.eq.s32.totalorder %s258, 0
      %s261 = sadd.s32 %s260, 1
      %s262 = scalar_select %p259, %s260, %s261
      %p265 = pneg %p259
      %p266 = scmp.eq.s32.totalorder %s21, 1
      %p267 = por %p265, %p266
      %p268 = scmp.ne.s32.totalorder %s260, %s263
      %p269 = scmp.eq.s32.totalorder %s21, 0
      %p270 = por %p268, %p269
      %p271 = scmp.ne.s32.totalorder %s260, %s263
      %p272 = scmp.eq.s32.totalorder %s26, 1
      %p273 = por %p271, %p272
      %p274 = scmp.ne.s32.totalorder %s263, %s264
      %p275 = scmp.eq.s32.totalorder %s26, 0
      %p276 = por %p274, %p275
      %p277 = scmp.ne.s32.totalorder %s263, %s264
      %p278 = scmp.eq.s32.totalorder %s27, 1
      %p279 = por %p277, %p278
      %p281 = scmp.ne.s32.totalorder %s264, %s280
      %p282 = scmp.eq.s32.totalorder %s27, 0
      %p283 = por %p281, %p282
      %s284 = ssub.s32 %s28, %s40
      %s285 = ssub.s32 %s29, %s36
      %s286 = sor.u32 %s284, %s285
      %p287 = scmp.eq.s32.totalorder %s286, 0
      %s289 = sadd.s32 %s288, 1
      %s290 = scalar_select %p287, %s288, %s289
      %p293 = pneg %p287
      %p294 = scmp.eq.s32.totalorder %s21, 1
      %p295 = por %p293, %p294
      %p296 = scmp.ne.s32.totalorder %s288, %s291
      %p297 = scmp.eq.s32.totalorder %s21, 0
      %p298 = por %p296, %p297
      %p299 = scmp.ne.s32.totalorder %s288, %s291
      %p300 = scmp.eq.s32.totalorder %s26, 1
      %p301 = por %p299, %p300
      %p302 = scmp.ne.s32.totalorder %s291, %s292
      %p303 = scmp.eq.s32.totalorder %s26, 0
      %p304 = por %p302, %p303
      %p305 = scmp.ne.s32.totalorder %s291, %s292
      %p306 = scmp.eq.s32.totalorder %s27, 1
      %p307 = por %p305, %p306
      %p309 = scmp.ne.s32.totalorder %s292, %s308
      %p310 = scmp.eq.s32.totalorder %s27, 0
      %p311 = por %p309, %p310
      %p312 = scmp.le.s32.totalorder 1, %s21
      %p313 = scmp.lt.s32.totalorder %s21, 3
      %p314 = pnand %p312, %p313
      %p315 = pneg %p314
      // Predicated region
      $region9: #{tpu_custom_call.1} parent=5 // pred_check
        _
      $region10: #{tpu_custom_call.1} parent=5 // pred_check_branch
        %317 = sbr.rel (%p314) target = $region12
      $region11: #{tpu_custom_call.1} parent=5 // pred_region
        %s318 = ssub.s32 %s21, 1
        // Predicated region
        $region13: #{tpu_custom_call.1} parent=11 // pred_check
          %p319 = pneg %p80
        $region14: #{tpu_custom_call.1} parent=11 // pred_check_branch
          %321 = sbr.rel (%p319) target = $region16
        $region15: #{tpu_custom_call.1} parent=11 // pred_region
          _
        $region16: #{tpu_custom_call.1} parent=11 // pred_fallthru
          _
        // Predicated region
        $region17: #{tpu_custom_call.1} parent=11 // pred_check
          %p322 = pneg %p101
        $region18: #{tpu_custom_call.1} parent=11 // pred_check_branch
          %324 = sbr.rel (%p322) target = $region20
        $region19: #{tpu_custom_call.1} parent=11 // pred_region
          _
        $region20: #{tpu_custom_call.1} parent=11 // pred_fallthru
          _
        // Predicated region
        $region21: #{tpu_custom_call.1} parent=11 // pred_check
          %p325 = pneg %p122
        $region22: #{tpu_custom_call.1} parent=11 // pred_check_branch
          %327 = sbr.rel (%p325) target = $region24
        $region23: #{tpu_custom_call.1} parent=11 // pred_region
          _
        $region24: #{tpu_custom_call.1} parent=11 // pred_fallthru
          _
        // Predicated region
        $region25: #{tpu_custom_call.1} parent=11 // pred_check
          %p328 = pneg %p143
        $region26: #{tpu_custom_call.1} parent=11 // pred_check_branch
          %330 = sbr.rel (%p328) target = $region28
        $region27: #{tpu_custom_call.1} parent=11 // pred_region
          _
        $region28: #{tpu_custom_call.1} parent=11 // pred_fallthru
          _
        // Predicated region
        $region29: #{tpu_custom_call.1} parent=11 // pred_check
          %p331 = pneg %p164
        $region30: #{tpu_custom_call.1} parent=11 // pred_check_branch
          %333 = sbr.rel (%p331) target = $region32
        $region31: #{tpu_custom_call.1} parent=11 // pred_region
          _
        $region32: #{tpu_custom_call.1} parent=11 // pred_fallthru
          _
        // Predicated region
        $region33: #{tpu_custom_call.1} parent=11 // pred_check
          %p334 = pneg %p185
        $region34: #{tpu_custom_call.1} parent=11 // pred_check_branch
          %336 = sbr.rel (%p334) target = $region36
        $region35: #{tpu_custom_call.1} parent=11 // pred_region
          _
        $region36: #{tpu_custom_call.1} parent=11 // pred_fallthru
          _
        // Predicated region
        $region37: #{tpu_custom_call.1} parent=11 // pred_check
          %p337 = pneg %p206
        $region38: #{tpu_custom_call.1} parent=11 // pred_check_branch
          %339 = sbr.rel (%p337) target = $region40
        $region39: #{tpu_custom_call.1} parent=11 // pred_region
          _
        $region40: #{tpu_custom_call.1} parent=11 // pred_fallthru
          _
        // Predicated region
        $region41: #{tpu_custom_call.1} parent=11 // pred_check
          %p340 = pneg %p227
        $region42: #{tpu_custom_call.1} parent=11 // pred_check_branch
          %342 = sbr.rel (%p340) target = $region44
        $region43: #{tpu_custom_call.1} parent=11 // pred_region
          _
        $region44: #{tpu_custom_call.1} parent=11 // pred_fallthru
          _
        // Predicated region
        $region45: #{tpu_custom_call.1} parent=11 // pred_check
          %p343 = pneg %p248
        $region46: #{tpu_custom_call.1} parent=11 // pred_check_branch
          %345 = sbr.rel (%p343) target = $region48
        $region47: #{tpu_custom_call.1} parent=11 // pred_region
          _
        $region48: #{tpu_custom_call.1} parent=11 // pred_fallthru
          _
      $region12: #{tpu_custom_call.1} parent=5 // pred_fallthru
        _
      %p346 = scmp.lt.s32.totalorder %s21, 2
      // Predicated region
      $region49: #{tpu_custom_call.1} parent=5 // pred_check
        %p347 = pneg %p346
      $region50: #{tpu_custom_call.1} parent=5 // pred_check_branch
        %349 = sbr.rel (%p347) target = $region52
      $region51: #{tpu_custom_call.1} parent=5 // pred_region
        // Predicated region
        $region53: #{tpu_custom_call.1} parent=51 // pred_check
          %p350 = pneg %p53
        $region54: #{tpu_custom_call.1} parent=51 // pred_check_branch
          %352 = sbr.rel (%p350) target = $region56
        $region55: #{tpu_custom_call.1} parent=51 // pred_region
          %p353 = scmp.lt.s32.totalorder %s28, 1
          %s354 = scalar_select %p353, %s28, 1
          %s355 = smul.addr %s354, 54
          %s356 = smul.addr %s355, 4
          %s357 = scalar_lea.vmem %s0, %s356
        $region56: #{tpu_custom_call.1} parent=51 // pred_fallthru
          _
      $region52: #{tpu_custom_call.1} parent=5 // pred_fallthru
        _
      %p358 = scmp.le.s32.totalorder 1, %s21
      %p359 = scmp.lt.s32.totalorder %s21, 3
      %p360 = pnand %p358, %p359
      %p361 = pneg %p360
      // Predicated region
      $region57: #{tpu_custom_call.1} parent=5 // pred_check
        _
      $region58: #{tpu_custom_call.1} parent=5 // pred_check_branch
        %363 = sbr.rel (%p360) target = $region60
      $region59: #{tpu_custom_call.1} parent=5 // pred_region
        %s364 = ssub.s32 %s21, 1
        %p365 = scmp.lt.s32.totalorder %s30, 1
        %s366 = scalar_select %p365, %s30, 1
        %s367 = smul.addr %s366, 54
        %s368 = smul.addr %s367, 4
        %s369 = scalar_lea.vmem %s0, %s368
        %p370 = pneg %p59
        %p371 = pneg %p56
        %p372 = pneg %p80
        %p373 = pneg %p77
        %p374 = pneg %p101
        %p375 = pneg %p98
        %p376 = pneg %p122
        %p377 = pneg %p119
        %p378 = pneg %p143
        %p379 = pneg %p140
        %p380 = pneg %p164
        %p381 = pneg %p161
        %p382 = pneg %p185
        %p383 = pneg %p182
        %p384 = pneg %p206
        %p385 = pneg %p203
        %p386 = pneg %p227
        %p387 = pneg %p224
        %p388 = pneg %p248
        %p389 = pneg %p245
        %p390 = pneg %p276
        %p391 = pneg %p273
        %s392 = smul.u32 16, %s31
        %p393 = scmp.lt.s32.totalorder %s30, 1
        %s394 = scalar_select %p393, %s30, 1
        %p395 = scmp.lt.s32.totalorder %s392, 15
        %s396 = scalar_select %p395, %s392, 15
        %s397 = smul.addr %s396, 2
        %s398 = smul.addr %s394, 32
        %s399 = sadd.s32 %s397, %s398
        %s400 = smul.addr %s399, 4
        %s401 = scalar_lea.vmem %s10, %s400
        %p402 = pneg %p304
        %p403 = pneg %p301
        %s404 = sand.u32 %s291, 1
        %s405 = scalar_lea.sflag [#allocation4], %s404
        %s406 = sand.u32 %s291, 1
        %s407 = scalar_lea.vmem [#allocation3], %s406
        %p408 = scmp.lt.s32.totalorder %s30, 1
        %s409 = scalar_select %p408, %s30, 1
        %s410 = smul.addr %s409, 54
        %s411 = smul.addr %s410, 4
        %s412 = scalar_lea.vmem %s0, %s411
        %s413 = smul.u32 16, %s31
        %p414 = scmp.lt.s32.totalorder %s30, 1
        %s415 = scalar_select %p414, %s30, 1
        %p416 = scmp.lt.s32.totalorder %s413, 15
        %s417 = scalar_select %p416, %s413, 15
        %s418 = smul.addr %s417, 2
        %s419 = smul.addr %s415, 32
        %s420 = sadd.s32 %s418, %s419
        %s421 = smul.addr %s420, 4
        %s422 = scalar_lea.vmem %s10, %s421
        %s423 = smul.u32 16, %s31
        %s425 = smul.u32 %s31, 16
        %s426 = smul.u32 %s425, 3
        %s427 = smul.addr %s426, 4
        %s428 = scalar_lea.vmem %s412, %s427
        %v429 = vld [vmem:[%s428] sm:$0xf]
        %v430 = vld [vmem:[%s428 + $0x4] sm:$0xf]
        %v431 = vld [vmem:[%s428 + $0x8] sm:$0x1]
        %v432 = vld [vmem:[%s428 + $0xc] sm:$0xf]
        %v433 = vld [vmem:[%s428 + $0x10] sm:$0xf]
        %v434 = vld [vmem:[%s428 + $0x14] sm:$0x1]
        %v435 = vld [vmem:[%s428 + $0x18] sm:$0xf]
        %v436 = vld [vmem:[%s428 + $0x1c] sm:$0xf]
        %v437 = vld [vmem:[%s428 + $0x20] sm:$0x1]
        %v438 = vld [vmem:[%s428 + $0x24] sm:$0xf]
        %v439 = vld [vmem:[%s428 + $0x28] sm:$0xf]
        %v440 = vld [vmem:[%s428 + $0x2c] sm:$0x1]
        %v441 = vld [vmem:[%s428 + $0x30] sm:$0xf]
        %v442 = vld [vmem:[%s428 + $0x34] sm:$0xf]
        %v443 = vld [vmem:[%s428 + $0x38] sm:$0x1]
        %v444 = vld [vmem:[%s428 + $0x3c] sm:$0xf]
        %v445 = vld [vmem:[%s428 + $0x40] sm:$0xf]
        %v446 = vld [vmem:[%s428 + $0x44] sm:$0x1]
        %v447 = vld [vmem:[%s428 + $0x48] sm:$0xf]
        %v448 = vld [vmem:[%s428 + $0x4c] sm:$0xf]
        %v449 = vld [vmem:[%s428 + $0x50] sm:$0x1]
        %v450 = vld [vmem:[%s428 + $0x54] sm:$0xf]
        %v451 = vld [vmem:[%s428 + $0x58] sm:$0xf]
        %v452 = vld [vmem:[%s428 + $0x5c] sm:$0x1]
        %v453 = vld [vmem:[%s428 + $0x60] sm:$0xf]
        %v454 = vld [vmem:[%s428 + $0x64] sm:$0xf]
        %v455 = vld [vmem:[%s428 + $0x68] sm:$0x1]
        %v456 = vld [vmem:[%s428 + $0x6c] sm:$0xf]
        %v457 = vld [vmem:[%s428 + $0x70] sm:$0xf]
        %v458 = vld [vmem:[%s428 + $0x74] sm:$0x1]
        %v459 = vld [vmem:[%s428 + $0x78] sm:$0xf]
        %v460 = vld [vmem:[%s428 + $0x7c] sm:$0xf]
        %v461 = vld [vmem:[%s428 + $0x80] sm:$0x1]
        %v462 = vld [vmem:[%s428 + $0x84] sm:$0xf]
        %v463 = vld [vmem:[%s428 + $0x88] sm:$0xf]
        %v464 = vld [vmem:[%s428 + $0x8c] sm:$0x1]
        %v465 = vld [vmem:[%s428 + $0x90] sm:$0xf]
        %v466 = vld [vmem:[%s428 + $0x94] sm:$0xf]
        %v467 = vld [vmem:[%s428 + $0x98] sm:$0x1]
        %v468 = vld [vmem:[%s428 + $0x9c] sm:$0xf]
        %v469 = vld [vmem:[%s428 + $0xa0] sm:$0xf]
        %v470 = vld [vmem:[%s428 + $0xa4] sm:$0x1]
        %v471 = vld [vmem:[%s428 + $0xa8] sm:$0xf]
        %v472 = vld [vmem:[%s428 + $0xac] sm:$0xf]
        %v473 = vld [vmem:[%s428 + $0xb0] sm:$0x1]
        %v474 = vld [vmem:[%s428 + $0xb4] sm:$0xf]
        %v475 = vld [vmem:[%s428 + $0xb8] sm:$0xf]
        %v476 = vld [vmem:[%s428 + $0xbc] sm:$0x1]
        %v477 = vld [vmem:[%s428 + $0xc0] sm:$0xf]
        %v478 = vld [vmem:[%s428 + $0xc4] sm:$0xf]
        %v479 = vld [vmem:[%s428 + $0xc8] sm:$0x1]
        %v480 = vld [vmem:[%s428 + $0xcc] sm:$0xf]
        %v481 = vld [vmem:[%s428 + $0xd0] sm:$0xf]
        %v482 = vld [vmem:[%s428 + $0xd4] sm:$0x1]
        %v538 = vunpack.c.l.s4 1966171168
        %v539 = vunpack.c.0.s8 %v538
        %v540 = vlaneseq
        %v541 = vshrl.u32 %v540, 7
        %v542 = vsub.s32 %v539, %v541
        %v543 = vrot.slane %v429, %v542
        %v544 = vcombine.high %v543, %v543
        %v546 = vunpack.c.l.s4 1966171168
        %v547 = vunpack.c.0.s8 %v546
        %v548 = vlaneseq
        %v549 = vshrl.u32 %v548, 7
        %v550 = vsub.s32 %v547, %v549
        %v551 = vrot.slane %v543, %v550
        %v553 = vunpack.c.l.s4 1966171168
        %v554 = vunpack.c.0.s8 %v553
        %v555 = vlaneseq
        %v556 = vshrl.u32 %v555, 7
        %v557 = vsub.s32 %v554, %v556
        %v558 = vrot.slane %v544, %v557
        %v559 = vcombine.high %v551, %v551
        %v560 = vcombine.high %v558, %v558
        %v562 = vunpack.c.l.s4 1966171168
        %v563 = vunpack.c.0.s8 %v562
        %v564 = vlaneseq
        %v565 = vshrl.u32 %v564, 7
        %v566 = vsub.s32 %v563, %v565
        %v567 = vrot.slane %v430, %v566
        %v568 = vcombine.high %v567, %v567
        %v570 = vunpack.c.l.s4 1966171168
        %v571 = vunpack.c.0.s8 %v570
        %v572 = vlaneseq
        %v573 = vshrl.u32 %v572, 7
        %v574 = vsub.s32 %v571, %v573
        %v575 = vrot.slane %v567, %v574
        %v577 = vunpack.c.l.s4 1966171168
        %v578 = vunpack.c.0.s8 %v577
        %v579 = vlaneseq
        %v580 = vshrl.u32 %v579, 7
        %v581 = vsub.s32 %v578, %v580
        %v582 = vrot.slane %v568, %v581
        %v583 = vcombine.high %v575, %v575
        %v584 = vcombine.high %v582, %v582
        %v586 = vunpack.c.l.s4 1966171168
        %v587 = vunpack.c.0.s8 %v586
        %v588 = vlaneseq
        %v589 = vshrl.u32 %v588, 7
        %v590 = vsub.s32 %v587, %v589
        %v591 = vrot.slane %v431, %v590
        %v593 = vunpack.c.l.s4 1966171168
        %v594 = vunpack.c.0.s8 %v593
        %v595 = vlaneseq
        %v596 = vshrl.u32 %v595, 7
        %v597 = vsub.s32 %v594, %v596
        %v598 = vrot.slane %v591, %v597
        %v600 = vunpack.c.l.s4 1966171168
        %v601 = vunpack.c.0.s8 %v600
        %v602 = vlaneseq
        %v603 = vshrl.u32 %v602, 7
        %v604 = vsub.s32 %v601, %v603
        %v605 = vrot.slane %v432, %v604
        %v606 = vcombine.high %v605, %v605
        %v608 = vunpack.c.l.s4 1966171168
        %v609 = vunpack.c.0.s8 %v608
        %v610 = vlaneseq
        %v611 = vshrl.u32 %v610, 7
        %v612 = vsub.s32 %v609, %v611
        %v613 = vrot.slane %v605, %v612
        %v615 = vunpack.c.l.s4 1966171168
        %v616 = vunpack.c.0.s8 %v615
        %v617 = vlaneseq
        %v618 = vshrl.u32 %v617, 7
        %v619 = vsub.s32 %v616, %v618
        %v620 = vrot.slane %v606, %v619
        %v621 = vcombine.high %v613, %v613
        %v622 = vcombine.high %v620, %v620
        %v624 = vunpack.c.l.s4 1966171168
        %v625 = vunpack.c.0.s8 %v624
        %v626 = vlaneseq
        %v627 = vshrl.u32 %v626, 7
        %v628 = vsub.s32 %v625, %v627
        %v629 = vrot.slane %v433, %v628
        %v630 = vcombine.high %v629, %v629
        %v632 = vunpack.c.l.s4 1966171168
        %v633 = vunpack.c.0.s8 %v632
        %v634 = vlaneseq
        %v635 = vshrl.u32 %v634, 7
        %v636 = vsub.s32 %v633, %v635
        %v637 = vrot.slane %v629, %v636
        %v639 = vunpack.c.l.s4 1966171168
        %v640 = vunpack.c.0.s8 %v639
        %v641 = vlaneseq
        %v642 = vshrl.u32 %v641, 7
        %v643 = vsub.s32 %v640, %v642
        %v644 = vrot.slane %v630, %v643
        %v645 = vcombine.high %v637, %v637
        %v646 = vcombine.high %v644, %v644
        %v648 = vunpack.c.l.s4 1966171168
        %v649 = vunpack.c.0.s8 %v648
        %v650 = vlaneseq
        %v651 = vshrl.u32 %v650, 7
        %v652 = vsub.s32 %v649, %v651
        %v653 = vrot.slane %v434, %v652
        %v655 = vunpack.c.l.s4 1966171168
        %v656 = vunpack.c.0.s8 %v655
        %v657 = vlaneseq
        %v658 = vshrl.u32 %v657, 7
        %v659 = vsub.s32 %v656, %v658
        %v660 = vrot.slane %v653, %v659
        %v662 = vunpack.c.l.s4 1966171168
        %v663 = vunpack.c.0.s8 %v662
        %v664 = vlaneseq
        %v665 = vshrl.u32 %v664, 7
        %v666 = vsub.s32 %v663, %v665
        %v667 = vrot.slane %v435, %v666
        %v668 = vcombine.high %v667, %v667
        %v670 = vunpack.c.l.s4 1966171168
        %v671 = vunpack.c.0.s8 %v670
        %v672 = vlaneseq
        %v673 = vshrl.u32 %v672, 7
        %v674 = vsub.s32 %v671, %v673
        %v675 = vrot.slane %v667, %v674
        %v677 = vunpack.c.l.s4 1966171168
        %v678 = vunpack.c.0.s8 %v677
        %v679 = vlaneseq
        %v680 = vshrl.u32 %v679, 7
        %v681 = vsub.s32 %v678, %v680
        %v682 = vrot.slane %v668, %v681
        %v683 = vcombine.high %v675, %v675
        %v684 = vcombine.high %v682, %v682
        %v686 = vunpack.c.l.s4 1966171168
        %v687 = vunpack.c.0.s8 %v686
        %v688 = vlaneseq
        %v689 = vshrl.u32 %v688, 7
        %v690 = vsub.s32 %v687, %v689
        %v691 = vrot.slane %v436, %v690
        %v692 = vcombine.high %v691, %v691
        %v694 = vunpack.c.l.s4 1966171168
        %v695 = vunpack.c.0.s8 %v694
        %v696 = vlaneseq
        %v697 = vshrl.u32 %v696, 7
        %v698 = vsub.s32 %v695, %v697
        %v699 = vrot.slane %v691, %v698
        %v701 = vunpack.c.l.s4 1966171168
        %v702 = vunpack.c.0.s8 %v701
        %v703 = vlaneseq
        %v704 = vshrl.u32 %v703, 7
        %v705 = vsub.s32 %v702, %v704
        %v706 = vrot.slane %v692, %v705
        %v707 = vcombine.high %v699, %v699
        %v708 = vcombine.high %v706, %v706
        %v710 = vunpack.c.l.s4 1966171168
        %v711 = vunpack.c.0.s8 %v710
        %v712 = vlaneseq
        %v713 = vshrl.u32 %v712, 7
        %v714 = vsub.s32 %v711, %v713
        %v715 = vrot.slane %v437, %v714
        %v717 = vunpack.c.l.s4 1966171168
        %v718 = vunpack.c.0.s8 %v717
        %v719 = vlaneseq
        %v720 = vshrl.u32 %v719, 7
        %v721 = vsub.s32 %v718, %v720
        %v722 = vrot.slane %v715, %v721
        %v724 = vunpack.c.l.s4 1966171168
        %v725 = vunpack.c.0.s8 %v724
        %v726 = vlaneseq
        %v727 = vshrl.u32 %v726, 7
        %v728 = vsub.s32 %v725, %v727
        %v729 = vrot.slane %v438, %v728
        %v730 = vcombine.high %v729, %v729
        %v732 = vunpack.c.l.s4 1966171168
        %v733 = vunpack.c.0.s8 %v732
        %v734 = vlaneseq
        %v735 = vshrl.u32 %v734, 7
        %v736 = vsub.s32 %v733, %v735
        %v737 = vrot.slane %v729, %v736
        %v739 = vunpack.c.l.s4 1966171168
        %v740 = vunpack.c.0.s8 %v739
        %v741 = vlaneseq
        %v742 = vshrl.u32 %v741, 7
        %v743 = vsub.s32 %v740, %v742
        %v744 = vrot.slane %v730, %v743
        %v745 = vcombine.high %v737, %v737
        %v746 = vcombine.high %v744, %v744
        %v748 = vunpack.c.l.s4 1966171168
        %v749 = vunpack.c.0.s8 %v748
        %v750 = vlaneseq
        %v751 = vshrl.u32 %v750, 7
        %v752 = vsub.s32 %v749, %v751
        %v753 = vrot.slane %v439, %v752
        %v754 = vcombine.high %v753, %v753
        %v756 = vunpack.c.l.s4 1966171168
        %v757 = vunpack.c.0.s8 %v756
        %v758 = vlaneseq
        %v759 = vshrl.u32 %v758, 7
        %v760 = vsub.s32 %v757, %v759
        %v761 = vrot.slane %v753, %v760
        %v763 = vunpack.c.l.s4 1966171168
        %v764 = vunpack.c.0.s8 %v763
        %v765 = vlaneseq
        %v766 = vshrl.u32 %v765, 7
        %v767 = vsub.s32 %v764, %v766
        %v768 = vrot.slane %v754, %v767
        %v769 = vcombine.high %v761, %v761
        %v770 = vcombine.high %v768, %v768
        %v772 = vunpack.c.l.s4 1966171168
        %v773 = vunpack.c.0.s8 %v772
        %v774 = vlaneseq
        %v775 = vshrl.u32 %v774, 7
        %v776 = vsub.s32 %v773, %v775
        %v777 = vrot.slane %v440, %v776
        %v779 = vunpack.c.l.s4 1966171168
        %v780 = vunpack.c.0.s8 %v779
        %v781 = vlaneseq
        %v782 = vshrl.u32 %v781, 7
        %v783 = vsub.s32 %v780, %v782
        %v784 = vrot.slane %v777, %v783
        %v786 = vunpack.c.l.s4 1966171168
        %v787 = vunpack.c.0.s8 %v786
        %v788 = vlaneseq
        %v789 = vshrl.u32 %v788, 7
        %v790 = vsub.s32 %v787, %v789
        %v791 = vrot.slane %v441, %v790
        %v792 = vcombine.high %v791, %v791
        %v794 = vunpack.c.l.s4 1966171168
        %v795 = vunpack.c.0.s8 %v794
        %v796 = vlaneseq
        %v797 = vshrl.u32 %v796, 7
        %v798 = vsub.s32 %v795, %v797
        %v799 = vrot.slane %v791, %v798
        %v801 = vunpack.c.l.s4 1966171168
        %v802 = vunpack.c.0.s8 %v801
        %v803 = vlaneseq
        %v804 = vshrl.u32 %v803, 7
        %v805 = vsub.s32 %v802, %v804
        %v806 = vrot.slane %v792, %v805
        %v807 = vcombine.high %v799, %v799
        %v808 = vcombine.high %v806, %v806
        %v810 = vunpack.c.l.s4 1966171168
        %v811 = vunpack.c.0.s8 %v810
        %v812 = vlaneseq
        %v813 = vshrl.u32 %v812, 7
        %v814 = vsub.s32 %v811, %v813
        %v815 = vrot.slane %v442, %v814
        %v816 = vcombine.high %v815, %v815
        %v818 = vunpack.c.l.s4 1966171168
        %v819 = vunpack.c.0.s8 %v818
        %v820 = vlaneseq
        %v821 = vshrl.u32 %v820, 7
        %v822 = vsub.s32 %v819, %v821
        %v823 = vrot.slane %v815, %v822
        %v825 = vunpack.c.l.s4 1966171168
        %v826 = vunpack.c.0.s8 %v825
        %v827 = vlaneseq
        %v828 = vshrl.u32 %v827, 7
        %v829 = vsub.s32 %v826, %v828
        %v830 = vrot.slane %v816, %v829
        %v831 = vcombine.high %v823, %v823
        %v832 = vcombine.high %v830, %v830
        %v834 = vunpack.c.l.s4 1966171168
        %v835 = vunpack.c.0.s8 %v834
        %v836 = vlaneseq
        %v837 = vshrl.u32 %v836, 7
        %v838 = vsub.s32 %v835, %v837
        %v839 = vrot.slane %v443, %v838
        %v841 = vunpack.c.l.s4 1966171168
        %v842 = vunpack.c.0.s8 %v841
        %v843 = vlaneseq
        %v844 = vshrl.u32 %v843, 7
        %v845 = vsub.s32 %v842, %v844
        %v846 = vrot.slane %v839, %v845
        %v848 = vunpack.c.l.s4 1966171168
        %v849 = vunpack.c.0.s8 %v848
        %v850 = vlaneseq
        %v851 = vshrl.u32 %v850, 7
        %v852 = vsub.s32 %v849, %v851
        %v853 = vrot.slane %v444, %v852
        %v854 = vcombine.high %v853, %v853
        %v856 = vunpack.c.l.s4 1966171168
        %v857 = vunpack.c.0.s8 %v856
        %v858 = vlaneseq
        %v859 = vshrl.u32 %v858, 7
        %v860 = vsub.s32 %v857, %v859
        %v861 = vrot.slane %v853, %v860
        %v863 = vunpack.c.l.s4 1966171168
        %v864 = vunpack.c.0.s8 %v863
        %v865 = vlaneseq
        %v866 = vshrl.u32 %v865, 7
        %v867 = vsub.s32 %v864, %v866
        %v868 = vrot.slane %v854, %v867
        %v869 = vcombine.high %v861, %v861
        %v870 = vcombine.high %v868, %v868
        %v872 = vunpack.c.l.s4 1966171168
        %v873 = vunpack.c.0.s8 %v872
        %v874 = vlaneseq
        %v875 = vshrl.u32 %v874, 7
        %v876 = vsub.s32 %v873, %v875
        %v877 = vrot.slane %v445, %v876
        %v878 = vcombine.high %v877, %v877
        %v880 = vunpack.c.l.s4 1966171168
        %v881 = vunpack.c.0.s8 %v880
        %v882 = vlaneseq
        %v883 = vshrl.u32 %v882, 7
        %v884 = vsub.s32 %v881, %v883
        %v885 = vrot.slane %v877, %v884
        %v887 = vunpack.c.l.s4 1966171168
        %v888 = vunpack.c.0.s8 %v887
        %v889 = vlaneseq
        %v890 = vshrl.u32 %v889, 7
        %v891 = vsub.s32 %v888, %v890
        %v892 = vrot.slane %v878, %v891
        %v893 = vcombine.high %v885, %v885
        %v894 = vcombine.high %v892, %v892
        %v896 = vunpack.c.l.s4 1966171168
        %v897 = vunpack.c.0.s8 %v896
        %v898 = vlaneseq
        %v899 = vshrl.u32 %v898, 7
        %v900 = vsub.s32 %v897, %v899
        %v901 = vrot.slane %v446, %v900
        %v903 = vunpack.c.l.s4 1966171168
        %v904 = vunpack.c.0.s8 %v903
        %v905 = vlaneseq
        %v906 = vshrl.u32 %v905, 7
        %v907 = vsub.s32 %v904, %v906
        %v908 = vrot.slane %v901, %v907
        %v910 = vunpack.c.l.s4 1966171168
        %v911 = vunpack.c.0.s8 %v910
        %v912 = vlaneseq
        %v913 = vshrl.u32 %v912, 7
        %v914 = vsub.s32 %v911, %v913
        %v915 = vrot.slane %v447, %v914
        %v916 = vcombine.high %v915, %v915
        %v918 = vunpack.c.l.s4 1966171168
        %v919 = vunpack.c.0.s8 %v918
        %v920 = vlaneseq
        %v921 = vshrl.u32 %v920, 7
        %v922 = vsub.s32 %v919, %v921
        %v923 = vrot.slane %v915, %v922
        %v925 = vunpack.c.l.s4 1966171168
        %v926 = vunpack.c.0.s8 %v925
        %v927 = vlaneseq
        %v928 = vshrl.u32 %v927, 7
        %v929 = vsub.s32 %v926, %v928
        %v930 = vrot.slane %v916, %v929
        %v931 = vcombine.high %v923, %v923
        %v932 = vcombine.high %v930, %v930
        %v934 = vunpack.c.l.s4 1966171168
        %v935 = vunpack.c.0.s8 %v934
        %v936 = vlaneseq
        %v937 = vshrl.u32 %v936, 7
        %v938 = vsub.s32 %v935, %v937
        %v939 = vrot.slane %v448, %v938
        %v940 = vcombine.high %v939, %v939
        %v942 = vunpack.c.l.s4 1966171168
        %v943 = vunpack.c.0.s8 %v942
        %v944 = vlaneseq
        %v945 = vshrl.u32 %v944, 7
        %v946 = vsub.s32 %v943, %v945
        %v947 = vrot.slane %v939, %v946
        %v949 = vunpack.c.l.s4 1966171168
        %v950 = vunpack.c.0.s8 %v949
        %v951 = vlaneseq
        %v952 = vshrl.u32 %v951, 7
        %v953 = vsub.s32 %v950, %v952
        %v954 = vrot.slane %v940, %v953
        %v955 = vcombine.high %v947, %v947
        %v956 = vcombine.high %v954, %v954
        %v958 = vunpack.c.l.s4 1966171168
        %v959 = vunpack.c.0.s8 %v958
        %v960 = vlaneseq
        %v961 = vshrl.u32 %v960, 7
        %v962 = vsub.s32 %v959, %v961
        %v963 = vrot.slane %v449, %v962
        %v965 = vunpack.c.l.s4 1966171168
        %v966 = vunpack.c.0.s8 %v965
        %v967 = vlaneseq
        %v968 = vshrl.u32 %v967, 7
        %v969 = vsub.s32 %v966, %v968
        %v970 = vrot.slane %v963, %v969
        %v972 = vunpack.c.l.s4 1966171168
        %v973 = vunpack.c.0.s8 %v972
        %v974 = vlaneseq
        %v975 = vshrl.u32 %v974, 7
        %v976 = vsub.s32 %v973, %v975
        %v977 = vrot.slane %v450, %v976
        %v978 = vcombine.high %v977, %v977
        %v980 = vunpack.c.l.s4 1966171168
        %v981 = vunpack.c.0.s8 %v980
        %v982 = vlaneseq
        %v983 = vshrl.u32 %v982, 7
        %v984 = vsub.s32 %v981, %v983
        %v985 = vrot.slane %v977, %v984
        %v987 = vunpack.c.l.s4 1966171168
        %v988 = vunpack.c.0.s8 %v987
        %v989 = vlaneseq
        %v990 = vshrl.u32 %v989, 7
        %v991 = vsub.s32 %v988, %v990
        %v992 = vrot.slane %v978, %v991
        %v993 = vcombine.high %v985, %v985
        %v994 = vcombine.high %v992, %v992
        %v996 = vunpack.c.l.s4 1966171168
        %v997 = vunpack.c.0.s8 %v996
        %v998 = vlaneseq
        %v999 = vshrl.u32 %v998, 7
        %v1000 = vsub.s32 %v997, %v999
        %v1001 = vrot.slane %v451, %v1000
        %v1002 = vcombine.high %v1001, %v1001
        %v1004 = vunpack.c.l.s4 1966171168
        %v1005 = vunpack.c.0.s8 %v1004
        %v1006 = vlaneseq
        %v1007 = vshrl.u32 %v1006, 7
        %v1008 = vsub.s32 %v1005, %v1007
        %v1009 = vrot.slane %v1001, %v1008
        %v1011 = vunpack.c.l.s4 1966171168
        %v1012 = vunpack.c.0.s8 %v1011
        %v1013 = vlaneseq
        %v1014 = vshrl.u32 %v1013, 7
        %v1015 = vsub.s32 %v1012, %v1014
        %v1016 = vrot.slane %v1002, %v1015
        %v1017 = vcombine.high %v1009, %v1009
        %v1018 = vcombine.high %v1016, %v1016
        %v1020 = vunpack.c.l.s4 1966171168
        %v1021 = vunpack.c.0.s8 %v1020
        %v1022 = vlaneseq
        %v1023 = vshrl.u32 %v1022, 7
        %v1024 = vsub.s32 %v1021, %v1023
        %v1025 = vrot.slane %v452, %v1024
        %v1027 = vunpack.c.l.s4 1966171168
        %v1028 = vunpack.c.0.s8 %v1027
        %v1029 = vlaneseq
        %v1030 = vshrl.u32 %v1029, 7
        %v1031 = vsub.s32 %v1028, %v1030
        %v1032 = vrot.slane %v1025, %v1031
        %v1034 = vunpack.c.l.s4 1966171168
        %v1035 = vunpack.c.0.s8 %v1034
        %v1036 = vlaneseq
        %v1037 = vshrl.u32 %v1036, 7
        %v1038 = vsub.s32 %v1035, %v1037
        %v1039 = vrot.slane %v453, %v1038
        %v1040 = vcombine.high %v1039, %v1039
        %v1042 = vunpack.c.l.s4 1966171168
        %v1043 = vunpack.c.0.s8 %v1042
        %v1044 = vlaneseq
        %v1045 = vshrl.u32 %v1044, 7
        %v1046 = vsub.s32 %v1043, %v1045
        %v1047 = vrot.slane %v1039, %v1046
        %v1049 = vunpack.c.l.s4 1966171168
        %v1050 = vunpack.c.0.s8 %v1049
        %v1051 = vlaneseq
        %v1052 = vshrl.u32 %v1051, 7
        %v1053 = vsub.s32 %v1050, %v1052
        %v1054 = vrot.slane %v1040, %v1053
        %v1055 = vcombine.high %v1047, %v1047
        %v1056 = vcombine.high %v1054, %v1054
        %v1058 = vunpack.c.l.s4 1966171168
        %v1059 = vunpack.c.0.s8 %v1058
        %v1060 = vlaneseq
        %v1061 = vshrl.u32 %v1060, 7
        %v1062 = vsub.s32 %v1059, %v1061
        %v1063 = vrot.slane %v454, %v1062
        %v1064 = vcombine.high %v1063, %v1063
        %v1066 = vunpack.c.l.s4 1966171168
        %v1067 = vunpack.c.0.s8 %v1066
        %v1068 = vlaneseq
        %v1069 = vshrl.u32 %v1068, 7
        %v1070 = vsub.s32 %v1067, %v1069
        %v1071 = vrot.slane %v1063, %v1070
        %v1073 = vunpack.c.l.s4 1966171168
        %v1074 = vunpack.c.0.s8 %v1073
        %v1075 = vlaneseq
        %v1076 = vshrl.u32 %v1075, 7
        %v1077 = vsub.s32 %v1074, %v1076
        %v1078 = vrot.slane %v1064, %v1077
        %v1079 = vcombine.high %v1071, %v1071
        %v1080 = vcombine.high %v1078, %v1078
        %v1082 = vunpack.c.l.s4 1966171168
        %v1083 = vunpack.c.0.s8 %v1082
        %v1084 = vlaneseq
        %v1085 = vshrl.u32 %v1084, 7
        %v1086 = vsub.s32 %v1083, %v1085
        %v1087 = vrot.slane %v455, %v1086
        %v1089 = vunpack.c.l.s4 1966171168
        %v1090 = vunpack.c.0.s8 %v1089
        %v1091 = vlaneseq
        %v1092 = vshrl.u32 %v1091, 7
        %v1093 = vsub.s32 %v1090, %v1092
        %v1094 = vrot.slane %v1087, %v1093
        %v1096 = vunpack.c.l.s4 1966171168
        %v1097 = vunpack.c.0.s8 %v1096
        %v1098 = vlaneseq
        %v1099 = vshrl.u32 %v1098, 7
        %v1100 = vsub.s32 %v1097, %v1099
        %v1101 = vrot.slane %v456, %v1100
        %v1102 = vcombine.high %v1101, %v1101
        %v1104 = vunpack.c.l.s4 1966171168
        %v1105 = vunpack.c.0.s8 %v1104
        %v1106 = vlaneseq
        %v1107 = vshrl.u32 %v1106, 7
        %v1108 = vsub.s32 %v1105, %v1107
        %v1109 = vrot.slane %v1101, %v1108
        %v1111 = vunpack.c.l.s4 1966171168
        %v1112 = vunpack.c.0.s8 %v1111
        %v1113 = vlaneseq
        %v1114 = vshrl.u32 %v1113, 7
        %v1115 = vsub.s32 %v1112, %v1114
        %v1116 = vrot.slane %v1102, %v1115
        %v1117 = vcombine.high %v1109, %v1109
        %v1118 = vcombine.high %v1116, %v1116
        %v1120 = vunpack.c.l.s4 1966171168
        %v1121 = vunpack.c.0.s8 %v1120
        %v1122 = vlaneseq
        %v1123 = vshrl.u32 %v1122, 7
        %v1124 = vsub.s32 %v1121, %v1123
        %v1125 = vrot.slane %v457, %v1124
        %v1126 = vcombine.high %v1125, %v1125
        %v1128 = vunpack.c.l.s4 1966171168
        %v1129 = vunpack.c.0.s8 %v1128
        %v1130 = vlaneseq
        %v1131 = vshrl.u32 %v1130, 7
        %v1132 = vsub.s32 %v1129, %v1131
        %v1133 = vrot.slane %v1125, %v1132
        %v1135 = vunpack.c.l.s4 1966171168
        %v1136 = vunpack.c.0.s8 %v1135
        %v1137 = vlaneseq
        %v1138 = vshrl.u32 %v1137, 7
        %v1139 = vsub.s32 %v1136, %v1138
        %v1140 = vrot.slane %v1126, %v1139
        %v1141 = vcombine.high %v1133, %v1133
        %v1142 = vcombine.high %v1140, %v1140
        %v1144 = vunpack.c.l.s4 1966171168
        %v1145 = vunpack.c.0.s8 %v1144
        %v1146 = vlaneseq
        %v1147 = vshrl.u32 %v1146, 7
        %v1148 = vsub.s32 %v1145, %v1147
        %v1149 = vrot.slane %v458, %v1148
        %v1151 = vunpack.c.l.s4 1966171168
        %v1152 = vunpack.c.0.s8 %v1151
        %v1153 = vlaneseq
        %v1154 = vshrl.u32 %v1153, 7
        %v1155 = vsub.s32 %v1152, %v1154
        %v1156 = vrot.slane %v1149, %v1155
        %v1158 = vunpack.c.l.s4 1966171168
        %v1159 = vunpack.c.0.s8 %v1158
        %v1160 = vlaneseq
        %v1161 = vshrl.u32 %v1160, 7
        %v1162 = vsub.s32 %v1159, %v1161
        %v1163 = vrot.slane %v459, %v1162
        %v1164 = vcombine.high %v1163, %v1163
        %v1166 = vunpack.c.l.s4 1966171168
        %v1167 = vunpack.c.0.s8 %v1166
        %v1168 = vlaneseq
        %v1169 = vshrl.u32 %v1168, 7
        %v1170 = vsub.s32 %v1167, %v1169
        %v1171 = vrot.slane %v1163, %v1170
        %v1173 = vunpack.c.l.s4 1966171168
        %v1174 = vunpack.c.0.s8 %v1173
        %v1175 = vlaneseq
        %v1176 = vshrl.u32 %v1175, 7
        %v1177 = vsub.s32 %v1174, %v1176
        %v1178 = vrot.slane %v1164, %v1177
        %v1179 = vcombine.high %v1171, %v1171
        %v1180 = vcombine.high %v1178, %v1178
        %v1182 = vunpack.c.l.s4 1966171168
        %v1183 = vunpack.c.0.s8 %v1182
        %v1184 = vlaneseq
        %v1185 = vshrl.u32 %v1184, 7
        %v1186 = vsub.s32 %v1183, %v1185
        %v1187 = vrot.slane %v460, %v1186
        %v1188 = vcombine.high %v1187, %v1187
        %v1190 = vunpack.c.l.s4 1966171168
        %v1191 = vunpack.c.0.s8 %v1190
        %v1192 = vlaneseq
        %v1193 = vshrl.u32 %v1192, 7
        %v1194 = vsub.s32 %v1191, %v1193
        %v1195 = vrot.slane %v1187, %v1194
        %v1197 = vunpack.c.l.s4 1966171168
        %v1198 = vunpack.c.0.s8 %v1197
        %v1199 = vlaneseq
        %v1200 = vshrl.u32 %v1199, 7
        %v1201 = vsub.s32 %v1198, %v1200
        %v1202 = vrot.slane %v1188, %v1201
        %v1203 = vcombine.high %v1195, %v1195
        %v1204 = vcombine.high %v1202, %v1202
        %v1206 = vunpack.c.l.s4 1966171168
        %v1207 = vunpack.c.0.s8 %v1206
        %v1208 = vlaneseq
        %v1209 = vshrl.u32 %v1208, 7
        %v1210 = vsub.s32 %v1207, %v1209
        %v1211 = vrot.slane %v461, %v1210
        %v1213 = vunpack.c.l.s4 1966171168
        %v1214 = vunpack.c.0.s8 %v1213
        %v1215 = vlaneseq
        %v1216 = vshrl.u32 %v1215, 7
        %v1217 = vsub.s32 %v1214, %v1216
        %v1218 = vrot.slane %v1211, %v1217
        %v1220 = vunpack.c.l.s4 1966171168
        %v1221 = vunpack.c.0.s8 %v1220
        %v1222 = vlaneseq
        %v1223 = vshrl.u32 %v1222, 7
        %v1224 = vsub.s32 %v1221, %v1223
        %v1225 = vrot.slane %v462, %v1224
        %v1226 = vcombine.high %v1225, %v1225
        %v1228 = vunpack.c.l.s4 1966171168
        %v1229 = vunpack.c.0.s8 %v1228
        %v1230 = vlaneseq
        %v1231 = vshrl.u32 %v1230, 7
        %v1232 = vsub.s32 %v1229, %v1231
        %v1233 = vrot.slane %v1225, %v1232
        %v1235 = vunpack.c.l.s4 1966171168
        %v1236 = vunpack.c.0.s8 %v1235
        %v1237 = vlaneseq
        %v1238 = vshrl.u32 %v1237, 7
        %v1239 = vsub.s32 %v1236, %v1238
        %v1240 = vrot.slane %v1226, %v1239
        %v1241 = vcombine.high %v1233, %v1233
        %v1242 = vcombine.high %v1240, %v1240
        %v1244 = vunpack.c.l.s4 1966171168
        %v1245 = vunpack.c.0.s8 %v1244
        %v1246 = vlaneseq
        %v1247 = vshrl.u32 %v1246, 7
        %v1248 = vsub.s32 %v1245, %v1247
        %v1249 = vrot.slane %v463, %v1248
        %v1250 = vcombine.high %v1249, %v1249
        %v1252 = vunpack.c.l.s4 1966171168
        %v1253 = vunpack.c.0.s8 %v1252
        %v1254 = vlaneseq
        %v1255 = vshrl.u32 %v1254, 7
        %v1256 = vsub.s32 %v1253, %v1255
        %v1257 = vrot.slane %v1249, %v1256
        %v1259 = vunpack.c.l.s4 1966171168
        %v1260 = vunpack.c.0.s8 %v1259
        %v1261 = vlaneseq
        %v1262 = vshrl.u32 %v1261, 7
        %v1263 = vsub.s32 %v1260, %v1262
        %v1264 = vrot.slane %v1250, %v1263
        %v1265 = vcombine.high %v1257, %v1257
        %v1266 = vcombine.high %v1264, %v1264
        %v1268 = vunpack.c.l.s4 1966171168
        %v1269 = vunpack.c.0.s8 %v1268
        %v1270 = vlaneseq
        %v1271 = vshrl.u32 %v1270, 7
        %v1272 = vsub.s32 %v1269, %v1271
        %v1273 = vrot.slane %v464, %v1272
        %v1275 = vunpack.c.l.s4 1966171168
        %v1276 = vunpack.c.0.s8 %v1275
        %v1277 = vlaneseq
        %v1278 = vshrl.u32 %v1277, 7
        %v1279 = vsub.s32 %v1276, %v1278
        %v1280 = vrot.slane %v1273, %v1279
        %v1282 = vunpack.c.l.s4 1966171168
        %v1283 = vunpack.c.0.s8 %v1282
        %v1284 = vlaneseq
        %v1285 = vshrl.u32 %v1284, 7
        %v1286 = vsub.s32 %v1283, %v1285
        %v1287 = vrot.slane %v465, %v1286
        %v1288 = vcombine.high %v1287, %v1287
        %v1290 = vunpack.c.l.s4 1966171168
        %v1291 = vunpack.c.0.s8 %v1290
        %v1292 = vlaneseq
        %v1293 = vshrl.u32 %v1292, 7
        %v1294 = vsub.s32 %v1291, %v1293
        %v1295 = vrot.slane %v1287, %v1294
        %v1297 = vunpack.c.l.s4 1966171168
        %v1298 = vunpack.c.0.s8 %v1297
        %v1299 = vlaneseq
        %v1300 = vshrl.u32 %v1299, 7
        %v1301 = vsub.s32 %v1298, %v1300
        %v1302 = vrot.slane %v1288, %v1301
        %v1303 = vcombine.high %v1295, %v1295
        %v1304 = vcombine.high %v1302, %v1302
        %v1306 = vunpack.c.l.s4 1966171168
        %v1307 = vunpack.c.0.s8 %v1306
        %v1308 = vlaneseq
        %v1309 = vshrl.u32 %v1308, 7
        %v1310 = vsub.s32 %v1307, %v1309
        %v1311 = vrot.slane %v466, %v1310
        %v1312 = vcombine.high %v1311, %v1311
        %v1314 = vunpack.c.l.s4 1966171168
        %v1315 = vunpack.c.0.s8 %v1314
        %v1316 = vlaneseq
        %v1317 = vshrl.u32 %v1316, 7
        %v1318 = vsub.s32 %v1315, %v1317
        %v1319 = vrot.slane %v1311, %v1318
        %v1321 = vunpack.c.l.s4 1966171168
        %v1322 = vunpack.c.0.s8 %v1321
        %v1323 = vlaneseq
        %v1324 = vshrl.u32 %v1323, 7
        %v1325 = vsub.s32 %v1322, %v1324
        %v1326 = vrot.slane %v1312, %v1325
        %v1327 = vcombine.high %v1319, %v1319
        %v1328 = vcombine.high %v1326, %v1326
        %v1330 = vunpack.c.l.s4 1966171168
        %v1331 = vunpack.c.0.s8 %v1330
        %v1332 = vlaneseq
        %v1333 = vshrl.u32 %v1332, 7
        %v1334 = vsub.s32 %v1331, %v1333
        %v1335 = vrot.slane %v467, %v1334
        %v1337 = vunpack.c.l.s4 1966171168
        %v1338 = vunpack.c.0.s8 %v1337
        %v1339 = vlaneseq
        %v1340 = vshrl.u32 %v1339, 7
        %v1341 = vsub.s32 %v1338, %v1340
        %v1342 = vrot.slane %v1335, %v1341
        %v1344 = vunpack.c.l.s4 1966171168
        %v1345 = vunpack.c.0.s8 %v1344
        %v1346 = vlaneseq
        %v1347 = vshrl.u32 %v1346, 7
        %v1348 = vsub.s32 %v1345, %v1347
        %v1349 = vrot.slane %v468, %v1348
        %v1350 = vcombine.high %v1349, %v1349
        %v1352 = vunpack.c.l.s4 1966171168
        %v1353 = vunpack.c.0.s8 %v1352
        %v1354 = vlaneseq
        %v1355 = vshrl.u32 %v1354, 7
        %v1356 = vsub.s32 %v1353, %v1355
        %v1357 = vrot.slane %v1349, %v1356
        %v1359 = vunpack.c.l.s4 1966171168
        %v1360 = vunpack.c.0.s8 %v1359
        %v1361 = vlaneseq
        %v1362 = vshrl.u32 %v1361, 7
        %v1363 = vsub.s32 %v1360, %v1362
        %v1364 = vrot.slane %v1350, %v1363
        %v1365 = vcombine.high %v1357, %v1357
        %v1366 = vcombine.high %v1364, %v1364
        %v1368 = vunpack.c.l.s4 1966171168
        %v1369 = vunpack.c.0.s8 %v1368
        %v1370 = vlaneseq
        %v1371 = vshrl.u32 %v1370, 7
        %v1372 = vsub.s32 %v1369, %v1371
        %v1373 = vrot.slane %v469, %v1372
        %v1374 = vcombine.high %v1373, %v1373
        %v1376 = vunpack.c.l.s4 1966171168
        %v1377 = vunpack.c.0.s8 %v1376
        %v1378 = vlaneseq
        %v1379 = vshrl.u32 %v1378, 7
        %v1380 = vsub.s32 %v1377, %v1379
        %v1381 = vrot.slane %v1373, %v1380
        %v1383 = vunpack.c.l.s4 1966171168
        %v1384 = vunpack.c.0.s8 %v1383
        %v1385 = vlaneseq
        %v1386 = vshrl.u32 %v1385, 7
        %v1387 = vsub.s32 %v1384, %v1386
        %v1388 = vrot.slane %v1374, %v1387
        %v1389 = vcombine.high %v1381, %v1381
        %v1390 = vcombine.high %v1388, %v1388
        %v1392 = vunpack.c.l.s4 1966171168
        %v1393 = vunpack.c.0.s8 %v1392
        %v1394 = vlaneseq
        %v1395 = vshrl.u32 %v1394, 7
        %v1396 = vsub.s32 %v1393, %v1395
        %v1397 = vrot.slane %v470, %v1396
        %v1399 = vunpack.c.l.s4 1966171168
        %v1400 = vunpack.c.0.s8 %v1399
        %v1401 = vlaneseq
        %v1402 = vshrl.u32 %v1401, 7
        %v1403 = vsub.s32 %v1400, %v1402
        %v1404 = vrot.slane %v1397, %v1403
        %v1406 = vunpack.c.l.s4 1966171168
        %v1407 = vunpack.c.0.s8 %v1406
        %v1408 = vlaneseq
        %v1409 = vshrl.u32 %v1408, 7
        %v1410 = vsub.s32 %v1407, %v1409
        %v1411 = vrot.slane %v471, %v1410
        %v1412 = vcombine.high %v1411, %v1411
        %v1414 = vunpack.c.l.s4 1966171168
        %v1415 = vunpack.c.0.s8 %v1414
        %v1416 = vlaneseq
        %v1417 = vshrl.u32 %v1416, 7
        %v1418 = vsub.s32 %v1415, %v1417
        %v1419 = vrot.slane %v1411, %v1418
        %v1421 = vunpack.c.l.s4 1966171168
        %v1422 = vunpack.c.0.s8 %v1421
        %v1423 = vlaneseq
        %v1424 = vshrl.u32 %v1423, 7
        %v1425 = vsub.s32 %v1422, %v1424
        %v1426 = vrot.slane %v1412, %v1425
        %v1427 = vcombine.high %v1419, %v1419
        %v1428 = vcombine.high %v1426, %v1426
        %v1430 = vunpack.c.l.s4 1966171168
        %v1431 = vunpack.c.0.s8 %v1430
        %v1432 = vlaneseq
        %v1433 = vshrl.u32 %v1432, 7
        %v1434 = vsub.s32 %v1431, %v1433
        %v1435 = vrot.slane %v472, %v1434
        %v1436 = vcombine.high %v1435, %v1435
        %v1438 = vunpack.c.l.s4 1966171168
        %v1439 = vunpack.c.0.s8 %v1438
        %v1440 = vlaneseq
        %v1441 = vshrl.u32 %v1440, 7
        %v1442 = vsub.s32 %v1439, %v1441
        %v1443 = vrot.slane %v1435, %v1442
        %v1445 = vunpack.c.l.s4 1966171168
        %v1446 = vunpack.c.0.s8 %v1445
        %v1447 = vlaneseq
        %v1448 = vshrl.u32 %v1447, 7
        %v1449 = vsub.s32 %v1446, %v1448
        %v1450 = vrot.slane %v1436, %v1449
        %v1451 = vcombine.high %v1443, %v1443
        %v1452 = vcombine.high %v1450, %v1450
        %v1454 = vunpack.c.l.s4 1966171168
        %v1455 = vunpack.c.0.s8 %v1454
        %v1456 = vlaneseq
        %v1457 = vshrl.u32 %v1456, 7
        %v1458 = vsub.s32 %v1455, %v1457
        %v1459 = vrot.slane %v473, %v1458
        %v1461 = vunpack.c.l.s4 1966171168
        %v1462 = vunpack.c.0.s8 %v1461
        %v1463 = vlaneseq
        %v1464 = vshrl.u32 %v1463, 7
        %v1465 = vsub.s32 %v1462, %v1464
        %v1466 = vrot.slane %v1459, %v1465
        %v1468 = vunpack.c.l.s4 1966171168
        %v1469 = vunpack.c.0.s8 %v1468
        %v1470 = vlaneseq
        %v1471 = vshrl.u32 %v1470, 7
        %v1472 = vsub.s32 %v1469, %v1471
        %v1473 = vrot.slane %v474, %v1472
        %v1474 = vcombine.high %v1473, %v1473
        %v1476 = vunpack.c.l.s4 1966171168
        %v1477 = vunpack.c.0.s8 %v1476
        %v1478 = vlaneseq
        %v1479 = vshrl.u32 %v1478, 7
        %v1480 = vsub.s32 %v1477, %v1479
        %v1481 = vrot.slane %v1473, %v1480
        %v1483 = vunpack.c.l.s4 1966171168
        %v1484 = vunpack.c.0.s8 %v1483
        %v1485 = vlaneseq
        %v1486 = vshrl.u32 %v1485, 7
        %v1487 = vsub.s32 %v1484, %v1486
        %v1488 = vrot.slane %v1474, %v1487
        %v1489 = vcombine.high %v1481, %v1481
        %v1490 = vcombine.high %v1488, %v1488
        %v1492 = vunpack.c.l.s4 1966171168
        %v1493 = vunpack.c.0.s8 %v1492
        %v1494 = vlaneseq
        %v1495 = vshrl.u32 %v1494, 7
        %v1496 = vsub.s32 %v1493, %v1495
        %v1497 = vrot.slane %v475, %v1496
        %v1498 = vcombine.high %v1497, %v1497
        %v1500 = vunpack.c.l.s4 1966171168
        %v1501 = vunpack.c.0.s8 %v1500
        %v1502 = vlaneseq
        %v1503 = vshrl.u32 %v1502, 7
        %v1504 = vsub.s32 %v1501, %v1503
        %v1505 = vrot.slane %v1497, %v1504
        %v1507 = vunpack.c.l.s4 1966171168
        %v1508 = vunpack.c.0.s8 %v1507
        %v1509 = vlaneseq
        %v1510 = vshrl.u32 %v1509, 7
        %v1511 = vsub.s32 %v1508, %v1510
        %v1512 = vrot.slane %v1498, %v1511
        %v1513 = vcombine.high %v1505, %v1505
        %v1514 = vcombine.high %v1512, %v1512
        %v1516 = vunpack.c.l.s4 1966171168
        %v1517 = vunpack.c.0.s8 %v1516
        %v1518 = vlaneseq
        %v1519 = vshrl.u32 %v1518, 7
        %v1520 = vsub.s32 %v1517, %v1519
        %v1521 = vrot.slane %v476, %v1520
        %v1523 = vunpack.c.l.s4 1966171168
        %v1524 = vunpack.c.0.s8 %v1523
        %v1525 = vlaneseq
        %v1526 = vshrl.u32 %v1525, 7
        %v1527 = vsub.s32 %v1524, %v1526
        %v1528 = vrot.slane %v1521, %v1527
        %v1530 = vunpack.c.l.s4 1966171168
        %v1531 = vunpack.c.0.s8 %v1530
        %v1532 = vlaneseq
        %v1533 = vshrl.u32 %v1532, 7
        %v1534 = vsub.s32 %v1531, %v1533
        %v1535 = vrot.slane %v477, %v1534
        %v1536 = vcombine.high %v1535, %v1535
        %v1538 = vunpack.c.l.s4 1966171168
        %v1539 = vunpack.c.0.s8 %v1538
        %v1540 = vlaneseq
        %v1541 = vshrl.u32 %v1540, 7
        %v1542 = vsub.s32 %v1539, %v1541
        %v1543 = vrot.slane %v1535, %v1542
        %v1545 = vunpack.c.l.s4 1966171168
        %v1546 = vunpack.c.0.s8 %v1545
        %v1547 = vlaneseq
        %v1548 = vshrl.u32 %v1547, 7
        %v1549 = vsub.s32 %v1546, %v1548
        %v1550 = vrot.slane %v1536, %v1549
        %v1551 = vcombine.high %v1543, %v1543
        %v1552 = vcombine.high %v1550, %v1550
        %v1554 = vunpack.c.l.s4 1966171168
        %v1555 = vunpack.c.0.s8 %v1554
        %v1556 = vlaneseq
        %v1557 = vshrl.u32 %v1556, 7
        %v1558 = vsub.s32 %v1555, %v1557
        %v1559 = vrot.slane %v478, %v1558
        %v1560 = vcombine.high %v1559, %v1559
        %v1562 = vunpack.c.l.s4 1966171168
        %v1563 = vunpack.c.0.s8 %v1562
        %v1564 = vlaneseq
        %v1565 = vshrl.u32 %v1564, 7
        %v1566 = vsub.s32 %v1563, %v1565
        %v1567 = vrot.slane %v1559, %v1566
        %v1569 = vunpack.c.l.s4 1966171168
        %v1570 = vunpack.c.0.s8 %v1569
        %v1571 = vlaneseq
        %v1572 = vshrl.u32 %v1571, 7
        %v1573 = vsub.s32 %v1570, %v1572
        %v1574 = vrot.slane %v1560, %v1573
        %v1575 = vcombine.high %v1567, %v1567
        %v1576 = vcombine.high %v1574, %v1574
        %v1578 = vunpack.c.l.s4 1966171168
        %v1579 = vunpack.c.0.s8 %v1578
        %v1580 = vlaneseq
        %v1581 = vshrl.u32 %v1580, 7
        %v1582 = vsub.s32 %v1579, %v1581
        %v1583 = vrot.slane %v479, %v1582
        %v1585 = vunpack.c.l.s4 1966171168
        %v1586 = vunpack.c.0.s8 %v1585
        %v1587 = vlaneseq
        %v1588 = vshrl.u32 %v1587, 7
        %v1589 = vsub.s32 %v1586, %v1588
        %v1590 = vrot.slane %v1583, %v1589
        %v1592 = vunpack.c.l.s4 1966171168
        %v1593 = vunpack.c.0.s8 %v1592
        %v1594 = vlaneseq
        %v1595 = vshrl.u32 %v1594, 7
        %v1596 = vsub.s32 %v1593, %v1595
        %v1597 = vrot.slane %v480, %v1596
        %v1598 = vcombine.high %v1597, %v1597
        %v1600 = vunpack.c.l.s4 1966171168
        %v1601 = vunpack.c.0.s8 %v1600
        %v1602 = vlaneseq
        %v1603 = vshrl.u32 %v1602, 7
        %v1604 = vsub.s32 %v1601, %v1603
        %v1605 = vrot.slane %v1597, %v1604
        %v1607 = vunpack.c.l.s4 1966171168
        %v1608 = vunpack.c.0.s8 %v1607
        %v1609 = vlaneseq
        %v1610 = vshrl.u32 %v1609, 7
        %v1611 = vsub.s32 %v1608, %v1610
        %v1612 = vrot.slane %v1598, %v1611
        %v1613 = vcombine.high %v1605, %v1605
        %v1614 = vcombine.high %v1612, %v1612
        %v1616 = vunpack.c.l.s4 1966171168
        %v1617 = vunpack.c.0.s8 %v1616
        %v1618 = vlaneseq
        %v1619 = vshrl.u32 %v1618, 7
        %v1620 = vsub.s32 %v1617, %v1619
        %v1621 = vrot.slane %v481, %v1620
        %v1622 = vcombine.high %v1621, %v1621
        %v1624 = vunpack.c.l.s4 1966171168
        %v1625 = vunpack.c.0.s8 %v1624
        %v1626 = vlaneseq
        %v1627 = vshrl.u32 %v1626, 7
        %v1628 = vsub.s32 %v1625, %v1627
        %v1629 = vrot.slane %v1621, %v1628
        %v1631 = vunpack.c.l.s4 1966171168
        %v1632 = vunpack.c.0.s8 %v1631
        %v1633 = vlaneseq
        %v1634 = vshrl.u32 %v1633, 7
        %v1635 = vsub.s32 %v1632, %v1634
        %v1636 = vrot.slane %v1622, %v1635
        %v1637 = vcombine.high %v1629, %v1629
        %v1638 = vcombine.high %v1636, %v1636
        %v1640 = vunpack.c.l.s4 1966171168
        %v1641 = vunpack.c.0.s8 %v1640
        %v1642 = vlaneseq
        %v1643 = vshrl.u32 %v1642, 7
        %v1644 = vsub.s32 %v1641, %v1643
        %v1645 = vrot.slane %v482, %v1644
        %v1647 = vunpack.c.l.s4 1966171168
        %v1648 = vunpack.c.0.s8 %v1647
        %v1649 = vlaneseq
        %v1650 = vshrl.u32 %v1649, 7
        %v1651 = vsub.s32 %v1648, %v1650
        %v1652 = vrot.slane %v1645, %v1651
        %v1653 = vld [vmem:[%s1] sm:$0x3]
        %v1654 = vcombine.low %v551, %v558
        %v1655 = vcombine.low %v559, %v560
        %v1656 = vcombine.low %v575, %v582
        %v1657 = vcombine.low %v583, %v584
        %v1659 = vunpack.c.l.s4 1966171168
        %v1660 = vunpack.c.0.s8 %v1659
        %v1661 = vlaneseq
        %v1662 = vshrl.u32 %v1661, 7
        %v1663 = vsub.s32 %v1660, %v1662
        %v1664 = vrot.slane %v1654, %v1663
        %v1666 = vunpack.c.l.s4 1966171168
        %v1667 = vunpack.c.0.s8 %v1666
        %v1668 = vlaneseq
        %v1669 = vshrl.u32 %v1668, 7
        %v1670 = vsub.s32 %v1667, %v1669
        %v1671 = vrot.slane %v1655, %v1670
        %v1673 = vunpack.c.l.s4 1966171168
        %v1674 = vunpack.c.0.s8 %v1673
        %v1675 = vlaneseq
        %v1676 = vshrl.u32 %v1675, 7
        %v1677 = vsub.s32 %v1674, %v1676
        %v1678 = vrot.slane %v1656, %v1677
        %v1680 = vunpack.c.l.s4 1966171168
        %v1681 = vunpack.c.0.s8 %v1680
        %v1682 = vlaneseq
        %v1683 = vshrl.u32 %v1682, 7
        %v1684 = vsub.s32 %v1681, %v1683
        %v1685 = vrot.slane %v1657, %v1684
        %v1686 = vcombine.low %v1664, %v1671
        %v1687 = vcombine.low %v1678, %v1685
        %v1689 = vunpack.c.l.s4 1966171168
        %v1690 = vunpack.c.0.s8 %v1689
        %v1691 = vlaneseq
        %v1692 = vshrl.u32 %v1691, 7
        %v1693 = vsub.s32 %v1690, %v1692
        %v1694 = vrot.slane %v1686, %v1693
        %v1696 = vunpack.c.l.s4 1966171168
        %v1697 = vunpack.c.0.s8 %v1696
        %v1698 = vlaneseq
        %v1699 = vshrl.u32 %v1698, 7
        %v1700 = vsub.s32 %v1697, %v1699
        %v1701 = vrot.slane %v1687, %v1700
        %v1702 = vcombine.low %v1694, %v1701
        %v1703 = vcombine.low %v598, %v613
        %v1704 = vcombine.low %v620, %v621
        %v1705 = vcombine.low %v622, %v637
        %v1706 = vcombine.low %v644, %v645
        %v1708 = vunpack.c.l.s4 1966171168
        %v1709 = vunpack.c.0.s8 %v1708
        %v1710 = vlaneseq
        %v1711 = vshrl.u32 %v1710, 7
        %v1712 = vsub.s32 %v1709, %v1711
        %v1713 = vrot.slane %v1703, %v1712
        %v1715 = vunpack.c.l.s4 1966171168
        %v1716 = vunpack.c.0.s8 %v1715
        %v1717 = vlaneseq
        %v1718 = vshrl.u32 %v1717, 7
        %v1719 = vsub.s32 %v1716, %v1718
        %v1720 = vrot.slane %v1704, %v1719
        %v1722 = vunpack.c.l.s4 1966171168
        %v1723 = vunpack.c.0.s8 %v1722
        %v1724 = vlaneseq
        %v1725 = vshrl.u32 %v1724, 7
        %v1726 = vsub.s32 %v1723, %v1725
        %v1727 = vrot.slane %v1705, %v1726
        %v1729 = vunpack.c.l.s4 1966171168
        %v1730 = vunpack.c.0.s8 %v1729
        %v1731 = vlaneseq
        %v1732 = vshrl.u32 %v1731, 7
        %v1733 = vsub.s32 %v1730, %v1732
        %v1734 = vrot.slane %v1706, %v1733
        %v1735 = vcombine.low %v1713, %v1720
        %v1736 = vcombine.low %v1727, %v1734
        %v1738 = vunpack.c.l.s4 1966171168
        %v1739 = vunpack.c.0.s8 %v1738
        %v1740 = vlaneseq
        %v1741 = vshrl.u32 %v1740, 7
        %v1742 = vsub.s32 %v1739, %v1741
        %v1743 = vrot.slane %v1735, %v1742
        %v1745 = vunpack.c.l.s4 1966171168
        %v1746 = vunpack.c.0.s8 %v1745
        %v1747 = vlaneseq
        %v1748 = vshrl.u32 %v1747, 7
        %v1749 = vsub.s32 %v1746, %v1748
        %v1750 = vrot.slane %v1736, %v1749
        %v1751 = vcombine.low %v1743, %v1750
        %v1752 = vcombine.low %v646, %v660
        %v1753 = vcombine.low %v675, %v682
        %v1754 = vcombine.low %v683, %v684
        %v1755 = vcombine.low %v699, %v706
        %v1757 = vunpack.c.l.s4 1966171168
        %v1758 = vunpack.c.0.s8 %v1757
        %v1759 = vlaneseq
        %v1760 = vshrl.u32 %v1759, 7
        %v1761 = vsub.s32 %v1758, %v1760
        %v1762 = vrot.slane %v1752, %v1761
        %v1764 = vunpack.c.l.s4 1966171168
        %v1765 = vunpack.c.0.s8 %v1764
        %v1766 = vlaneseq
        %v1767 = vshrl.u32 %v1766, 7
        %v1768 = vsub.s32 %v1765, %v1767
        %v1769 = vrot.slane %v1753, %v1768
        %v1771 = vunpack.c.l.s4 1966171168
        %v1772 = vunpack.c.0.s8 %v1771
        %v1773 = vlaneseq
        %v1774 = vshrl.u32 %v1773, 7
        %v1775 = vsub.s32 %v1772, %v1774
        %v1776 = vrot.slane %v1754, %v1775
        %v1778 = vunpack.c.l.s4 1966171168
        %v1779 = vunpack.c.0.s8 %v1778
        %v1780 = vlaneseq
        %v1781 = vshrl.u32 %v1780, 7
        %v1782 = vsub.s32 %v1779, %v1781
        %v1783 = vrot.slane %v1755, %v1782
        %v1784 = vcombine.low %v1762, %v1769
        %v1785 = vcombine.low %v1776, %v1783
        %v1787 = vunpack.c.l.s4 1966171168
        %v1788 = vunpack.c.0.s8 %v1787
        %v1789 = vlaneseq
        %v1790 = vshrl.u32 %v1789, 7
        %v1791 = vsub.s32 %v1788, %v1790
        %v1792 = vrot.slane %v1784, %v1791
        %v1794 = vunpack.c.l.s4 1966171168
        %v1795 = vunpack.c.0.s8 %v1794
        %v1796 = vlaneseq
        %v1797 = vshrl.u32 %v1796, 7
        %v1798 = vsub.s32 %v1795, %v1797
        %v1799 = vrot.slane %v1785, %v1798
        %v1800 = vcombine.low %v1792, %v1799
        %v1801 = vcombine.low %v707, %v708
        %v1802 = vcombine.low %v722, %v737
        %v1803 = vcombine.low %v744, %v745
        %v1804 = vcombine.low %v746, %v761
        %v1806 = vunpack.c.l.s4 1966171168
        %v1807 = vunpack.c.0.s8 %v1806
        %v1808 = vlaneseq
        %v1809 = vshrl.u32 %v1808, 7
        %v1810 = vsub.s32 %v1807, %v1809
        %v1811 = vrot.slane %v1801, %v1810
        %v1813 = vunpack.c.l.s4 1966171168
        %v1814 = vunpack.c.0.s8 %v1813
        %v1815 = vlaneseq
        %v1816 = vshrl.u32 %v1815, 7
        %v1817 = vsub.s32 %v1814, %v1816
        %v1818 = vrot.slane %v1802, %v1817
        %v1820 = vunpack.c.l.s4 1966171168
        %v1821 = vunpack.c.0.s8 %v1820
        %v1822 = vlaneseq
        %v1823 = vshrl.u32 %v1822, 7
        %v1824 = vsub.s32 %v1821, %v1823
        %v1825 = vrot.slane %v1803, %v1824
        %v1827 = vunpack.c.l.s4 1966171168
        %v1828 = vunpack.c.0.s8 %v1827
        %v1829 = vlaneseq
        %v1830 = vshrl.u32 %v1829, 7
        %v1831 = vsub.s32 %v1828, %v1830
        %v1832 = vrot.slane %v1804, %v1831
        %v1833 = vcombine.low %v1811, %v1818
        %v1834 = vcombine.low %v1825, %v1832
        %v1836 = vunpack.c.l.s4 1966171168
        %v1837 = vunpack.c.0.s8 %v1836
        %v1838 = vlaneseq
        %v1839 = vshrl.u32 %v1838, 7
        %v1840 = vsub.s32 %v1837, %v1839
        %v1841 = vrot.slane %v1833, %v1840
        %v1843 = vunpack.c.l.s4 1966171168
        %v1844 = vunpack.c.0.s8 %v1843
        %v1845 = vlaneseq
        %v1846 = vshrl.u32 %v1845, 7
        %v1847 = vsub.s32 %v1844, %v1846
        %v1848 = vrot.slane %v1834, %v1847
        %v1849 = vcombine.low %v1841, %v1848
        %v1850 = vcombine.low %v768, %v769
        %v1851 = vcombine.low %v770, %v784
        %v1852 = vcombine.low %v799, %v806
        %v1853 = vcombine.low %v807, %v808
        %v1855 = vunpack.c.l.s4 1966171168
        %v1856 = vunpack.c.0.s8 %v1855
        %v1857 = vlaneseq
        %v1858 = vshrl.u32 %v1857, 7
        %v1859 = vsub.s32 %v1856, %v1858
        %v1860 = vrot.slane %v1850, %v1859
        %v1862 = vunpack.c.l.s4 1966171168
        %v1863 = vunpack.c.0.s8 %v1862
        %v1864 = vlaneseq
        %v1865 = vshrl.u32 %v1864, 7
        %v1866 = vsub.s32 %v1863, %v1865
        %v1867 = vrot.slane %v1851, %v1866
        %v1869 = vunpack.c.l.s4 1966171168
        %v1870 = vunpack.c.0.s8 %v1869
        %v1871 = vlaneseq
        %v1872 = vshrl.u32 %v1871, 7
        %v1873 = vsub.s32 %v1870, %v1872
        %v1874 = vrot.slane %v1852, %v1873
        %v1876 = vunpack.c.l.s4 1966171168
        %v1877 = vunpack.c.0.s8 %v1876
        %v1878 = vlaneseq
        %v1879 = vshrl.u32 %v1878, 7
        %v1880 = vsub.s32 %v1877, %v1879
        %v1881 = vrot.slane %v1853, %v1880
        %v1882 = vcombine.low %v1860, %v1867
        %v1883 = vcombine.low %v1874, %v1881
        %v1885 = vunpack.c.l.s4 1966171168
        %v1886 = vunpack.c.0.s8 %v1885
        %v1887 = vlaneseq
        %v1888 = vshrl.u32 %v1887, 7
        %v1889 = vsub.s32 %v1886, %v1888
        %v1890 = vrot.slane %v1882, %v1889
        %v1892 = vunpack.c.l.s4 1966171168
        %v1893 = vunpack.c.0.s8 %v1892
        %v1894 = vlaneseq
        %v1895 = vshrl.u32 %v1894, 7
        %v1896 = vsub.s32 %v1893, %v1895
        %v1897 = vrot.slane %v1883, %v1896
        %v1898 = vcombine.low %v1890, %v1897
        %v1899 = vcombine.low %v823, %v830
        %v1900 = vcombine.low %v831, %v832
        %v1901 = vcombine.low %v846, %v861
        %v1902 = vcombine.low %v868, %v869
        %v1904 = vunpack.c.l.s4 1966171168
        %v1905 = vunpack.c.0.s8 %v1904
        %v1906 = vlaneseq
        %v1907 = vshrl.u32 %v1906, 7
        %v1908 = vsub.s32 %v1905, %v1907
        %v1909 = vrot.slane %v1899, %v1908
        %v1911 = vunpack.c.l.s4 1966171168
        %v1912 = vunpack.c.0.s8 %v1911
        %v1913 = vlaneseq
        %v1914 = vshrl.u32 %v1913, 7
        %v1915 = vsub.s32 %v1912, %v1914
        %v1916 = vrot.slane %v1900, %v1915
        %v1918 = vunpack.c.l.s4 1966171168
        %v1919 = vunpack.c.0.s8 %v1918
        %v1920 = vlaneseq
        %v1921 = vshrl.u32 %v1920, 7
        %v1922 = vsub.s32 %v1919, %v1921
        %v1923 = vrot.slane %v1901, %v1922
        %v1925 = vunpack.c.l.s4 1966171168
        %v1926 = vunpack.c.0.s8 %v1925
        %v1927 = vlaneseq
        %v1928 = vshrl.u32 %v1927, 7
        %v1929 = vsub.s32 %v1926, %v1928
        %v1930 = vrot.slane %v1902, %v1929
        %v1931 = vcombine.low %v1909, %v1916
        %v1932 = vcombine.low %v1923, %v1930
        %v1934 = vunpack.c.l.s4 1966171168
        %v1935 = vunpack.c.0.s8 %v1934
        %v1936 = vlaneseq
        %v1937 = vshrl.u32 %v1936, 7
        %v1938 = vsub.s32 %v1935, %v1937
        %v1939 = vrot.slane %v1931, %v1938
        %v1941 = vunpack.c.l.s4 1966171168
        %v1942 = vunpack.c.0.s8 %v1941
        %v1943 = vlaneseq
        %v1944 = vshrl.u32 %v1943, 7
        %v1945 = vsub.s32 %v1942, %v1944
        %v1946 = vrot.slane %v1932, %v1945
        %v1947 = vcombine.low %v1939, %v1946
        %v1948 = vcombine.low %v870, %v885
        %v1949 = vcombine.low %v892, %v893
        %v1950 = vcombine.low %v894, %v908
        %v1951 = vcombine.low %v923, %v930
        %v1953 = vunpack.c.l.s4 1966171168
        %v1954 = vunpack.c.0.s8 %v1953
        %v1955 = vlaneseq
        %v1956 = vshrl.u32 %v1955, 7
        %v1957 = vsub.s32 %v1954, %v1956
        %v1958 = vrot.slane %v1948, %v1957
        %v1960 = vunpack.c.l.s4 1966171168
        %v1961 = vunpack.c.0.s8 %v1960
        %v1962 = vlaneseq
        %v1963 = vshrl.u32 %v1962, 7
        %v1964 = vsub.s32 %v1961, %v1963
        %v1965 = vrot.slane %v1949, %v1964
        %v1967 = vunpack.c.l.s4 1966171168
        %v1968 = vunpack.c.0.s8 %v1967
        %v1969 = vlaneseq
        %v1970 = vshrl.u32 %v1969, 7
        %v1971 = vsub.s32 %v1968, %v1970
        %v1972 = vrot.slane %v1950, %v1971
        %v1974 = vunpack.c.l.s4 1966171168
        %v1975 = vunpack.c.0.s8 %v1974
        %v1976 = vlaneseq
        %v1977 = vshrl.u32 %v1976, 7
        %v1978 = vsub.s32 %v1975, %v1977
        %v1979 = vrot.slane %v1951, %v1978
        %v1980 = vcombine.low %v1958, %v1965
        %v1981 = vcombine.low %v1972, %v1979
        %v1983 = vunpack.c.l.s4 1966171168
        %v1984 = vunpack.c.0.s8 %v1983
        %v1985 = vlaneseq
        %v1986 = vshrl.u32 %v1985, 7
        %v1987 = vsub.s32 %v1984, %v1986
        %v1988 = vrot.slane %v1980, %v1987
        %v1990 = vunpack.c.l.s4 1966171168
        %v1991 = vunpack.c.0.s8 %v1990
        %v1992 = vlaneseq
        %v1993 = vshrl.u32 %v1992, 7
        %v1994 = vsub.s32 %v1991, %v1993
        %v1995 = vrot.slane %v1981, %v1994
        %v1996 = vcombine.low %v1988, %v1995
        %v1997 = vcombine.low %v931, %v932
        %v1998 = vcombine.low %v947, %v954
        %v1999 = vcombine.low %v955, %v956
        %v2000 = vcombine.low %v970, %v985
        %v2002 = vunpack.c.l.s4 1966171168
        %v2003 = vunpack.c.0.s8 %v2002
        %v2004 = vlaneseq
        %v2005 = vshrl.u32 %v2004, 7
        %v2006 = vsub.s32 %v2003, %v2005
        %v2007 = vrot.slane %v1997, %v2006
        %v2009 = vunpack.c.l.s4 1966171168
        %v2010 = vunpack.c.0.s8 %v2009
        %v2011 = vlaneseq
        %v2012 = vshrl.u32 %v2011, 7
        %v2013 = vsub.s32 %v2010, %v2012
        %v2014 = vrot.slane %v1998, %v2013
        %v2016 = vunpack.c.l.s4 1966171168
        %v2017 = vunpack.c.0.s8 %v2016
        %v2018 = vlaneseq
        %v2019 = vshrl.u32 %v2018, 7
        %v2020 = vsub.s32 %v2017, %v2019
        %v2021 = vrot.slane %v1999, %v2020
        %v2023 = vunpack.c.l.s4 1966171168
        %v2024 = vunpack.c.0.s8 %v2023
        %v2025 = vlaneseq
        %v2026 = vshrl.u32 %v2025, 7
        %v2027 = vsub.s32 %v2024, %v2026
        %v2028 = vrot.slane %v2000, %v2027
        %v2029 = vcombine.low %v2007, %v2014
        %v2030 = vcombine.low %v2021, %v2028
        %v2032 = vunpack.c.l.s4 1966171168
        %v2033 = vunpack.c.0.s8 %v2032
        %v2034 = vlaneseq
        %v2035 = vshrl.u32 %v2034, 7
        %v2036 = vsub.s32 %v2033, %v2035
        %v2037 = vrot.slane %v2029, %v2036
        %v2039 = vunpack.c.l.s4 1966171168
        %v2040 = vunpack.c.0.s8 %v2039
        %v2041 = vlaneseq
        %v2042 = vshrl.u32 %v2041, 7
        %v2043 = vsub.s32 %v2040, %v2042
        %v2044 = vrot.slane %v2030, %v2043
        %v2045 = vcombine.low %v2037, %v2044
        %v2046 = vcombine.low %v992, %v993
        %v2047 = vcombine.low %v994, %v1009
        %v2048 = vcombine.low %v1016, %v1017
        %v2049 = vcombine.low %v1018, %v1032
        %v2051 = vunpack.c.l.s4 1966171168
        %v2052 = vunpack.c.0.s8 %v2051
        %v2053 = vlaneseq
        %v2054 = vshrl.u32 %v2053, 7
        %v2055 = vsub.s32 %v2052, %v2054
        %v2056 = vrot.slane %v2046, %v2055
        %v2058 = vunpack.c.l.s4 1966171168
        %v2059 = vunpack.c.0.s8 %v2058
        %v2060 = vlaneseq
        %v2061 = vshrl.u32 %v2060, 7
        %v2062 = vsub.s32 %v2059, %v2061
        %v2063 = vrot.slane %v2047, %v2062
        %v2065 = vunpack.c.l.s4 1966171168
        %v2066 = vunpack.c.0.s8 %v2065
        %v2067 = vlaneseq
        %v2068 = vshrl.u32 %v2067, 7
        %v2069 = vsub.s32 %v2066, %v2068
        %v2070 = vrot.slane %v2048, %v2069
        %v2072 = vunpack.c.l.s4 1966171168
        %v2073 = vunpack.c.0.s8 %v2072
        %v2074 = vlaneseq
        %v2075 = vshrl.u32 %v2074, 7
        %v2076 = vsub.s32 %v2073, %v2075
        %v2077 = vrot.slane %v2049, %v2076
        %v2078 = vcombine.low %v2056, %v2063
        %v2079 = vcombine.low %v2070, %v2077
        %v2081 = vunpack.c.l.s4 1966171168
        %v2082 = vunpack.c.0.s8 %v2081
        %v2083 = vlaneseq
        %v2084 = vshrl.u32 %v2083, 7
        %v2085 = vsub.s32 %v2082, %v2084
        %v2086 = vrot.slane %v2078, %v2085
        %v2088 = vunpack.c.l.s4 1966171168
        %v2089 = vunpack.c.0.s8 %v2088
        %v2090 = vlaneseq
        %v2091 = vshrl.u32 %v2090, 7
        %v2092 = vsub.s32 %v2089, %v2091
        %v2093 = vrot.slane %v2079, %v2092
        %v2094 = vcombine.low %v2086, %v2093
        %v2095 = vcombine.low %v1047, %v1054
        %v2096 = vcombine.low %v1055, %v1056
        %v2097 = vcombine.low %v1071, %v1078
        %v2098 = vcombine.low %v1079, %v1080
        %v2100 = vunpack.c.l.s4 1966171168
        %v2101 = vunpack.c.0.s8 %v2100
        %v2102 = vlaneseq
        %v2103 = vshrl.u32 %v2102, 7
        %v2104 = vsub.s32 %v2101, %v2103
        %v2105 = vrot.slane %v2095, %v2104
        %v2107 = vunpack.c.l.s4 1966171168
        %v2108 = vunpack.c.0.s8 %v2107
        %v2109 = vlaneseq
        %v2110 = vshrl.u32 %v2109, 7
        %v2111 = vsub.s32 %v2108, %v2110
        %v2112 = vrot.slane %v2096, %v2111
        %v2114 = vunpack.c.l.s4 1966171168
        %v2115 = vunpack.c.0.s8 %v2114
        %v2116 = vlaneseq
        %v2117 = vshrl.u32 %v2116, 7
        %v2118 = vsub.s32 %v2115, %v2117
        %v2119 = vrot.slane %v2097, %v2118
        %v2121 = vunpack.c.l.s4 1966171168
        %v2122 = vunpack.c.0.s8 %v2121
        %v2123 = vlaneseq
        %v2124 = vshrl.u32 %v2123, 7
        %v2125 = vsub.s32 %v2122, %v2124
        %v2126 = vrot.slane %v2098, %v2125
        %v2127 = vcombine.low %v2105, %v2112
        %v2128 = vcombine.low %v2119, %v2126
        %v2130 = vunpack.c.l.s4 1966171168
        %v2131 = vunpack.c.0.s8 %v2130
        %v2132 = vlaneseq
        %v2133 = vshrl.u32 %v2132, 7
        %v2134 = vsub.s32 %v2131, %v2133
        %v2135 = vrot.slane %v2127, %v2134
        %v2137 = vunpack.c.l.s4 1966171168
        %v2138 = vunpack.c.0.s8 %v2137
        %v2139 = vlaneseq
        %v2140 = vshrl.u32 %v2139, 7
        %v2141 = vsub.s32 %v2138, %v2140
        %v2142 = vrot.slane %v2128, %v2141
        %v2143 = vcombine.low %v2135, %v2142
        %v2144 = vcombine.low %v1094, %v1109
        %v2145 = vcombine.low %v1116, %v1117
        %v2146 = vcombine.low %v1118, %v1133
        %v2147 = vcombine.low %v1140, %v1141
        %v2149 = vunpack.c.l.s4 1966171168
        %v2150 = vunpack.c.0.s8 %v2149
        %v2151 = vlaneseq
        %v2152 = vshrl.u32 %v2151, 7
        %v2153 = vsub.s32 %v2150, %v2152
        %v2154 = vrot.slane %v2144, %v2153
        %v2156 = vunpack.c.l.s4 1966171168
        %v2157 = vunpack.c.0.s8 %v2156
        %v2158 = vlaneseq
        %v2159 = vshrl.u32 %v2158, 7
        %v2160 = vsub.s32 %v2157, %v2159
        %v2161 = vrot.slane %v2145, %v2160
        %v2163 = vunpack.c.l.s4 1966171168
        %v2164 = vunpack.c.0.s8 %v2163
        %v2165 = vlaneseq
        %v2166 = vshrl.u32 %v2165, 7
        %v2167 = vsub.s32 %v2164, %v2166
        %v2168 = vrot.slane %v2146, %v2167
        %v2170 = vunpack.c.l.s4 1966171168
        %v2171 = vunpack.c.0.s8 %v2170
        %v2172 = vlaneseq
        %v2173 = vshrl.u32 %v2172, 7
        %v2174 = vsub.s32 %v2171, %v2173
        %v2175 = vrot.slane %v2147, %v2174
        %v2176 = vcombine.low %v2154, %v2161
        %v2177 = vcombine.low %v2168, %v2175
        %v2179 = vunpack.c.l.s4 1966171168
        %v2180 = vunpack.c.0.s8 %v2179
        %v2181 = vlaneseq
        %v2182 = vshrl.u32 %v2181, 7
        %v2183 = vsub.s32 %v2180, %v2182
        %v2184 = vrot.slane %v2176, %v2183
        %v2186 = vunpack.c.l.s4 1966171168
        %v2187 = vunpack.c.0.s8 %v2186
        %v2188 = vlaneseq
        %v2189 = vshrl.u32 %v2188, 7
        %v2190 = vsub.s32 %v2187, %v2189
        %v2191 = vrot.slane %v2177, %v2190
        %v2192 = vcombine.low %v2184, %v2191
        %v2193 = vcombine.low %v1142, %v1156
        %v2194 = vcombine.low %v1171, %v1178
        %v2195 = vcombine.low %v1179, %v1180
        %v2196 = vcombine.low %v1195, %v1202
        %v2198 = vunpack.c.l.s4 1966171168
        %v2199 = vunpack.c.0.s8 %v2198
        %v2200 = vlaneseq
        %v2201 = vshrl.u32 %v2200, 7
        %v2202 = vsub.s32 %v2199, %v2201
        %v2203 = vrot.slane %v2193, %v2202
        %v2205 = vunpack.c.l.s4 1966171168
        %v2206 = vunpack.c.0.s8 %v2205
        %v2207 = vlaneseq
        %v2208 = vshrl.u32 %v2207, 7
        %v2209 = vsub.s32 %v2206, %v2208
        %v2210 = vrot.slane %v2194, %v2209
        %v2212 = vunpack.c.l.s4 1966171168
        %v2213 = vunpack.c.0.s8 %v2212
        %v2214 = vlaneseq
        %v2215 = vshrl.u32 %v2214, 7
        %v2216 = vsub.s32 %v2213, %v2215
        %v2217 = vrot.slane %v2195, %v2216
        %v2219 = vunpack.c.l.s4 1966171168
        %v2220 = vunpack.c.0.s8 %v2219
        %v2221 = vlaneseq
        %v2222 = vshrl.u32 %v2221, 7
        %v2223 = vsub.s32 %v2220, %v2222
        %v2224 = vrot.slane %v2196, %v2223
        %v2225 = vcombine.low %v2203, %v2210
        %v2226 = vcombine.low %v2217, %v2224
        %v2228 = vunpack.c.l.s4 1966171168
        %v2229 = vunpack.c.0.s8 %v2228
        %v2230 = vlaneseq
        %v2231 = vshrl.u32 %v2230, 7
        %v2232 = vsub.s32 %v2229, %v2231
        %v2233 = vrot.slane %v2225, %v2232
        %v2235 = vunpack.c.l.s4 1966171168
        %v2236 = vunpack.c.0.s8 %v2235
        %v2237 = vlaneseq
        %v2238 = vshrl.u32 %v2237, 7
        %v2239 = vsub.s32 %v2236, %v2238
        %v2240 = vrot.slane %v2226, %v2239
        %v2241 = vcombine.low %v2233, %v2240
        %v2242 = vcombine.low %v1203, %v1204
        %v2243 = vcombine.low %v1218, %v1233
        %v2244 = vcombine.low %v1240, %v1241
        %v2245 = vcombine.low %v1242, %v1257
        %v2247 = vunpack.c.l.s4 1966171168
        %v2248 = vunpack.c.0.s8 %v2247
        %v2249 = vlaneseq
        %v2250 = vshrl.u32 %v2249, 7
        %v2251 = vsub.s32 %v2248, %v2250
        %v2252 = vrot.slane %v2242, %v2251
        %v2254 = vunpack.c.l.s4 1966171168
        %v2255 = vunpack.c.0.s8 %v2254
        %v2256 = vlaneseq
        %v2257 = vshrl.u32 %v2256, 7
        %v2258 = vsub.s32 %v2255, %v2257
        %v2259 = vrot.slane %v2243, %v2258
        %v2261 = vunpack.c.l.s4 1966171168
        %v2262 = vunpack.c.0.s8 %v2261
        %v2263 = vlaneseq
        %v2264 = vshrl.u32 %v2263, 7
        %v2265 = vsub.s32 %v2262, %v2264
        %v2266 = vrot.slane %v2244, %v2265
        %v2268 = vunpack.c.l.s4 1966171168
        %v2269 = vunpack.c.0.s8 %v2268
        %v2270 = vlaneseq
        %v2271 = vshrl.u32 %v2270, 7
        %v2272 = vsub.s32 %v2269, %v2271
        %v2273 = vrot.slane %v2245, %v2272
        %v2274 = vcombine.low %v2252, %v2259
        %v2275 = vcombine.low %v2266, %v2273
        %v2277 = vunpack.c.l.s4 1966171168
        %v2278 = vunpack.c.0.s8 %v2277
        %v2279 = vlaneseq
        %v2280 = vshrl.u32 %v2279, 7
        %v2281 = vsub.s32 %v2278, %v2280
        %v2282 = vrot.slane %v2274, %v2281
        %v2284 = vunpack.c.l.s4 1966171168
        %v2285 = vunpack.c.0.s8 %v2284
        %v2286 = vlaneseq
        %v2287 = vshrl.u32 %v2286, 7
        %v2288 = vsub.s32 %v2285, %v2287
        %v2289 = vrot.slane %v2275, %v2288
        %v2290 = vcombine.low %v2282, %v2289
        %v2291 = vcombine.low %v1264, %v1265
        %v2292 = vcombine.low %v1266, %v1280
        %v2293 = vcombine.low %v1295, %v1302
        %v2294 = vcombine.low %v1303, %v1304
        %v2296 = vunpack.c.l.s4 1966171168
        %v2297 = vunpack.c.0.s8 %v2296
        %v2298 = vlaneseq
        %v2299 = vshrl.u32 %v2298, 7
        %v2300 = vsub.s32 %v2297, %v2299
        %v2301 = vrot.slane %v2291, %v2300
        %v2303 = vunpack.c.l.s4 1966171168
        %v2304 = vunpack.c.0.s8 %v2303
        %v2305 = vlaneseq
        %v2306 = vshrl.u32 %v2305, 7
        %v2307 = vsub.s32 %v2304, %v2306
        %v2308 = vrot.slane %v2292, %v2307
        %v2310 = vunpack.c.l.s4 1966171168
        %v2311 = vunpack.c.0.s8 %v2310
        %v2312 = vlaneseq
        %v2313 = vshrl.u32 %v2312, 7
        %v2314 = vsub.s32 %v2311, %v2313
        %v2315 = vrot.slane %v2293, %v2314
        %v2317 = vunpack.c.l.s4 1966171168
        %v2318 = vunpack.c.0.s8 %v2317
        %v2319 = vlaneseq
        %v2320 = vshrl.u32 %v2319, 7
        %v2321 = vsub.s32 %v2318, %v2320
        %v2322 = vrot.slane %v2294, %v2321
        %v2323 = vcombine.low %v2301, %v2308
        %v2324 = vcombine.low %v2315, %v2322
        %v2326 = vunpack.c.l.s4 1966171168
        %v2327 = vunpack.c.0.s8 %v2326
        %v2328 = vlaneseq
        %v2329 = vshrl.u32 %v2328, 7
        %v2330 = vsub.s32 %v2327, %v2329
        %v2331 = vrot.slane %v2323, %v2330
        %v2333 = vunpack.c.l.s4 1966171168
        %v2334 = vunpack.c.0.s8 %v2333
        %v2335 = vlaneseq
        %v2336 = vshrl.u32 %v2335, 7
        %v2337 = vsub.s32 %v2334, %v2336
        %v2338 = vrot.slane %v2324, %v2337
        %v2339 = vcombine.low %v2331, %v2338
        %v2340 = vcombine.low %v1319, %v1326
        %v2341 = vcombine.low %v1327, %v1328
        %v2342 = vcombine.low %v1342, %v1357
        %v2343 = vcombine.low %v1364, %v1365
        %v2345 = vunpack.c.l.s4 1966171168
        %v2346 = vunpack.c.0.s8 %v2345
        %v2347 = vlaneseq
        %v2348 = vshrl.u32 %v2347, 7
        %v2349 = vsub.s32 %v2346, %v2348
        %v2350 = vrot.slane %v2340, %v2349
        %v2352 = vunpack.c.l.s4 1966171168
        %v2353 = vunpack.c.0.s8 %v2352
        %v2354 = vlaneseq
        %v2355 = vshrl.u32 %v2354, 7
        %v2356 = vsub.s32 %v2353, %v2355
        %v2357 = vrot.slane %v2341, %v2356
        %v2359 = vunpack.c.l.s4 1966171168
        %v2360 = vunpack.c.0.s8 %v2359
        %v2361 = vlaneseq
        %v2362 = vshrl.u32 %v2361, 7
        %v2363 = vsub.s32 %v2360, %v2362
        %v2364 = vrot.slane %v2342, %v2363
        %v2366 = vunpack.c.l.s4 1966171168
        %v2367 = vunpack.c.0.s8 %v2366
        %v2368 = vlaneseq
        %v2369 = vshrl.u32 %v2368, 7
        %v2370 = vsub.s32 %v2367, %v2369
        %v2371 = vrot.slane %v2343, %v2370
        %v2372 = vcombine.low %v2350, %v2357
        %v2373 = vcombine.low %v2364, %v2371
        %v2375 = vunpack.c.l.s4 1966171168
        %v2376 = vunpack.c.0.s8 %v2375
        %v2377 = vlaneseq
        %v2378 = vshrl.u32 %v2377, 7
        %v2379 = vsub.s32 %v2376, %v2378
        %v2380 = vrot.slane %v2372, %v2379
        %v2382 = vunpack.c.l.s4 1966171168
        %v2383 = vunpack.c.0.s8 %v2382
        %v2384 = vlaneseq
        %v2385 = vshrl.u32 %v2384, 7
        %v2386 = vsub.s32 %v2383, %v2385
        %v2387 = vrot.slane %v2373, %v2386
        %v2388 = vcombine.low %v2380, %v2387
        %v2389 = vcombine.low %v1366, %v1381
        %v2390 = vcombine.low %v1388, %v1389
        %v2391 = vcombine.low %v1390, %v1404
        %v2392 = vcombine.low %v1419, %v1426
        %v2394 = vunpack.c.l.s4 1966171168
        %v2395 = vunpack.c.0.s8 %v2394
        %v2396 = vlaneseq
        %v2397 = vshrl.u32 %v2396, 7
        %v2398 = vsub.s32 %v2395, %v2397
        %v2399 = vrot.slane %v2389, %v2398
        %v2401 = vunpack.c.l.s4 1966171168
        %v2402 = vunpack.c.0.s8 %v2401
        %v2403 = vlaneseq
        %v2404 = vshrl.u32 %v2403, 7
        %v2405 = vsub.s32 %v2402, %v2404
        %v2406 = vrot.slane %v2390, %v2405
        %v2408 = vunpack.c.l.s4 1966171168
        %v2409 = vunpack.c.0.s8 %v2408
        %v2410 = vlaneseq
        %v2411 = vshrl.u32 %v2410, 7
        %v2412 = vsub.s32 %v2409, %v2411
        %v2413 = vrot.slane %v2391, %v2412
        %v2415 = vunpack.c.l.s4 1966171168
        %v2416 = vunpack.c.0.s8 %v2415
        %v2417 = vlaneseq
        %v2418 = vshrl.u32 %v2417, 7
        %v2419 = vsub.s32 %v2416, %v2418
        %v2420 = vrot.slane %v2392, %v2419
        %v2421 = vcombine.low %v2399, %v2406
        %v2422 = vcombine.low %v2413, %v2420
        %v2424 = vunpack.c.l.s4 1966171168
        %v2425 = vunpack.c.0.s8 %v2424
        %v2426 = vlaneseq
        %v2427 = vshrl.u32 %v2426, 7
        %v2428 = vsub.s32 %v2425, %v2427
        %v2429 = vrot.slane %v2421, %v2428
        %v2431 = vunpack.c.l.s4 1966171168
        %v2432 = vunpack.c.0.s8 %v2431
        %v2433 = vlaneseq
        %v2434 = vshrl.u32 %v2433, 7
        %v2435 = vsub.s32 %v2432, %v2434
        %v2436 = vrot.slane %v2422, %v2435
        %v2437 = vcombine.low %v2429, %v2436
        %v2438 = vcombine.low %v1427, %v1428
        %v2439 = vcombine.low %v1443, %v1450
        %v2440 = vcombine.low %v1451, %v1452
        %v2441 = vcombine.low %v1466, %v1481
        %v2443 = vunpack.c.l.s4 1966171168
        %v2444 = vunpack.c.0.s8 %v2443
        %v2445 = vlaneseq
        %v2446 = vshrl.u32 %v2445, 7
        %v2447 = vsub.s32 %v2444, %v2446
        %v2448 = vrot.slane %v2438, %v2447
        %v2450 = vunpack.c.l.s4 1966171168
        %v2451 = vunpack.c.0.s8 %v2450
        %v2452 = vlaneseq
        %v2453 = vshrl.u32 %v2452, 7
        %v2454 = vsub.s32 %v2451, %v2453
        %v2455 = vrot.slane %v2439, %v2454
        %v2457 = vunpack.c.l.s4 1966171168
        %v2458 = vunpack.c.0.s8 %v2457
        %v2459 = vlaneseq
        %v2460 = vshrl.u32 %v2459, 7
        %v2461 = vsub.s32 %v2458, %v2460
        %v2462 = vrot.slane %v2440, %v2461
        %v2464 = vunpack.c.l.s4 1966171168
        %v2465 = vunpack.c.0.s8 %v2464
        %v2466 = vlaneseq
        %v2467 = vshrl.u32 %v2466, 7
        %v2468 = vsub.s32 %v2465, %v2467
        %v2469 = vrot.slane %v2441, %v2468
        %v2470 = vcombine.low %v2448, %v2455
        %v2471 = vcombine.low %v2462, %v2469
        %v2473 = vunpack.c.l.s4 1966171168
        %v2474 = vunpack.c.0.s8 %v2473
        %v2475 = vlaneseq
        %v2476 = vshrl.u32 %v2475, 7
        %v2477 = vsub.s32 %v2474, %v2476
        %v2478 = vrot.slane %v2470, %v2477
        %v2480 = vunpack.c.l.s4 1966171168
        %v2481 = vunpack.c.0.s8 %v2480
        %v2482 = vlaneseq
        %v2483 = vshrl.u32 %v2482, 7
        %v2484 = vsub.s32 %v2481, %v2483
        %v2485 = vrot.slane %v2471, %v2484
        %v2486 = vcombine.low %v2478, %v2485
        %v2487 = vcombine.low %v1488, %v1489
        %v2488 = vcombine.low %v1490, %v1505
        %v2489 = vcombine.low %v1512, %v1513
        %v2490 = vcombine.low %v1514, %v1528
        %v2492 = vunpack.c.l.s4 1966171168
        %v2493 = vunpack.c.0.s8 %v2492
        %v2494 = vlaneseq
        %v2495 = vshrl.u32 %v2494, 7
        %v2496 = vsub.s32 %v2493, %v2495
        %v2497 = vrot.slane %v2487, %v2496
        %v2499 = vunpack.c.l.s4 1966171168
        %v2500 = vunpack.c.0.s8 %v2499
        %v2501 = vlaneseq
        %v2502 = vshrl.u32 %v2501, 7
        %v2503 = vsub.s32 %v2500, %v2502
        %v2504 = vrot.slane %v2488, %v2503
        %v2506 = vunpack.c.l.s4 1966171168
        %v2507 = vunpack.c.0.s8 %v2506
        %v2508 = vlaneseq
        %v2509 = vshrl.u32 %v2508, 7
        %v2510 = vsub.s32 %v2507, %v2509
        %v2511 = vrot.slane %v2489, %v2510
        %v2513 = vunpack.c.l.s4 1966171168
        %v2514 = vunpack.c.0.s8 %v2513
        %v2515 = vlaneseq
        %v2516 = vshrl.u32 %v2515, 7
        %v2517 = vsub.s32 %v2514, %v2516
        %v2518 = vrot.slane %v2490, %v2517
        %v2519 = vcombine.low %v2497, %v2504
        %v2520 = vcombine.low %v2511, %v2518
        %v2522 = vunpack.c.l.s4 1966171168
        %v2523 = vunpack.c.0.s8 %v2522
        %v2524 = vlaneseq
        %v2525 = vshrl.u32 %v2524, 7
        %v2526 = vsub.s32 %v2523, %v2525
        %v2527 = vrot.slane %v2519, %v2526
        %v2529 = vunpack.c.l.s4 1966171168
        %v2530 = vunpack.c.0.s8 %v2529
        %v2531 = vlaneseq
        %v2532 = vshrl.u32 %v2531, 7
        %v2533 = vsub.s32 %v2530, %v2532
        %v2534 = vrot.slane %v2520, %v2533
        %v2535 = vcombine.low %v2527, %v2534
        %v2536 = vcombine.low %v1543, %v1550
        %v2537 = vcombine.low %v1551, %v1552
        %v2538 = vcombine.low %v1567, %v1574
        %v2539 = vcombine.low %v1575, %v1576
        %v2541 = vunpack.c.l.s4 1966171168
        %v2542 = vunpack.c.0.s8 %v2541
        %v2543 = vlaneseq
        %v2544 = vshrl.u32 %v2543, 7
        %v2545 = vsub.s32 %v2542, %v2544
        %v2546 = vrot.slane %v2536, %v2545
        %v2548 = vunpack.c.l.s4 1966171168
        %v2549 = vunpack.c.0.s8 %v2548
        %v2550 = vlaneseq
        %v2551 = vshrl.u32 %v2550, 7
        %v2552 = vsub.s32 %v2549, %v2551
        %v2553 = vrot.slane %v2537, %v2552
        %v2555 = vunpack.c.l.s4 1966171168
        %v2556 = vunpack.c.0.s8 %v2555
        %v2557 = vlaneseq
        %v2558 = vshrl.u32 %v2557, 7
        %v2559 = vsub.s32 %v2556, %v2558
        %v2560 = vrot.slane %v2538, %v2559
        %v2562 = vunpack.c.l.s4 1966171168
        %v2563 = vunpack.c.0.s8 %v2562
        %v2564 = vlaneseq
        %v2565 = vshrl.u32 %v2564, 7
        %v2566 = vsub.s32 %v2563, %v2565
        %v2567 = vrot.slane %v2539, %v2566
        %v2568 = vcombine.low %v2546, %v2553
        %v2569 = vcombine.low %v2560, %v2567
        %v2571 = vunpack.c.l.s4 1966171168
        %v2572 = vunpack.c.0.s8 %v2571
        %v2573 = vlaneseq
        %v2574 = vshrl.u32 %v2573, 7
        %v2575 = vsub.s32 %v2572, %v2574
        %v2576 = vrot.slane %v2568, %v2575
        %v2578 = vunpack.c.l.s4 1966171168
        %v2579 = vunpack.c.0.s8 %v2578
        %v2580 = vlaneseq
        %v2581 = vshrl.u32 %v2580, 7
        %v2582 = vsub.s32 %v2579, %v2581
        %v2583 = vrot.slane %v2569, %v2582
        %v2584 = vcombine.low %v2576, %v2583
        %v2585 = vcombine.low %v1590, %v1605
        %v2586 = vcombine.low %v1612, %v1613
        %v2587 = vcombine.low %v1614, %v1629
        %v2588 = vcombine.low %v1636, %v1637
        %v2590 = vunpack.c.l.s4 1966171168
        %v2591 = vunpack.c.0.s8 %v2590
        %v2592 = vlaneseq
        %v2593 = vshrl.u32 %v2592, 7
        %v2594 = vsub.s32 %v2591, %v2593
        %v2595 = vrot.slane %v2585, %v2594
        %v2597 = vunpack.c.l.s4 1966171168
        %v2598 = vunpack.c.0.s8 %v2597
        %v2599 = vlaneseq
        %v2600 = vshrl.u32 %v2599, 7
        %v2601 = vsub.s32 %v2598, %v2600
        %v2602 = vrot.slane %v2586, %v2601
        %v2604 = vunpack.c.l.s4 1966171168
        %v2605 = vunpack.c.0.s8 %v2604
        %v2606 = vlaneseq
        %v2607 = vshrl.u32 %v2606, 7
        %v2608 = vsub.s32 %v2605, %v2607
        %v2609 = vrot.slane %v2587, %v2608
        %v2611 = vunpack.c.l.s4 1966171168
        %v2612 = vunpack.c.0.s8 %v2611
        %v2613 = vlaneseq
        %v2614 = vshrl.u32 %v2613, 7
        %v2615 = vsub.s32 %v2612, %v2614
        %v2616 = vrot.slane %v2588, %v2615
        %v2617 = vcombine.low %v2595, %v2602
        %v2618 = vcombine.low %v2609, %v2616
        %v2620 = vunpack.c.l.s4 1966171168
        %v2621 = vunpack.c.0.s8 %v2620
        %v2622 = vlaneseq
        %v2623 = vshrl.u32 %v2622, 7
        %v2624 = vsub.s32 %v2621, %v2623
        %v2625 = vrot.slane %v2617, %v2624
        %v2627 = vunpack.c.l.s4 1966171168
        %v2628 = vunpack.c.0.s8 %v2627
        %v2629 = vlaneseq
        %v2630 = vshrl.u32 %v2629, 7
        %v2631 = vsub.s32 %v2628, %v2630
        %v2632 = vrot.slane %v2618, %v2631
        %v2633 = vcombine.low %v2625, %v2632
        %v2634 = vcombine.low %v1638, %v1652
        %v2636 = vunpack.c.l.s4 1966171168
        %v2637 = vunpack.c.0.s8 %v2636
        %v2638 = vlaneseq
        %v2639 = vshrl.u32 %v2638, 7
        %v2640 = vsub.s32 %v2637, %v2639
        %v2641 = vrot.slane %v2634, %v2640
        %v2643 = vunpack.c.l.s4 1966171168
        %v2644 = vunpack.c.0.s8 %v2643
        %v2645 = vlaneseq
        %v2646 = vshrl.u32 %v2645, 7
        %v2647 = vsub.s32 %v2644, %v2646
        %v2648 = vrot.slane %v2641, %v2647
        %vm2649 = vcmask 31744
        %v2651 = vsel %vm2649, %v1702, 0
        %v2654 = vsel %vm2649, %v1751, 0
        %v2657 = vsel %vm2649, %v1800, 0
        %v2660 = vsel %vm2649, %v1849, 0
        %v2663 = vsel %vm2649, %v1898, 0
        %v2666 = vsel %vm2649, %v1947, 0
        %v2669 = vsel %vm2649, %v1996, 0
        %v2672 = vsel %vm2649, %v2045, 0
        %v2675 = vsel %vm2649, %v2094, 0
        %v2678 = vsel %vm2649, %v2143, 0
        %v2681 = vsel %vm2649, %v2192, 0
        %v2684 = vsel %vm2649, %v2241, 0
        %v2687 = vsel %vm2649, %v2290, 0
        %v2690 = vsel %vm2649, %v2339, 0
        %v2693 = vsel %vm2649, %v2388, 0
        %v2696 = vsel %vm2649, %v2437, 0
        %v2699 = vsel %vm2649, %v2486, 0
        %v2702 = vsel %vm2649, %v2535, 0
        %v2705 = vsel %vm2649, %v2584, 0
        %v2708 = vsel %vm2649, %v2633, 0
        %v2711 = vsel %vm2649, %v2648, 0
        %vm2713 = vcmask 1041408
        %v2715 = vsel %vm2713, %v1653, 0
        %2717 = vmatprep.subr.bf16.mxu0 0
        %2718 = vmatpush1.bf16.msra.mxu0 %v2715
        %2719 = vmatprep.subr.bf16.mxu0 0
        %2720 = vmatpush1.bf16.msra.mxu0 0
        %2721 = vmatprep.subr.bf16.mxu0 0
        %2722 = vmatpush1.bf16.msra.mxu0 0
        %2723 = vmatprep.subr.bf16.mxu0 0
        %2724 = vmatpush1.bf16.msra.mxu0 0
        %2725 = vmatprep.subr.bf16.mxu0 0
        %2726 = vmatpush1.bf16.msra.mxu0 0
        %2727 = vmatprep.subr.bf16.mxu0 0
        %2728 = vmatpush1.bf16.msra.mxu0 0
        %2729 = vmatprep.subr.bf16.mxu0 0
        %2730 = vmatpush1.bf16.msra.mxu0 0
        %2731 = vmatprep.subr.bf16.mxu0 0
        %2732 = vmatpush1.bf16.msra.mxu0 0
        %2733 = vmatprep.subr.bf16.mxu0 0
        %2734 = vmatpush1.bf16.msra.mxu0 0
        %2735 = vmatprep.subr.bf16.mxu0 0
        %2736 = vmatpush1.bf16.msra.mxu0 0
        %2737 = vmatprep.subr.bf16.mxu0 0
        %2738 = vmatpush1.bf16.msra.mxu0 0
        %2739 = vmatprep.subr.bf16.mxu0 0
        %2740 = vmatpush1.bf16.msra.mxu0 0
        %2741 = vmatprep.subr.bf16.mxu0 0
        %2742 = vmatpush1.bf16.msra.mxu0 0
        %2743 = vmatprep.subr.bf16.mxu0 0
        %2744 = vmatpush1.bf16.msra.mxu0 0
        %2745 = vmatprep.subr.bf16.mxu0 0
        %2746 = vmatpush1.bf16.msra.mxu0 0
        %2747 = vmatprep.subr.bf16.mxu0 0
        %2748 = vmatpush1.bf16.msra.mxu0 0
        %2749 = vmatprep.mubr.bf16.mxu0 0
        %2750 = vmatmul.mubr.bf16.gmra.mrb[0].mxu0 %v2651
        %v2751 = vpop.f32.mrb[0].mxu0
        %v2752 = vadd.f32 0.0, %v2751
        %v2753 = vpop.f32.mrb[0].mxu0
        %v2754 = vpop.f32.mrb[0].mxu0
        %v2755 = vadd.f32 0.0, %v2754
        %v2756 = vpop.f32.mrb[0].mxu0
        %2757 = vmatprep.mubr.bf16.mxu0 0
        %2758 = vmatmul.mubr.bf16.gmra.mrb[0].mxu0 %v2654
        %v2759 = vpop.f32.mrb[0].mxu0
        %v2760 = vadd.f32 0.0, %v2759
        %v2761 = vpop.f32.mrb[0].mxu0
        %v2762 = vpop.f32.mrb[0].mxu0
        %v2763 = vadd.f32 0.0, %v2762
        %v2764 = vpop.f32.mrb[0].mxu0
        %2765 = vmatprep.mubr.bf16.mxu0 0
        %2766 = vmatmul.mubr.bf16.gmra.mrb[0].mxu0 %v2657
        %v2767 = vpop.f32.mrb[0].mxu0
        %v2768 = vadd.f32 0.0, %v2767
        %v2769 = vpop.f32.mrb[0].mxu0
        %v2770 = vpop.f32.mrb[0].mxu0
        %v2771 = vadd.f32 0.0, %v2770
        %v2772 = vpop.f32.mrb[0].mxu0
        %2773 = vmatprep.mubr.bf16.mxu0 0
        %2774 = vmatmul.mubr.bf16.gmra.mrb[0].mxu0 %v2660
        %v2775 = vpop.f32.mrb[0].mxu0
        %v2776 = vadd.f32 0.0, %v2775
        %v2777 = vpop.f32.mrb[0].mxu0
        %v2778 = vpop.f32.mrb[0].mxu0
        %v2779 = vadd.f32 0.0, %v2778
        %v2780 = vpop.f32.mrb[0].mxu0
        %2781 = vmatprep.mubr.bf16.mxu0 0
        %2782 = vmatmul.mubr.bf16.gmra.mrb[0].mxu0 %v2663
        %v2783 = vpop.f32.mrb[0].mxu0
        %v2784 = vadd.f32 0.0, %v2783
        %v2785 = vpop.f32.mrb[0].mxu0
        %v2786 = vpop.f32.mrb[0].mxu0
        %v2787 = vadd.f32 0.0, %v2786
        %v2788 = vpop.f32.mrb[0].mxu0
        %2789 = vmatprep.mubr.bf16.mxu0 0
        %2790 = vmatmul.mubr.bf16.gmra.mrb[0].mxu0 %v2666
        %v2791 = vpop.f32.mrb[0].mxu0
        %v2792 = vadd.f32 0.0, %v2791
        %v2793 = vpop.f32.mrb[0].mxu0
        %v2794 = vpop.f32.mrb[0].mxu0
        %v2795 = vadd.f32 0.0, %v2794
        %v2796 = vpop.f32.mrb[0].mxu0
        %2797 = vmatprep.mubr.bf16.mxu0 0
        %2798 = vmatmul.mubr.bf16.gmra.mrb[0].mxu0 %v2669
        %v2799 = vpop.f32.mrb[0].mxu0
        %v2800 = vadd.f32 0.0, %v2799
        %v2801 = vpop.f32.mrb[0].mxu0
        %v2802 = vpop.f32.mrb[0].mxu0
        %v2803 = vadd.f32 0.0, %v2802
        %v2804 = vpop.f32.mrb[0].mxu0
        %2805 = vmatprep.mubr.bf16.mxu0 0
        %2806 = vmatmul.mubr.bf16.gmra.mrb[0].mxu0 %v2672
        %v2807 = vpop.f32.mrb[0].mxu0
        %v2808 = vadd.f32 0.0, %v2807
        %v2809 = vpop.f32.mrb[0].mxu0
        %v2810 = vpop.f32.mrb[0].mxu0
        %v2811 = vadd.f32 0.0, %v2810
        %v2812 = vpop.f32.mrb[0].mxu0
        %2813 = vmatprep.mubr.bf16.mxu0 0
        %2814 = vmatmul.mubr.bf16.gmra.mrb[0].mxu0 %v2675
        %v2815 = vpop.f32.mrb[0].mxu0
        %v2816 = vadd.f32 0.0, %v2815
        %v2817 = vpop.f32.mrb[0].mxu0
        %v2818 = vpop.f32.mrb[0].mxu0
        %v2819 = vadd.f32 0.0, %v2818
        %v2820 = vpop.f32.mrb[0].mxu0
        %2821 = vmatprep.mubr.bf16.mxu0 0
        %2822 = vmatmul.mubr.bf16.gmra.mrb[0].mxu0 %v2678
        %v2823 = vpop.f32.mrb[0].mxu0
        %v2824 = vadd.f32 0.0, %v2823
        %v2825 = vpop.f32.mrb[0].mxu0
        %v2826 = vpop.f32.mrb[0].mxu0
        %v2827 = vadd.f32 0.0, %v2826
        %v2828 = vpop.f32.mrb[0].mxu0
        %2829 = vmatprep.mubr.bf16.mxu0 0
        %2830 = vmatmul.mubr.bf16.gmra.mrb[0].mxu0 %v2681
        %v2831 = vpop.f32.mrb[0].mxu0
        %v2832 = vadd.f32 0.0, %v2831
        %v2833 = vpop.f32.mrb[0].mxu0
        %v2834 = vpop.f32.mrb[0].mxu0
        %v2835 = vadd.f32 0.0, %v2834
        %v2836 = vpop.f32.mrb[0].mxu0
        %2837 = vmatprep.mubr.bf16.mxu0 0
        %2838 = vmatmul.mubr.bf16.gmra.mrb[0].mxu0 %v2684
        %v2839 = vpop.f32.mrb[0].mxu0
        %v2840 = vadd.f32 0.0, %v2839
        %v2841 = vpop.f32.mrb[0].mxu0
        %v2842 = vpop.f32.mrb[0].mxu0
        %v2843 = vadd.f32 0.0, %v2842
        %v2844 = vpop.f32.mrb[0].mxu0
        %2845 = vmatprep.mubr.bf16.mxu0 0
        %2846 = vmatmul.mubr.bf16.gmra.mrb[0].mxu0 %v2687
        %v2847 = vpop.f32.mrb[0].mxu0
        %v2848 = vadd.f32 0.0, %v2847
        %v2849 = vpop.f32.mrb[0].mxu0
        %v2850 = vpop.f32.mrb[0].mxu0
        %v2851 = vadd.f32 0.0, %v2850
        %v2852 = vpop.f32.mrb[0].mxu0
        %2853 = vmatprep.mubr.bf16.mxu0 0
        %2854 = vmatmul.mubr.bf16.gmra.mrb[0].mxu0 %v2690
        %v2855 = vpop.f32.mrb[0].mxu0
        %v2856 = vadd.f32 0.0, %v2855
        %v2857 = vpop.f32.mrb[0].mxu0
        %v2858 = vpop.f32.mrb[0].mxu0
        %v2859 = vadd.f32 0.0, %v2858
        %v2860 = vpop.f32.mrb[0].mxu0
        %2861 = vmatprep.mubr.bf16.mxu0 0
        %2862 = vmatmul.mubr.bf16.gmra.mrb[0].mxu0 %v2693
        %v2863 = vpop.f32.mrb[0].mxu0
        %v2864 = vadd.f32 0.0, %v2863
        %v2865 = vpop.f32.mrb[0].mxu0
        %v2866 = vpop.f32.mrb[0].mxu0
        %v2867 = vadd.f32 0.0, %v2866
        %v2868 = vpop.f32.mrb[0].mxu0
        %2869 = vmatprep.mubr.bf16.mxu0 0
        %2870 = vmatmul.mubr.bf16.gmra.mrb[0].mxu0 %v2696
        %v2871 = vpop.f32.mrb[0].mxu0
        %v2872 = vadd.f32 0.0, %v2871
        %v2873 = vpop.f32.mrb[0].mxu0
        %v2874 = vpop.f32.mrb[0].mxu0
        %v2875 = vadd.f32 0.0, %v2874
        %v2876 = vpop.f32.mrb[0].mxu0
        %2877 = vmatprep.mubr.bf16.mxu0 0
        %2878 = vmatmul.mubr.bf16.gmra.mrb[0].mxu0 %v2699
        %v2879 = vpop.f32.mrb[0].mxu0
        %v2880 = vadd.f32 0.0, %v2879
        %v2881 = vpop.f32.mrb[0].mxu0
        %v2882 = vpop.f32.mrb[0].mxu0
        %v2883 = vadd.f32 0.0, %v2882
        %v2884 = vpop.f32.mrb[0].mxu0
        %2885 = vmatprep.mubr.bf16.mxu0 0
        %2886 = vmatmul.mubr.bf16.gmra.mrb[0].mxu0 %v2702
        %v2887 = vpop.f32.mrb[0].mxu0
        %v2888 = vadd.f32 0.0, %v2887
        %v2889 = vpop.f32.mrb[0].mxu0
        %v2890 = vpop.f32.mrb[0].mxu0
        %v2891 = vadd.f32 0.0, %v2890
        %v2892 = vpop.f32.mrb[0].mxu0
        %2893 = vmatprep.mubr.bf16.mxu0 0
        %2894 = vmatmul.mubr.bf16.gmra.mrb[0].mxu0 %v2705
        %v2895 = vpop.f32.mrb[0].mxu0
        %v2896 = vadd.f32 0.0, %v2895
        %v2897 = vpop.f32.mrb[0].mxu0
        %v2898 = vpop.f32.mrb[0].mxu0
        %v2899 = vadd.f32 0.0, %v2898
        %v2900 = vpop.f32.mrb[0].mxu0
        %2901 = vmatprep.mubr.bf16.mxu0 0
        %2902 = vmatmul.mubr.bf16.gmra.mrb[0].mxu0 %v2708
        %v2903 = vpop.f32.mrb[0].mxu0
        %v2904 = vadd.f32 0.0, %v2903
        %v2905 = vpop.f32.mrb[0].mxu0
        %v2906 = vpop.f32.mrb[0].mxu0
        %v2907 = vadd.f32 0.0, %v2906
        %v2908 = vpop.f32.mrb[0].mxu0
        %2909 = vmatprep.mubr.bf16.mxu0 0
        %2910 = vmatmul.mubr.bf16.gmra.mrb[0].mxu0 %v2711
        %v2911 = vpop.f32.mrb[0].mxu0
        %v2912 = vadd.f32 0.0, %v2911
        %v2913 = vpop.f32.mrb[0].mxu0
        %v2914 = vpop.f32.mrb[0].mxu0
        %v2915 = vpop.f32.mrb[0].mxu0
        %2916 = vdwg.mxu0
        %v2917 = vld [vmem:[%s2] sm:$0x1]
        %v2919 = vlaneseq
        %v2920 = vshrl.u32 %v2919, 7
        %v2921 = vsub.s32 0, %v2920
        %v2922 = vrot.slane %v2917, %v2921
        %v2924 = vmul.f32 %v2752, %v2922
        %v2925 = vmul.f32 %v2755, %v2922
        %v2926 = vmul.f32 %v2760, %v2922
        %v2927 = vmul.f32 %v2763, %v2922
        %v2928 = vmul.f32 %v2768, %v2922
        %v2929 = vmul.f32 %v2771, %v2922
        %v2930 = vmul.f32 %v2776, %v2922
        %v2931 = vmul.f32 %v2779, %v2922
        %v2932 = vmul.f32 %v2784, %v2922
        %v2933 = vmul.f32 %v2787, %v2922
        %v2934 = vmul.f32 %v2792, %v2922
        %v2935 = vmul.f32 %v2795, %v2922
        %v2936 = vmul.f32 %v2800, %v2922
        %v2937 = vmul.f32 %v2803, %v2922
        %v2938 = vmul.f32 %v2808, %v2922
        %v2939 = vmul.f32 %v2811, %v2922
        %v2940 = vmul.f32 %v2816, %v2922
        %v2941 = vmul.f32 %v2819, %v2922
        %v2942 = vmul.f32 %v2824, %v2922
        %v2943 = vmul.f32 %v2827, %v2922
        %v2944 = vmul.f32 %v2832, %v2922
        %v2945 = vmul.f32 %v2835, %v2922
        %v2946 = vmul.f32 %v2840, %v2922
        %v2947 = vmul.f32 %v2843, %v2922
        %v2948 = vmul.f32 %v2848, %v2922
        %v2949 = vmul.f32 %v2851, %v2922
        %v2950 = vmul.f32 %v2856, %v2922
        %v2951 = vmul.f32 %v2859, %v2922
        %v2952 = vmul.f32 %v2864, %v2922
        %v2953 = vmul.f32 %v2867, %v2922
        %v2954 = vmul.f32 %v2872, %v2922
        %v2955 = vmul.f32 %v2875, %v2922
        %v2956 = vmul.f32 %v2880, %v2922
        %v2957 = vmul.f32 %v2883, %v2922
        %v2958 = vmul.f32 %v2888, %v2922
        %v2959 = vmul.f32 %v2891, %v2922
        %v2960 = vmul.f32 %v2896, %v2922
        %v2961 = vmul.f32 %v2899, %v2922
        %v2962 = vmul.f32 %v2904, %v2922
        %v2963 = vmul.f32 %v2907, %v2922
        %v2964 = vmul.f32 %v2912, %v2922
        %v2965 = vld [vmem:[%s3] sm:$0x1]
        %v2967 = vlaneseq
        %v2968 = vshrl.u32 %v2967, 7
        %v2969 = vsub.s32 0, %v2968
        %v2970 = vrot.slane %v2965, %v2969
        %v2972 = vadd.f32 %v2924, %v2970
        %v2973 = vadd.f32 %v2925, %v2970
        %v2974 = vadd.f32 %v2926, %v2970
        %v2975 = vadd.f32 %v2927, %v2970
        %v2976 = vadd.f32 %v2928, %v2970
        %v2977 = vadd.f32 %v2929, %v2970
        %v2978 = vadd.f32 %v2930, %v2970
        %v2979 = vadd.f32 %v2931, %v2970
        %v2980 = vadd.f32 %v2932, %v2970
        %v2981 = vadd.f32 %v2933, %v2970
        %v2982 = vadd.f32 %v2934, %v2970
        %v2983 = vadd.f32 %v2935, %v2970
        %v2984 = vadd.f32 %v2936, %v2970
        %v2985 = vadd.f32 %v2937, %v2970
        %v2986 = vadd.f32 %v2938, %v2970
        %v2987 = vadd.f32 %v2939, %v2970
        %v2988 = vadd.f32 %v2940, %v2970
        %v2989 = vadd.f32 %v2941, %v2970
        %v2990 = vadd.f32 %v2942, %v2970
        %v2991 = vadd.f32 %v2943, %v2970
        %v2992 = vadd.f32 %v2944, %v2970
        %v2993 = vadd.f32 %v2945, %v2970
        %v2994 = vadd.f32 %v2946, %v2970
        %v2995 = vadd.f32 %v2947, %v2970
        %v2996 = vadd.f32 %v2948, %v2970
        %v2997 = vadd.f32 %v2949, %v2970
        %v2998 = vadd.f32 %v2950, %v2970
        %v2999 = vadd.f32 %v2951, %v2970
        %v3000 = vadd.f32 %v2952, %v2970
        %v3001 = vadd.f32 %v2953, %v2970
        %v3002 = vadd.f32 %v2954, %v2970
        %v3003 = vadd.f32 %v2955, %v2970
        %v3004 = vadd.f32 %v2956, %v2970
        %v3005 = vadd.f32 %v2957, %v2970
        %v3006 = vadd.f32 %v2958, %v2970
        %v3007 = vadd.f32 %v2959, %v2970
        %v3008 = vadd.f32 %v2960, %v2970
        %v3009 = vadd.f32 %v2961, %v2970
        %v3010 = vadd.f32 %v2962, %v2970
        %v3011 = vadd.f32 %v2963, %v2970
        %v3012 = vadd.f32 %v2964, %v2970
        %v3013 = vxor.u32 %v2972, 2147483648
        %v3014 = vxor.u32 %v2973, 2147483648
        %v3015 = vxor.u32 %v2974, 2147483648
        %v3016 = vxor.u32 %v2975, 2147483648
        %v3017 = vxor.u32 %v2976, 2147483648
        %v3018 = vxor.u32 %v2977, 2147483648
        %v3019 = vxor.u32 %v2978, 2147483648
        %v3020 = vxor.u32 %v2979, 2147483648
        %v3021 = vxor.u32 %v2980, 2147483648
        %v3022 = vxor.u32 %v2981, 2147483648
        %v3023 = vxor.u32 %v2982, 2147483648
        %v3024 = vxor.u32 %v2983, 2147483648
        %v3025 = vxor.u32 %v2984, 2147483648
        %v3026 = vxor.u32 %v2985, 2147483648
        %v3027 = vxor.u32 %v2986, 2147483648
        %v3028 = vxor.u32 %v2987, 2147483648
        %v3029 = vxor.u32 %v2988, 2147483648
        %v3030 = vxor.u32 %v2989, 2147483648
        %v3031 = vxor.u32 %v2990, 2147483648
        %v3032 = vxor.u32 %v2991, 2147483648
        %v3033 = vxor.u32 %v2992, 2147483648
        %v3034 = vxor.u32 %v2993, 2147483648
        %v3035 = vxor.u32 %v2994, 2147483648
        %v3036 = vxor.u32 %v2995, 2147483648
        %v3037 = vxor.u32 %v2996, 2147483648
        %v3038 = vxor.u32 %v2997, 2147483648
        %v3039 = vxor.u32 %v2998, 2147483648
        %v3040 = vxor.u32 %v2999, 2147483648
        %v3041 = vxor.u32 %v3000, 2147483648
        %v3042 = vxor.u32 %v3001, 2147483648
        %v3043 = vxor.u32 %v3002, 2147483648
        %v3044 = vxor.u32 %v3003, 2147483648
        %v3045 = vxor.u32 %v3004, 2147483648
        %v3046 = vxor.u32 %v3005, 2147483648
        %v3047 = vxor.u32 %v3006, 2147483648
        %v3048 = vxor.u32 %v3007, 2147483648
        %v3049 = vxor.u32 %v3008, 2147483648
        %v3050 = vxor.u32 %v3009, 2147483648
        %v3051 = vxor.u32 %v3010, 2147483648
        %v3052 = vxor.u32 %v3011, 2147483648
        %v3053 = vxor.u32 %v3012, 2147483648
        %v3054 = vmul.f32 %v3013, 1.442695
        %v3055 = vpow.pop %v3054
        %v3056 = vmul.f32 %v3014, 1.442695
        %v3057 = vpow.pop %v3056
        %v3058 = vmul.f32 %v3015, 1.442695
        %v3059 = vpow.pop %v3058
        %v3060 = vmul.f32 %v3016, 1.442695
        %v3061 = vpow.pop %v3060
        %v3062 = vmul.f32 %v3017, 1.442695
        %v3063 = vpow.pop %v3062
        %v3064 = vmul.f32 %v3018, 1.442695
        %v3065 = vpow.pop %v3064
        %v3066 = vmul.f32 %v3019, 1.442695
        %v3067 = vpow.pop %v3066
        %v3068 = vmul.f32 %v3020, 1.442695
        %v3069 = vpow.pop %v3068
        %v3070 = vmul.f32 %v3021, 1.442695
        %v3071 = vpow.pop %v3070
        %v3072 = vmul.f32 %v3022, 1.442695
        %v3073 = vpow.pop %v3072
        %v3074 = vmul.f32 %v3023, 1.442695
        %v3075 = vpow.pop %v3074
        %v3076 = vmul.f32 %v3024, 1.442695
        %v3077 = vpow.pop %v3076
        %v3078 = vmul.f32 %v3025, 1.442695
        %v3079 = vpow.pop %v3078
        %v3080 = vmul.f32 %v3026, 1.442695
        %v3081 = vpow.pop %v3080
        %v3082 = vmul.f32 %v3027, 1.442695
        %v3083 = vpow.pop %v3082
        %v3084 = vmul.f32 %v3028, 1.442695
        %v3085 = vpow.pop %v3084
        %v3086 = vmul.f32 %v3029, 1.442695
        %v3087 = vpow.pop %v3086
        %v3088 = vmul.f32 %v3030, 1.442695
        %v3089 = vpow.pop %v3088
        %v3090 = vmul.f32 %v3031, 1.442695
        %v3091 = vpow.pop %v3090
        %v3092 = vmul.f32 %v3032, 1.442695
        %v3093 = vpow.pop %v3092
        %v3094 = vmul.f32 %v3033, 1.442695
        %v3095 = vpow.pop %v3094
        %v3096 = vmul.f32 %v3034, 1.442695
        %v3097 = vpow.pop %v3096
        %v3098 = vmul.f32 %v3035, 1.442695
        %v3099 = vpow.pop %v3098
        %v3100 = vmul.f32 %v3036, 1.442695
        %v3101 = vpow.pop %v3100
        %v3102 = vmul.f32 %v3037, 1.442695
        %v3103 = vpow.pop %v3102
        %v3104 = vmul.f32 %v3038, 1.442695
        %v3105 = vpow.pop %v3104
        %v3106 = vmul.f32 %v3039, 1.442695
        %v3107 = vpow.pop %v3106
        %v3108 = vmul.f32 %v3040, 1.442695
        %v3109 = vpow.pop %v3108
        %v3110 = vmul.f32 %v3041, 1.442695
        %v3111 = vpow.pop %v3110
        %v3112 = vmul.f32 %v3042, 1.442695
        %v3113 = vpow.pop %v3112
        %v3114 = vmul.f32 %v3043, 1.442695
        %v3115 = vpow.pop %v3114
        %v3116 = vmul.f32 %v3044, 1.442695
        %v3117 = vpow.pop %v3116
        %v3118 = vmul.f32 %v3045, 1.442695
        %v3119 = vpow.pop %v3118
        %v3120 = vmul.f32 %v3046, 1.442695
        %v3121 = vpow.pop %v3120
        %v3122 = vmul.f32 %v3047, 1.442695
        %v3123 = vpow.pop %v3122
        %v3124 = vmul.f32 %v3048, 1.442695
        %v3125 = vpow.pop %v3124
        %v3126 = vmul.f32 %v3049, 1.442695
        %v3127 = vpow.pop %v3126
        %v3128 = vmul.f32 %v3050, 1.442695
        %v3129 = vpow.pop %v3128
        %v3130 = vmul.f32 %v3051, 1.442695
        %v3131 = vpow.pop %v3130
        %v3132 = vmul.f32 %v3052, 1.442695
        %v3133 = vpow.pop %v3132
        %v3134 = vmul.f32 %v3053, 1.442695
        %v3135 = vpow.pop %v3134
        %v3136 = vadd.f32 %v3055, 1.0
        %v3137 = vadd.f32 %v3057, 1.0
        %v3138 = vadd.f32 %v3059, 1.0
        %v3139 = vadd.f32 %v3061, 1.0
        %v3140 = vadd.f32 %v3063, 1.0
        %v3141 = vadd.f32 %v3065, 1.0
        %v3142 = vadd.f32 %v3067, 1.0
        %v3143 = vadd.f32 %v3069, 1.0
        %v3144 = vadd.f32 %v3071, 1.0
        %v3145 = vadd.f32 %v3073, 1.0
        %v3146 = vadd.f32 %v3075, 1.0
        %v3147 = vadd.f32 %v3077, 1.0
        %v3148 = vadd.f32 %v3079, 1.0
        %v3149 = vadd.f32 %v3081, 1.0
        %v3150 = vadd.f32 %v3083, 1.0
        %v3151 = vadd.f32 %v3085, 1.0
        %v3152 = vadd.f32 %v3087, 1.0
        %v3153 = vadd.f32 %v3089, 1.0
        %v3154 = vadd.f32 %v3091, 1.0
        %v3155 = vadd.f32 %v3093, 1.0
        %v3156 = vadd.f32 %v3095, 1.0
        %v3157 = vadd.f32 %v3097, 1.0
        %v3158 = vadd.f32 %v3099, 1.0
        %v3159 = vadd.f32 %v3101, 1.0
        %v3160 = vadd.f32 %v3103, 1.0
        %v3161 = vadd.f32 %v3105, 1.0
        %v3162 = vadd.f32 %v3107, 1.0
        %v3163 = vadd.f32 %v3109, 1.0
        %v3164 = vadd.f32 %v3111, 1.0
        %v3165 = vadd.f32 %v3113, 1.0
        %v3166 = vadd.f32 %v3115, 1.0
        %v3167 = vadd.f32 %v3117, 1.0
        %v3168 = vadd.f32 %v3119, 1.0
        %v3169 = vadd.f32 %v3121, 1.0
        %v3170 = vadd.f32 %v3123, 1.0
        %v3171 = vadd.f32 %v3125, 1.0
        %v3172 = vadd.f32 %v3127, 1.0
        %v3173 = vadd.f32 %v3129, 1.0
        %v3174 = vadd.f32 %v3131, 1.0
        %v3175 = vadd.f32 %v3133, 1.0
        %v3176 = vadd.f32 %v3135, 1.0
        %v3177 = vrcp.pop %v3136
        %v3178 = vmul.f32 1.0, %v3177
        %v3179 = vrcp.pop %v3137
        %v3180 = vmul.f32 1.0, %v3179
        %v3181 = vrcp.pop %v3138
        %v3182 = vmul.f32 1.0, %v3181
        %v3183 = vrcp.pop %v3139
        %v3184 = vmul.f32 1.0, %v3183
        %v3185 = vrcp.pop %v3140
        %v3186 = vmul.f32 1.0, %v3185
        %v3187 = vrcp.pop %v3141
        %v3188 = vmul.f32 1.0, %v3187
        %v3189 = vrcp.pop %v3142
        %v3190 = vmul.f32 1.0, %v3189
        %v3191 = vrcp.pop %v3143
        %v3192 = vmul.f32 1.0, %v3191
        %v3193 = vrcp.pop %v3144
        %v3194 = vmul.f32 1.0, %v3193
        %v3195 = vrcp.pop %v3145
        %v3196 = vmul.f32 1.0, %v3195
        %v3197 = vrcp.pop %v3146
        %v3198 = vmul.f32 1.0, %v3197
        %v3199 = vrcp.pop %v3147
        %v3200 = vmul.f32 1.0, %v3199
        %v3201 = vrcp.pop %v3148
        %v3202 = vmul.f32 1.0, %v3201
        %v3203 = vrcp.pop %v3149
        %v3204 = vmul.f32 1.0, %v3203
        %v3205 = vrcp.pop %v3150
        %v3206 = vmul.f32 1.0, %v3205
        %v3207 = vrcp.pop %v3151
        %v3208 = vmul.f32 1.0, %v3207
        %v3209 = vrcp.pop %v3152
        %v3210 = vmul.f32 1.0, %v3209
        %v3211 = vrcp.pop %v3153
        %v3212 = vmul.f32 1.0, %v3211
        %v3213 = vrcp.pop %v3154
        %v3214 = vmul.f32 1.0, %v3213
        %v3215 = vrcp.pop %v3155
        %v3216 = vmul.f32 1.0, %v3215
        %v3217 = vrcp.pop %v3156
        %v3218 = vmul.f32 1.0, %v3217
        %v3219 = vrcp.pop %v3157
        %v3220 = vmul.f32 1.0, %v3219
        %v3221 = vrcp.pop %v3158
        %v3222 = vmul.f32 1.0, %v3221
        %v3223 = vrcp.pop %v3159
        %v3224 = vmul.f32 1.0, %v3223
        %v3225 = vrcp.pop %v3160
        %v3226 = vmul.f32 1.0, %v3225
        %v3227 = vrcp.pop %v3161
        %v3228 = vmul.f32 1.0, %v3227
        %v3229 = vrcp.pop %v3162
        %v3230 = vmul.f32 1.0, %v3229
        %v3231 = vrcp.pop %v3163
        %v3232 = vmul.f32 1.0, %v3231
        %v3233 = vrcp.pop %v3164
        %v3234 = vmul.f32 1.0, %v3233
        %v3235 = vrcp.pop %v3165
        %v3236 = vmul.f32 1.0, %v3235
        %v3237 = vrcp.pop %v3166
        %v3238 = vmul.f32 1.0, %v3237
        %v3239 = vrcp.pop %v3167
        %v3240 = vmul.f32 1.0, %v3239
        %v3241 = vrcp.pop %v3168
        %v3242 = vmul.f32 1.0, %v3241
        %v3243 = vrcp.pop %v3169
        %v3244 = vmul.f32 1.0, %v3243
        %v3245 = vrcp.pop %v3170
        %v3246 = vmul.f32 1.0, %v3245
        %v3247 = vrcp.pop %v3171
        %v3248 = vmul.f32 1.0, %v3247
        %v3249 = vrcp.pop %v3172
        %v3250 = vmul.f32 1.0, %v3249
        %v3251 = vrcp.pop %v3173
        %v3252 = vmul.f32 1.0, %v3251
        %v3253 = vrcp.pop %v3174
        %v3254 = vmul.f32 1.0, %v3253
        %v3255 = vrcp.pop %v3175
        %v3256 = vmul.f32 1.0, %v3255
        %v3257 = vrcp.pop %v3176
        %v3258 = vmul.f32 1.0, %v3257
        %v3259 = vmul.f32 %v2972, %v3178
        %v3260 = vmul.f32 %v2973, %v3180
        %v3261 = vmul.f32 %v2974, %v3182
        %v3262 = vmul.f32 %v2975, %v3184
        %v3263 = vmul.f32 %v2976, %v3186
        %v3264 = vmul.f32 %v2977, %v3188
        %v3265 = vmul.f32 %v2978, %v3190
        %v3266 = vmul.f32 %v2979, %v3192
        %v3267 = vmul.f32 %v2980, %v3194
        %v3268 = vmul.f32 %v2981, %v3196
        %v3269 = vmul.f32 %v2982, %v3198
        %v3270 = vmul.f32 %v2983, %v3200
        %v3271 = vmul.f32 %v2984, %v3202
        %v3272 = vmul.f32 %v2985, %v3204
        %v3273 = vmul.f32 %v2986, %v3206
        %v3274 = vmul.f32 %v2987, %v3208
        %v3275 = vmul.f32 %v2988, %v3210
        %v3276 = vmul.f32 %v2989, %v3212
        %v3277 = vmul.f32 %v2990, %v3214
        %v3278 = vmul.f32 %v2991, %v3216
        %v3279 = vmul.f32 %v2992, %v3218
        %v3280 = vmul.f32 %v2993, %v3220
        %v3281 = vmul.f32 %v2994, %v3222
        %v3282 = vmul.f32 %v2995, %v3224
        %v3283 = vmul.f32 %v2996, %v3226
        %v3284 = vmul.f32 %v2997, %v3228
        %v3285 = vmul.f32 %v2998, %v3230
        %v3286 = vmul.f32 %v2999, %v3232
        %v3287 = vmul.f32 %v3000, %v3234
        %v3288 = vmul.f32 %v3001, %v3236
        %v3289 = vmul.f32 %v3002, %v3238
        %v3290 = vmul.f32 %v3003, %v3240
        %v3291 = vmul.f32 %v3004, %v3242
        %v3292 = vmul.f32 %v3005, %v3244
        %v3293 = vmul.f32 %v3006, %v3246
        %v3294 = vmul.f32 %v3007, %v3248
        %v3295 = vmul.f32 %v3008, %v3250
        %v3296 = vmul.f32 %v3009, %v3252
        %v3297 = vmul.f32 %v3010, %v3254
        %v3298 = vmul.f32 %v3011, %v3256
        %v3299 = vmul.f32 %v3012, %v3258
        %v3341 = vcombine.high %v3259, %v3259
        %v3343 = vunpack.c.l.s4 1983009808
        %v3344 = vunpack.c.0.s8 %v3343
        %v3345 = vlaneseq
        %v3346 = vshrl.u32 %v3345, 7
        %v3347 = vsub.s32 %v3344, %v3346
        %v3348 = vrot.slane %v3259, %v3347
        %v3350 = vunpack.c.l.s4 1983009808
        %v3351 = vunpack.c.0.s8 %v3350
        %v3352 = vlaneseq
        %v3353 = vshrl.u32 %v3352, 7
        %v3354 = vsub.s32 %v3351, %v3353
        %v3355 = vrot.slane %v3341, %v3354
        %v3356 = vcombine.high %v3348, %v3348
        %v3357 = vcombine.high %v3355, %v3355
        %v3358 = vcombine.high %v3260, %v3260
        %v3360 = vunpack.c.l.s4 1983009808
        %v3361 = vunpack.c.0.s8 %v3360
        %v3362 = vlaneseq
        %v3363 = vshrl.u32 %v3362, 7
        %v3364 = vsub.s32 %v3361, %v3363
        %v3365 = vrot.slane %v3260, %v3364
        %v3367 = vunpack.c.l.s4 1983009808
        %v3368 = vunpack.c.0.s8 %v3367
        %v3369 = vlaneseq
        %v3370 = vshrl.u32 %v3369, 7
        %v3371 = vsub.s32 %v3368, %v3370
        %v3372 = vrot.slane %v3358, %v3371
        %v3373 = vcombine.high %v3365, %v3365
        %v3374 = vcombine.high %v3372, %v3372
        %v3375 = vcombine.high %v3261, %v3261
        %v3377 = vunpack.c.l.s4 1983009808
        %v3378 = vunpack.c.0.s8 %v3377
        %v3379 = vlaneseq
        %v3380 = vshrl.u32 %v3379, 7
        %v3381 = vsub.s32 %v3378, %v3380
        %v3382 = vrot.slane %v3261, %v3381
        %v3384 = vunpack.c.l.s4 1983009808
        %v3385 = vunpack.c.0.s8 %v3384
        %v3386 = vlaneseq
        %v3387 = vshrl.u32 %v3386, 7
        %v3388 = vsub.s32 %v3385, %v3387
        %v3389 = vrot.slane %v3375, %v3388
        %v3390 = vcombine.high %v3382, %v3382
        %v3391 = vcombine.high %v3389, %v3389
        %v3392 = vcombine.high %v3262, %v3262
        %v3394 = vunpack.c.l.s4 1983009808
        %v3395 = vunpack.c.0.s8 %v3394
        %v3396 = vlaneseq
        %v3397 = vshrl.u32 %v3396, 7
        %v3398 = vsub.s32 %v3395, %v3397
        %v3399 = vrot.slane %v3262, %v3398
        %v3401 = vunpack.c.l.s4 1983009808
        %v3402 = vunpack.c.0.s8 %v3401
        %v3403 = vlaneseq
        %v3404 = vshrl.u32 %v3403, 7
        %v3405 = vsub.s32 %v3402, %v3404
        %v3406 = vrot.slane %v3392, %v3405
        %v3407 = vcombine.high %v3399, %v3399
        %v3408 = vcombine.high %v3406, %v3406
        %v3409 = vcombine.high %v3263, %v3263
        %v3411 = vunpack.c.l.s4 1983009808
        %v3412 = vunpack.c.0.s8 %v3411
        %v3413 = vlaneseq
        %v3414 = vshrl.u32 %v3413, 7
        %v3415 = vsub.s32 %v3412, %v3414
        %v3416 = vrot.slane %v3263, %v3415
        %v3418 = vunpack.c.l.s4 1983009808
        %v3419 = vunpack.c.0.s8 %v3418
        %v3420 = vlaneseq
        %v3421 = vshrl.u32 %v3420, 7
        %v3422 = vsub.s32 %v3419, %v3421
        %v3423 = vrot.slane %v3409, %v3422
        %v3424 = vcombine.high %v3416, %v3416
        %v3425 = vcombine.high %v3423, %v3423
        %v3426 = vcombine.high %v3264, %v3264
        %v3428 = vunpack.c.l.s4 1983009808
        %v3429 = vunpack.c.0.s8 %v3428
        %v3430 = vlaneseq
        %v3431 = vshrl.u32 %v3430, 7
        %v3432 = vsub.s32 %v3429, %v3431
        %v3433 = vrot.slane %v3264, %v3432
        %v3435 = vunpack.c.l.s4 1983009808
        %v3436 = vunpack.c.0.s8 %v3435
        %v3437 = vlaneseq
        %v3438 = vshrl.u32 %v3437, 7
        %v3439 = vsub.s32 %v3436, %v3438
        %v3440 = vrot.slane %v3426, %v3439
        %v3441 = vcombine.high %v3433, %v3433
        %v3442 = vcombine.high %v3440, %v3440
        %v3443 = vcombine.high %v3265, %v3265
        %v3445 = vunpack.c.l.s4 1983009808
        %v3446 = vunpack.c.0.s8 %v3445
        %v3447 = vlaneseq
        %v3448 = vshrl.u32 %v3447, 7
        %v3449 = vsub.s32 %v3446, %v3448
        %v3450 = vrot.slane %v3265, %v3449
        %v3452 = vunpack.c.l.s4 1983009808
        %v3453 = vunpack.c.0.s8 %v3452
        %v3454 = vlaneseq
        %v3455 = vshrl.u32 %v3454, 7
        %v3456 = vsub.s32 %v3453, %v3455
        %v3457 = vrot.slane %v3443, %v3456
        %v3458 = vcombine.high %v3450, %v3450
        %v3459 = vcombine.high %v3457, %v3457
        %v3460 = vcombine.high %v3266, %v3266
        %v3462 = vunpack.c.l.s4 1983009808
        %v3463 = vunpack.c.0.s8 %v3462
        %v3464 = vlaneseq
        %v3465 = vshrl.u32 %v3464, 7
        %v3466 = vsub.s32 %v3463, %v3465
        %v3467 = vrot.slane %v3266, %v3466
        %v3469 = vunpack.c.l.s4 1983009808
        %v3470 = vunpack.c.0.s8 %v3469
        %v3471 = vlaneseq
        %v3472 = vshrl.u32 %v3471, 7
        %v3473 = vsub.s32 %v3470, %v3472
        %v3474 = vrot.slane %v3460, %v3473
        %v3475 = vcombine.high %v3467, %v3467
        %v3476 = vcombine.high %v3474, %v3474
        %v3477 = vcombine.high %v3267, %v3267
        %v3479 = vunpack.c.l.s4 1983009808
        %v3480 = vunpack.c.0.s8 %v3479
        %v3481 = vlaneseq
        %v3482 = vshrl.u32 %v3481, 7
        %v3483 = vsub.s32 %v3480, %v3482
        %v3484 = vrot.slane %v3267, %v3483
        %v3486 = vunpack.c.l.s4 1983009808
        %v3487 = vunpack.c.0.s8 %v3486
        %v3488 = vlaneseq
        %v3489 = vshrl.u32 %v3488, 7
        %v3490 = vsub.s32 %v3487, %v3489
        %v3491 = vrot.slane %v3477, %v3490
        %v3492 = vcombine.high %v3484, %v3484
        %v3493 = vcombine.high %v3491, %v3491
        %v3494 = vcombine.high %v3268, %v3268
        %v3496 = vunpack.c.l.s4 1983009808
        %v3497 = vunpack.c.0.s8 %v3496
        %v3498 = vlaneseq
        %v3499 = vshrl.u32 %v3498, 7
        %v3500 = vsub.s32 %v3497, %v3499
        %v3501 = vrot.slane %v3268, %v3500
        %v3503 = vunpack.c.l.s4 1983009808
        %v3504 = vunpack.c.0.s8 %v3503
        %v3505 = vlaneseq
        %v3506 = vshrl.u32 %v3505, 7
        %v3507 = vsub.s32 %v3504, %v3506
        %v3508 = vrot.slane %v3494, %v3507
        %v3509 = vcombine.high %v3501, %v3501
        %v3510 = vcombine.high %v3508, %v3508
        %v3511 = vcombine.high %v3269, %v3269
        %v3513 = vunpack.c.l.s4 1983009808
        %v3514 = vunpack.c.0.s8 %v3513
        %v3515 = vlaneseq
        %v3516 = vshrl.u32 %v3515, 7
        %v3517 = vsub.s32 %v3514, %v3516
        %v3518 = vrot.slane %v3269, %v3517
        %v3520 = vunpack.c.l.s4 1983009808
        %v3521 = vunpack.c.0.s8 %v3520
        %v3522 = vlaneseq
        %v3523 = vshrl.u32 %v3522, 7
        %v3524 = vsub.s32 %v3521, %v3523
        %v3525 = vrot.slane %v3511, %v3524
        %v3526 = vcombine.high %v3518, %v3518
        %v3527 = vcombine.high %v3525, %v3525
        %v3528 = vcombine.high %v3270, %v3270
        %v3530 = vunpack.c.l.s4 1983009808
        %v3531 = vunpack.c.0.s8 %v3530
        %v3532 = vlaneseq
        %v3533 = vshrl.u32 %v3532, 7
        %v3534 = vsub.s32 %v3531, %v3533
        %v3535 = vrot.slane %v3270, %v3534
        %v3537 = vunpack.c.l.s4 1983009808
        %v3538 = vunpack.c.0.s8 %v3537
        %v3539 = vlaneseq
        %v3540 = vshrl.u32 %v3539, 7
        %v3541 = vsub.s32 %v3538, %v3540
        %v3542 = vrot.slane %v3528, %v3541
        %v3543 = vcombine.high %v3535, %v3535
        %v3544 = vcombine.high %v3542, %v3542
        %v3545 = vcombine.high %v3271, %v3271
        %v3547 = vunpack.c.l.s4 1983009808
        %v3548 = vunpack.c.0.s8 %v3547
        %v3549 = vlaneseq
        %v3550 = vshrl.u32 %v3549, 7
        %v3551 = vsub.s32 %v3548, %v3550
        %v3552 = vrot.slane %v3271, %v3551
        %v3554 = vunpack.c.l.s4 1983009808
        %v3555 = vunpack.c.0.s8 %v3554
        %v3556 = vlaneseq
        %v3557 = vshrl.u32 %v3556, 7
        %v3558 = vsub.s32 %v3555, %v3557
        %v3559 = vrot.slane %v3545, %v3558
        %v3560 = vcombine.high %v3552, %v3552
        %v3561 = vcombine.high %v3559, %v3559
        %v3562 = vcombine.high %v3272, %v3272
        %v3564 = vunpack.c.l.s4 1983009808
        %v3565 = vunpack.c.0.s8 %v3564
        %v3566 = vlaneseq
        %v3567 = vshrl.u32 %v3566, 7
        %v3568 = vsub.s32 %v3565, %v3567
        %v3569 = vrot.slane %v3272, %v3568
        %v3571 = vunpack.c.l.s4 1983009808
        %v3572 = vunpack.c.0.s8 %v3571
        %v3573 = vlaneseq
        %v3574 = vshrl.u32 %v3573, 7
        %v3575 = vsub.s32 %v3572, %v3574
        %v3576 = vrot.slane %v3562, %v3575
        %v3577 = vcombine.high %v3569, %v3569
        %v3578 = vcombine.high %v3576, %v3576
        %v3579 = vcombine.high %v3273, %v3273
        %v3581 = vunpack.c.l.s4 1983009808
        %v3582 = vunpack.c.0.s8 %v3581
        %v3583 = vlaneseq
        %v3584 = vshrl.u32 %v3583, 7
        %v3585 = vsub.s32 %v3582, %v3584
        %v3586 = vrot.slane %v3273, %v3585
        %v3588 = vunpack.c.l.s4 1983009808
        %v3589 = vunpack.c.0.s8 %v3588
        %v3590 = vlaneseq
        %v3591 = vshrl.u32 %v3590, 7
        %v3592 = vsub.s32 %v3589, %v3591
        %v3593 = vrot.slane %v3579, %v3592
        %v3594 = vcombine.high %v3586, %v3586
        %v3595 = vcombine.high %v3593, %v3593
        %v3596 = vcombine.high %v3274, %v3274
        %v3598 = vunpack.c.l.s4 1983009808
        %v3599 = vunpack.c.0.s8 %v3598
        %v3600 = vlaneseq
        %v3601 = vshrl.u32 %v3600, 7
        %v3602 = vsub.s32 %v3599, %v3601
        %v3603 = vrot.slane %v3274, %v3602
        %v3605 = vunpack.c.l.s4 1983009808
        %v3606 = vunpack.c.0.s8 %v3605
        %v3607 = vlaneseq
        %v3608 = vshrl.u32 %v3607, 7
        %v3609 = vsub.s32 %v3606, %v3608
        %v3610 = vrot.slane %v3596, %v3609
        %v3611 = vcombine.high %v3603, %v3603
        %v3612 = vcombine.high %v3610, %v3610
        %v3613 = vcombine.high %v3275, %v3275
        %v3615 = vunpack.c.l.s4 1983009808
        %v3616 = vunpack.c.0.s8 %v3615
        %v3617 = vlaneseq
        %v3618 = vshrl.u32 %v3617, 7
        %v3619 = vsub.s32 %v3616, %v3618
        %v3620 = vrot.slane %v3275, %v3619
        %v3622 = vunpack.c.l.s4 1983009808
        %v3623 = vunpack.c.0.s8 %v3622
        %v3624 = vlaneseq
        %v3625 = vshrl.u32 %v3624, 7
        %v3626 = vsub.s32 %v3623, %v3625
        %v3627 = vrot.slane %v3613, %v3626
        %v3628 = vcombine.high %v3620, %v3620
        %v3629 = vcombine.high %v3627, %v3627
        %v3630 = vcombine.high %v3276, %v3276
        %v3632 = vunpack.c.l.s4 1983009808
        %v3633 = vunpack.c.0.s8 %v3632
        %v3634 = vlaneseq
        %v3635 = vshrl.u32 %v3634, 7
        %v3636 = vsub.s32 %v3633, %v3635
        %v3637 = vrot.slane %v3276, %v3636
        %v3639 = vunpack.c.l.s4 1983009808
        %v3640 = vunpack.c.0.s8 %v3639
        %v3641 = vlaneseq
        %v3642 = vshrl.u32 %v3641, 7
        %v3643 = vsub.s32 %v3640, %v3642
        %v3644 = vrot.slane %v3630, %v3643
        %v3645 = vcombine.high %v3637, %v3637
        %v3646 = vcombine.high %v3644, %v3644
        %v3647 = vcombine.high %v3277, %v3277
        %v3649 = vunpack.c.l.s4 1983009808
        %v3650 = vunpack.c.0.s8 %v3649
        %v3651 = vlaneseq
        %v3652 = vshrl.u32 %v3651, 7
        %v3653 = vsub.s32 %v3650, %v3652
        %v3654 = vrot.slane %v3277, %v3653
        %v3656 = vunpack.c.l.s4 1983009808
        %v3657 = vunpack.c.0.s8 %v3656
        %v3658 = vlaneseq
        %v3659 = vshrl.u32 %v3658, 7
        %v3660 = vsub.s32 %v3657, %v3659
        %v3661 = vrot.slane %v3647, %v3660
        %v3662 = vcombine.high %v3654, %v3654
        %v3663 = vcombine.high %v3661, %v3661
        %v3664 = vcombine.high %v3278, %v3278
        %v3666 = vunpack.c.l.s4 1983009808
        %v3667 = vunpack.c.0.s8 %v3666
        %v3668 = vlaneseq
        %v3669 = vshrl.u32 %v3668, 7
        %v3670 = vsub.s32 %v3667, %v3669
        %v3671 = vrot.slane %v3278, %v3670
        %v3673 = vunpack.c.l.s4 1983009808
        %v3674 = vunpack.c.0.s8 %v3673
        %v3675 = vlaneseq
        %v3676 = vshrl.u32 %v3675, 7
        %v3677 = vsub.s32 %v3674, %v3676
        %v3678 = vrot.slane %v3664, %v3677
        %v3679 = vcombine.high %v3671, %v3671
        %v3680 = vcombine.high %v3678, %v3678
        %v3681 = vcombine.high %v3279, %v3279
        %v3683 = vunpack.c.l.s4 1983009808
        %v3684 = vunpack.c.0.s8 %v3683
        %v3685 = vlaneseq
        %v3686 = vshrl.u32 %v3685, 7
        %v3687 = vsub.s32 %v3684, %v3686
        %v3688 = vrot.slane %v3279, %v3687
        %v3690 = vunpack.c.l.s4 1983009808
        %v3691 = vunpack.c.0.s8 %v3690
        %v3692 = vlaneseq
        %v3693 = vshrl.u32 %v3692, 7
        %v3694 = vsub.s32 %v3691, %v3693
        %v3695 = vrot.slane %v3681, %v3694
        %v3696 = vcombine.high %v3688, %v3688
        %v3697 = vcombine.high %v3695, %v3695
        %v3698 = vcombine.high %v3280, %v3280
        %v3700 = vunpack.c.l.s4 1983009808
        %v3701 = vunpack.c.0.s8 %v3700
        %v3702 = vlaneseq
        %v3703 = vshrl.u32 %v3702, 7
        %v3704 = vsub.s32 %v3701, %v3703
        %v3705 = vrot.slane %v3280, %v3704
        %v3707 = vunpack.c.l.s4 1983009808
        %v3708 = vunpack.c.0.s8 %v3707
        %v3709 = vlaneseq
        %v3710 = vshrl.u32 %v3709, 7
        %v3711 = vsub.s32 %v3708, %v3710
        %v3712 = vrot.slane %v3698, %v3711
        %v3713 = vcombine.high %v3705, %v3705
        %v3714 = vcombine.high %v3712, %v3712
        %v3715 = vcombine.high %v3281, %v3281
        %v3717 = vunpack.c.l.s4 1983009808
        %v3718 = vunpack.c.0.s8 %v3717
        %v3719 = vlaneseq
        %v3720 = vshrl.u32 %v3719, 7
        %v3721 = vsub.s32 %v3718, %v3720
        %v3722 = vrot.slane %v3281, %v3721
        %v3724 = vunpack.c.l.s4 1983009808
        %v3725 = vunpack.c.0.s8 %v3724
        %v3726 = vlaneseq
        %v3727 = vshrl.u32 %v3726, 7
        %v3728 = vsub.s32 %v3725, %v3727
        %v3729 = vrot.slane %v3715, %v3728
        %v3730 = vcombine.high %v3722, %v3722
        %v3731 = vcombine.high %v3729, %v3729
        %v3732 = vcombine.high %v3282, %v3282
        %v3734 = vunpack.c.l.s4 1983009808
        %v3735 = vunpack.c.0.s8 %v3734
        %v3736 = vlaneseq
        %v3737 = vshrl.u32 %v3736, 7
        %v3738 = vsub.s32 %v3735, %v3737
        %v3739 = vrot.slane %v3282, %v3738
        %v3741 = vunpack.c.l.s4 1983009808
        %v3742 = vunpack.c.0.s8 %v3741
        %v3743 = vlaneseq
        %v3744 = vshrl.u32 %v3743, 7
        %v3745 = vsub.s32 %v3742, %v3744
        %v3746 = vrot.slane %v3732, %v3745
        %v3747 = vcombine.high %v3739, %v3739
        %v3748 = vcombine.high %v3746, %v3746
        %v3749 = vcombine.high %v3283, %v3283
        %v3751 = vunpack.c.l.s4 1983009808
        %v3752 = vunpack.c.0.s8 %v3751
        %v3753 = vlaneseq
        %v3754 = vshrl.u32 %v3753, 7
        %v3755 = vsub.s32 %v3752, %v3754
        %v3756 = vrot.slane %v3283, %v3755
        %v3758 = vunpack.c.l.s4 1983009808
        %v3759 = vunpack.c.0.s8 %v3758
        %v3760 = vlaneseq
        %v3761 = vshrl.u32 %v3760, 7
        %v3762 = vsub.s32 %v3759, %v3761
        %v3763 = vrot.slane %v3749, %v3762
        %v3764 = vcombine.high %v3756, %v3756
        %v3765 = vcombine.high %v3763, %v3763
        %v3766 = vcombine.high %v3284, %v3284
        %v3768 = vunpack.c.l.s4 1983009808
        %v3769 = vunpack.c.0.s8 %v3768
        %v3770 = vlaneseq
        %v3771 = vshrl.u32 %v3770, 7
        %v3772 = vsub.s32 %v3769, %v3771
        %v3773 = vrot.slane %v3284, %v3772
        %v3775 = vunpack.c.l.s4 1983009808
        %v3776 = vunpack.c.0.s8 %v3775
        %v3777 = vlaneseq
        %v3778 = vshrl.u32 %v3777, 7
        %v3779 = vsub.s32 %v3776, %v3778
        %v3780 = vrot.slane %v3766, %v3779
        %v3781 = vcombine.high %v3773, %v3773
        %v3782 = vcombine.high %v3780, %v3780
        %v3783 = vcombine.high %v3285, %v3285
        %v3785 = vunpack.c.l.s4 1983009808
        %v3786 = vunpack.c.0.s8 %v3785
        %v3787 = vlaneseq
        %v3788 = vshrl.u32 %v3787, 7
        %v3789 = vsub.s32 %v3786, %v3788
        %v3790 = vrot.slane %v3285, %v3789
        %v3792 = vunpack.c.l.s4 1983009808
        %v3793 = vunpack.c.0.s8 %v3792
        %v3794 = vlaneseq
        %v3795 = vshrl.u32 %v3794, 7
        %v3796 = vsub.s32 %v3793, %v3795
        %v3797 = vrot.slane %v3783, %v3796
        %v3798 = vcombine.high %v3790, %v3790
        %v3799 = vcombine.high %v3797, %v3797
        %v3800 = vcombine.high %v3286, %v3286
        %v3802 = vunpack.c.l.s4 1983009808
        %v3803 = vunpack.c.0.s8 %v3802
        %v3804 = vlaneseq
        %v3805 = vshrl.u32 %v3804, 7
        %v3806 = vsub.s32 %v3803, %v3805
        %v3807 = vrot.slane %v3286, %v3806
        %v3809 = vunpack.c.l.s4 1983009808
        %v3810 = vunpack.c.0.s8 %v3809
        %v3811 = vlaneseq
        %v3812 = vshrl.u32 %v3811, 7
        %v3813 = vsub.s32 %v3810, %v3812
        %v3814 = vrot.slane %v3800, %v3813
        %v3815 = vcombine.high %v3807, %v3807
        %v3816 = vcombine.high %v3814, %v3814
        %v3817 = vcombine.high %v3287, %v3287
        %v3819 = vunpack.c.l.s4 1983009808
        %v3820 = vunpack.c.0.s8 %v3819
        %v3821 = vlaneseq
        %v3822 = vshrl.u32 %v3821, 7
        %v3823 = vsub.s32 %v3820, %v3822
        %v3824 = vrot.slane %v3287, %v3823
        %v3826 = vunpack.c.l.s4 1983009808
        %v3827 = vunpack.c.0.s8 %v3826
        %v3828 = vlaneseq
        %v3829 = vshrl.u32 %v3828, 7
        %v3830 = vsub.s32 %v3827, %v3829
        %v3831 = vrot.slane %v3817, %v3830
        %v3832 = vcombine.high %v3824, %v3824
        %v3833 = vcombine.high %v3831, %v3831
        %v3834 = vcombine.high %v3288, %v3288
        %v3836 = vunpack.c.l.s4 1983009808
        %v3837 = vunpack.c.0.s8 %v3836
        %v3838 = vlaneseq
        %v3839 = vshrl.u32 %v3838, 7
        %v3840 = vsub.s32 %v3837, %v3839
        %v3841 = vrot.slane %v3288, %v3840
        %v3843 = vunpack.c.l.s4 1983009808
        %v3844 = vunpack.c.0.s8 %v3843
        %v3845 = vlaneseq
        %v3846 = vshrl.u32 %v3845, 7
        %v3847 = vsub.s32 %v3844, %v3846
        %v3848 = vrot.slane %v3834, %v3847
        %v3849 = vcombine.high %v3841, %v3841
        %v3850 = vcombine.high %v3848, %v3848
        %v3851 = vcombine.high %v3289, %v3289
        %v3853 = vunpack.c.l.s4 1983009808
        %v3854 = vunpack.c.0.s8 %v3853
        %v3855 = vlaneseq
        %v3856 = vshrl.u32 %v3855, 7
        %v3857 = vsub.s32 %v3854, %v3856
        %v3858 = vrot.slane %v3289, %v3857
        %v3860 = vunpack.c.l.s4 1983009808
        %v3861 = vunpack.c.0.s8 %v3860
        %v3862 = vlaneseq
        %v3863 = vshrl.u32 %v3862, 7
        %v3864 = vsub.s32 %v3861, %v3863
        %v3865 = vrot.slane %v3851, %v3864
        %v3866 = vcombine.high %v3858, %v3858
        %v3867 = vcombine.high %v3865, %v3865
        %v3868 = vcombine.high %v3290, %v3290
        %v3870 = vunpack.c.l.s4 1983009808
        %v3871 = vunpack.c.0.s8 %v3870
        %v3872 = vlaneseq
        %v3873 = vshrl.u32 %v3872, 7
        %v3874 = vsub.s32 %v3871, %v3873
        %v3875 = vrot.slane %v3290, %v3874
        %v3877 = vunpack.c.l.s4 1983009808
        %v3878 = vunpack.c.0.s8 %v3877
        %v3879 = vlaneseq
        %v3880 = vshrl.u32 %v3879, 7
        %v3881 = vsub.s32 %v3878, %v3880
        %v3882 = vrot.slane %v3868, %v3881
        %v3883 = vcombine.high %v3875, %v3875
        %v3884 = vcombine.high %v3882, %v3882
        %v3885 = vcombine.high %v3291, %v3291
        %v3887 = vunpack.c.l.s4 1983009808
        %v3888 = vunpack.c.0.s8 %v3887
        %v3889 = vlaneseq
        %v3890 = vshrl.u32 %v3889, 7
        %v3891 = vsub.s32 %v3888, %v3890
        %v3892 = vrot.slane %v3291, %v3891
        %v3894 = vunpack.c.l.s4 1983009808
        %v3895 = vunpack.c.0.s8 %v3894
        %v3896 = vlaneseq
        %v3897 = vshrl.u32 %v3896, 7
        %v3898 = vsub.s32 %v3895, %v3897
        %v3899 = vrot.slane %v3885, %v3898
        %v3900 = vcombine.high %v3892, %v3892
        %v3901 = vcombine.high %v3899, %v3899
        %v3902 = vcombine.high %v3292, %v3292
        %v3904 = vunpack.c.l.s4 1983009808
        %v3905 = vunpack.c.0.s8 %v3904
        %v3906 = vlaneseq
        %v3907 = vshrl.u32 %v3906, 7
        %v3908 = vsub.s32 %v3905, %v3907
        %v3909 = vrot.slane %v3292, %v3908
        %v3911 = vunpack.c.l.s4 1983009808
        %v3912 = vunpack.c.0.s8 %v3911
        %v3913 = vlaneseq
        %v3914 = vshrl.u32 %v3913, 7
        %v3915 = vsub.s32 %v3912, %v3914
        %v3916 = vrot.slane %v3902, %v3915
        %v3917 = vcombine.high %v3909, %v3909
        %v3918 = vcombine.high %v3916, %v3916
        %v3919 = vcombine.high %v3293, %v3293
        %v3921 = vunpack.c.l.s4 1983009808
        %v3922 = vunpack.c.0.s8 %v3921
        %v3923 = vlaneseq
        %v3924 = vshrl.u32 %v3923, 7
        %v3925 = vsub.s32 %v3922, %v3924
        %v3926 = vrot.slane %v3293, %v3925
        %v3928 = vunpack.c.l.s4 1983009808
        %v3929 = vunpack.c.0.s8 %v3928
        %v3930 = vlaneseq
        %v3931 = vshrl.u32 %v3930, 7
        %v3932 = vsub.s32 %v3929, %v3931
        %v3933 = vrot.slane %v3919, %v3932
        %v3934 = vcombine.high %v3926, %v3926
        %v3935 = vcombine.high %v3933, %v3933
        %v3936 = vcombine.high %v3294, %v3294
        %v3938 = vunpack.c.l.s4 1983009808
        %v3939 = vunpack.c.0.s8 %v3938
        %v3940 = vlaneseq
        %v3941 = vshrl.u32 %v3940, 7
        %v3942 = vsub.s32 %v3939, %v3941
        %v3943 = vrot.slane %v3294, %v3942
        %v3945 = vunpack.c.l.s4 1983009808
        %v3946 = vunpack.c.0.s8 %v3945
        %v3947 = vlaneseq
        %v3948 = vshrl.u32 %v3947, 7
        %v3949 = vsub.s32 %v3946, %v3948
        %v3950 = vrot.slane %v3936, %v3949
        %v3951 = vcombine.high %v3943, %v3943
        %v3952 = vcombine.high %v3950, %v3950
        %v3953 = vcombine.high %v3295, %v3295
        %v3955 = vunpack.c.l.s4 1983009808
        %v3956 = vunpack.c.0.s8 %v3955
        %v3957 = vlaneseq
        %v3958 = vshrl.u32 %v3957, 7
        %v3959 = vsub.s32 %v3956, %v3958
        %v3960 = vrot.slane %v3295, %v3959
        %v3962 = vunpack.c.l.s4 1983009808
        %v3963 = vunpack.c.0.s8 %v3962
        %v3964 = vlaneseq
        %v3965 = vshrl.u32 %v3964, 7
        %v3966 = vsub.s32 %v3963, %v3965
        %v3967 = vrot.slane %v3953, %v3966
        %v3968 = vcombine.high %v3960, %v3960
        %v3969 = vcombine.high %v3967, %v3967
        %v3970 = vcombine.high %v3296, %v3296
        %v3972 = vunpack.c.l.s4 1983009808
        %v3973 = vunpack.c.0.s8 %v3972
        %v3974 = vlaneseq
        %v3975 = vshrl.u32 %v3974, 7
        %v3976 = vsub.s32 %v3973, %v3975
        %v3977 = vrot.slane %v3296, %v3976
        %v3979 = vunpack.c.l.s4 1983009808
        %v3980 = vunpack.c.0.s8 %v3979
        %v3981 = vlaneseq
        %v3982 = vshrl.u32 %v3981, 7
        %v3983 = vsub.s32 %v3980, %v3982
        %v3984 = vrot.slane %v3970, %v3983
        %v3985 = vcombine.high %v3977, %v3977
        %v3986 = vcombine.high %v3984, %v3984
        %v3987 = vcombine.high %v3297, %v3297
        %v3989 = vunpack.c.l.s4 1983009808
        %v3990 = vunpack.c.0.s8 %v3989
        %v3991 = vlaneseq
        %v3992 = vshrl.u32 %v3991, 7
        %v3993 = vsub.s32 %v3990, %v3992
        %v3994 = vrot.slane %v3297, %v3993
        %v3996 = vunpack.c.l.s4 1983009808
        %v3997 = vunpack.c.0.s8 %v3996
        %v3998 = vlaneseq
        %v3999 = vshrl.u32 %v3998, 7
        %v4000 = vsub.s32 %v3997, %v3999
        %v4001 = vrot.slane %v3987, %v4000
        %v4002 = vcombine.high %v3994, %v3994
        %v4003 = vcombine.high %v4001, %v4001
        %v4004 = vcombine.high %v3298, %v3298
        %v4006 = vunpack.c.l.s4 1983009808
        %v4007 = vunpack.c.0.s8 %v4006
        %v4008 = vlaneseq
        %v4009 = vshrl.u32 %v4008, 7
        %v4010 = vsub.s32 %v4007, %v4009
        %v4011 = vrot.slane %v3298, %v4010
        %v4013 = vunpack.c.l.s4 1983009808
        %v4014 = vunpack.c.0.s8 %v4013
        %v4015 = vlaneseq
        %v4016 = vshrl.u32 %v4015, 7
        %v4017 = vsub.s32 %v4014, %v4016
        %v4018 = vrot.slane %v4004, %v4017
        %v4019 = vcombine.high %v4011, %v4011
        %v4020 = vcombine.high %v4018, %v4018
        %v4022 = vunpack.c.l.s4 1983009808
        %v4023 = vunpack.c.0.s8 %v4022
        %v4024 = vlaneseq
        %v4025 = vshrl.u32 %v4024, 7
        %v4026 = vsub.s32 %v4023, %v4025
        %v4027 = vrot.slane %v3299, %v4026
        %v4028 = vcombine.high %v4027, %v4027
        %v4029 = vcombine.low %v3348, %v3356
        %v4030 = vcombine.low %v3355, %v3357
        %v4032 = vunpack.c.l.s4 1983009808
        %v4033 = vunpack.c.0.s8 %v4032
        %v4034 = vlaneseq
        %v4035 = vshrl.u32 %v4034, 7
        %v4036 = vsub.s32 %v4033, %v4035
        %v4037 = vrot.slane %v4029, %v4036
        %v4039 = vunpack.c.l.s4 1983009808
        %v4040 = vunpack.c.0.s8 %v4039
        %v4041 = vlaneseq
        %v4042 = vshrl.u32 %v4041, 7
        %v4043 = vsub.s32 %v4040, %v4042
        %v4044 = vrot.slane %v4030, %v4043
        %v4045 = vcombine.low %v4037, %v4044
        %v4046 = vcombine.low %v3365, %v3373
        %v4047 = vcombine.low %v3372, %v3374
        %v4049 = vunpack.c.l.s4 1983009808
        %v4050 = vunpack.c.0.s8 %v4049
        %v4051 = vlaneseq
        %v4052 = vshrl.u32 %v4051, 7
        %v4053 = vsub.s32 %v4050, %v4052
        %v4054 = vrot.slane %v4046, %v4053
        %v4056 = vunpack.c.l.s4 1983009808
        %v4057 = vunpack.c.0.s8 %v4056
        %v4058 = vlaneseq
        %v4059 = vshrl.u32 %v4058, 7
        %v4060 = vsub.s32 %v4057, %v4059
        %v4061 = vrot.slane %v4047, %v4060
        %v4062 = vcombine.low %v4054, %v4061
        %v4064 = vunpack.c.l.s4 1983009808
        %v4065 = vunpack.c.0.s8 %v4064
        %v4066 = vlaneseq
        %v4067 = vshrl.u32 %v4066, 7
        %v4068 = vsub.s32 %v4065, %v4067
        %v4069 = vrot.slane %v3382, %v4068
        %v4070 = vcombine.low %v3390, %v3389
        %v4071 = vcombine.low %v3391, %v3399
        %v4073 = vunpack.c.l.s4 1983009808
        %v4074 = vunpack.c.0.s8 %v4073
        %v4075 = vlaneseq
        %v4076 = vshrl.u32 %v4075, 7
        %v4077 = vsub.s32 %v4074, %v4076
        %v4078 = vrot.slane %v4070, %v4077
        %v4080 = vunpack.c.l.s4 1983009808
        %v4081 = vunpack.c.0.s8 %v4080
        %v4082 = vlaneseq
        %v4083 = vshrl.u32 %v4082, 7
        %v4084 = vsub.s32 %v4081, %v4083
        %v4085 = vrot.slane %v4071, %v4084
        %v4086 = vcombine.low %v4078, %v4085
        %v4087 = vcombine.low %v3407, %v3406
        %v4088 = vcombine.low %v3408, %v3416
        %v4090 = vunpack.c.l.s4 1983009808
        %v4091 = vunpack.c.0.s8 %v4090
        %v4092 = vlaneseq
        %v4093 = vshrl.u32 %v4092, 7
        %v4094 = vsub.s32 %v4091, %v4093
        %v4095 = vrot.slane %v4087, %v4094
        %v4097 = vunpack.c.l.s4 1983009808
        %v4098 = vunpack.c.0.s8 %v4097
        %v4099 = vlaneseq
        %v4100 = vshrl.u32 %v4099, 7
        %v4101 = vsub.s32 %v4098, %v4100
        %v4102 = vrot.slane %v4088, %v4101
        %v4103 = vcombine.low %v4095, %v4102
        %v4105 = vunpack.c.l.s4 1983009808
        %v4106 = vunpack.c.0.s8 %v4105
        %v4107 = vlaneseq
        %v4108 = vshrl.u32 %v4107, 7
        %v4109 = vsub.s32 %v4106, %v4108
        %v4110 = vrot.slane %v3424, %v4109
        %v4111 = vcombine.low %v3423, %v3425
        %v4112 = vcombine.low %v3433, %v3441
        %v4114 = vunpack.c.l.s4 1983009808
        %v4115 = vunpack.c.0.s8 %v4114
        %v4116 = vlaneseq
        %v4117 = vshrl.u32 %v4116, 7
        %v4118 = vsub.s32 %v4115, %v4117
        %v4119 = vrot.slane %v4111, %v4118
        %v4121 = vunpack.c.l.s4 1983009808
        %v4122 = vunpack.c.0.s8 %v4121
        %v4123 = vlaneseq
        %v4124 = vshrl.u32 %v4123, 7
        %v4125 = vsub.s32 %v4122, %v4124
        %v4126 = vrot.slane %v4112, %v4125
        %v4127 = vcombine.low %v4119, %v4126
        %v4128 = vcombine.low %v3440, %v3442
        %v4129 = vcombine.low %v3450, %v3458
        %v4131 = vunpack.c.l.s4 1983009808
        %v4132 = vunpack.c.0.s8 %v4131
        %v4133 = vlaneseq
        %v4134 = vshrl.u32 %v4133, 7
        %v4135 = vsub.s32 %v4132, %v4134
        %v4136 = vrot.slane %v4128, %v4135
        %v4138 = vunpack.c.l.s4 1983009808
        %v4139 = vunpack.c.0.s8 %v4138
        %v4140 = vlaneseq
        %v4141 = vshrl.u32 %v4140, 7
        %v4142 = vsub.s32 %v4139, %v4141
        %v4143 = vrot.slane %v4129, %v4142
        %v4144 = vcombine.low %v4136, %v4143
        %v4146 = vunpack.c.l.s4 1983009808
        %v4147 = vunpack.c.0.s8 %v4146
        %v4148 = vlaneseq
        %v4149 = vshrl.u32 %v4148, 7
        %v4150 = vsub.s32 %v4147, %v4149
        %v4151 = vrot.slane %v3457, %v4150
        %v4152 = vcombine.low %v3459, %v3467
        %v4153 = vcombine.low %v3475, %v3474
        %v4155 = vunpack.c.l.s4 1983009808
        %v4156 = vunpack.c.0.s8 %v4155
        %v4157 = vlaneseq
        %v4158 = vshrl.u32 %v4157, 7
        %v4159 = vsub.s32 %v4156, %v4158
        %v4160 = vrot.slane %v4152, %v4159
        %v4162 = vunpack.c.l.s4 1983009808
        %v4163 = vunpack.c.0.s8 %v4162
        %v4164 = vlaneseq
        %v4165 = vshrl.u32 %v4164, 7
        %v4166 = vsub.s32 %v4163, %v4165
        %v4167 = vrot.slane %v4153, %v4166
        %v4168 = vcombine.low %v4160, %v4167
        %v4169 = vcombine.low %v3476, %v3484
        %v4170 = vcombine.low %v3492, %v3491
        %v4172 = vunpack.c.l.s4 1983009808
        %v4173 = vunpack.c.0.s8 %v4172
        %v4174 = vlaneseq
        %v4175 = vshrl.u32 %v4174, 7
        %v4176 = vsub.s32 %v4173, %v4175
        %v4177 = vrot.slane %v4169, %v4176
        %v4179 = vunpack.c.l.s4 1983009808
        %v4180 = vunpack.c.0.s8 %v4179
        %v4181 = vlaneseq
        %v4182 = vshrl.u32 %v4181, 7
        %v4183 = vsub.s32 %v4180, %v4182
        %v4184 = vrot.slane %v4170, %v4183
        %v4185 = vcombine.low %v4177, %v4184
        %v4187 = vunpack.c.l.s4 1983009808
        %v4188 = vunpack.c.0.s8 %v4187
        %v4189 = vlaneseq
        %v4190 = vshrl.u32 %v4189, 7
        %v4191 = vsub.s32 %v4188, %v4190
        %v4192 = vrot.slane %v3493, %v4191
        %v4193 = vcombine.low %v3501, %v3509
        %v4194 = vcombine.low %v3508, %v3510
        %v4196 = vunpack.c.l.s4 1983009808
        %v4197 = vunpack.c.0.s8 %v4196
        %v4198 = vlaneseq
        %v4199 = vshrl.u32 %v4198, 7
        %v4200 = vsub.s32 %v4197, %v4199
        %v4201 = vrot.slane %v4193, %v4200
        %v4203 = vunpack.c.l.s4 1983009808
        %v4204 = vunpack.c.0.s8 %v4203
        %v4205 = vlaneseq
        %v4206 = vshrl.u32 %v4205, 7
        %v4207 = vsub.s32 %v4204, %v4206
        %v4208 = vrot.slane %v4194, %v4207
        %v4209 = vcombine.low %v4201, %v4208
        %v4210 = vcombine.low %v3518, %v3526
        %v4211 = vcombine.low %v3525, %v3527
        %v4213 = vunpack.c.l.s4 1983009808
        %v4214 = vunpack.c.0.s8 %v4213
        %v4215 = vlaneseq
        %v4216 = vshrl.u32 %v4215, 7
        %v4217 = vsub.s32 %v4214, %v4216
        %v4218 = vrot.slane %v4210, %v4217
        %v4220 = vunpack.c.l.s4 1983009808
        %v4221 = vunpack.c.0.s8 %v4220
        %v4222 = vlaneseq
        %v4223 = vshrl.u32 %v4222, 7
        %v4224 = vsub.s32 %v4221, %v4223
        %v4225 = vrot.slane %v4211, %v4224
        %v4226 = vcombine.low %v4218, %v4225
        %v4228 = vunpack.c.l.s4 1983009808
        %v4229 = vunpack.c.0.s8 %v4228
        %v4230 = vlaneseq
        %v4231 = vshrl.u32 %v4230, 7
        %v4232 = vsub.s32 %v4229, %v4231
        %v4233 = vrot.slane %v3535, %v4232
        %v4234 = vcombine.low %v3543, %v3542
        %v4235 = vcombine.low %v3544, %v3552
        %v4237 = vunpack.c.l.s4 1983009808
        %v4238 = vunpack.c.0.s8 %v4237
        %v4239 = vlaneseq
        %v4240 = vshrl.u32 %v4239, 7
        %v4241 = vsub.s32 %v4238, %v4240
        %v4242 = vrot.slane %v4234, %v4241
        %v4244 = vunpack.c.l.s4 1983009808
        %v4245 = vunpack.c.0.s8 %v4244
        %v4246 = vlaneseq
        %v4247 = vshrl.u32 %v4246, 7
        %v4248 = vsub.s32 %v4245, %v4247
        %v4249 = vrot.slane %v4235, %v4248
        %v4250 = vcombine.low %v4242, %v4249
        %v4251 = vcombine.low %v3560, %v3559
        %v4252 = vcombine.low %v3561, %v3569
        %v4254 = vunpack.c.l.s4 1983009808
        %v4255 = vunpack.c.0.s8 %v4254
        %v4256 = vlaneseq
        %v4257 = vshrl.u32 %v4256, 7
        %v4258 = vsub.s32 %v4255, %v4257
        %v4259 = vrot.slane %v4251, %v4258
        %v4261 = vunpack.c.l.s4 1983009808
        %v4262 = vunpack.c.0.s8 %v4261
        %v4263 = vlaneseq
        %v4264 = vshrl.u32 %v4263, 7
        %v4265 = vsub.s32 %v4262, %v4264
        %v4266 = vrot.slane %v4252, %v4265
        %v4267 = vcombine.low %v4259, %v4266
        %v4269 = vunpack.c.l.s4 1983009808
        %v4270 = vunpack.c.0.s8 %v4269
        %v4271 = vlaneseq
        %v4272 = vshrl.u32 %v4271, 7
        %v4273 = vsub.s32 %v4270, %v4272
        %v4274 = vrot.slane %v3577, %v4273
        %v4275 = vcombine.low %v3576, %v3578
        %v4276 = vcombine.low %v3586, %v3594
        %v4278 = vunpack.c.l.s4 1983009808
        %v4279 = vunpack.c.0.s8 %v4278
        %v4280 = vlaneseq
        %v4281 = vshrl.u32 %v4280, 7
        %v4282 = vsub.s32 %v4279, %v4281
        %v4283 = vrot.slane %v4275, %v4282
        %v4285 = vunpack.c.l.s4 1983009808
        %v4286 = vunpack.c.0.s8 %v4285
        %v4287 = vlaneseq
        %v4288 = vshrl.u32 %v4287, 7
        %v4289 = vsub.s32 %v4286, %v4288
        %v4290 = vrot.slane %v4276, %v4289
        %v4291 = vcombine.low %v4283, %v4290
        %v4292 = vcombine.low %v3593, %v3595
        %v4293 = vcombine.low %v3603, %v3611
        %v4295 = vunpack.c.l.s4 1983009808
        %v4296 = vunpack.c.0.s8 %v4295
        %v4297 = vlaneseq
        %v4298 = vshrl.u32 %v4297, 7
        %v4299 = vsub.s32 %v4296, %v4298
        %v4300 = vrot.slane %v4292, %v4299
        %v4302 = vunpack.c.l.s4 1983009808
        %v4303 = vunpack.c.0.s8 %v4302
        %v4304 = vlaneseq
        %v4305 = vshrl.u32 %v4304, 7
        %v4306 = vsub.s32 %v4303, %v4305
        %v4307 = vrot.slane %v4293, %v4306
        %v4308 = vcombine.low %v4300, %v4307
        %v4310 = vunpack.c.l.s4 1983009808
        %v4311 = vunpack.c.0.s8 %v4310
        %v4312 = vlaneseq
        %v4313 = vshrl.u32 %v4312, 7
        %v4314 = vsub.s32 %v4311, %v4313
        %v4315 = vrot.slane %v3610, %v4314
        %v4316 = vcombine.low %v3612, %v3620
        %v4317 = vcombine.low %v3628, %v3627
        %v4319 = vunpack.c.l.s4 1983009808
        %v4320 = vunpack.c.0.s8 %v4319
        %v4321 = vlaneseq
        %v4322 = vshrl.u32 %v4321, 7
        %v4323 = vsub.s32 %v4320, %v4322
        %v4324 = vrot.slane %v4316, %v4323
        %v4326 = vunpack.c.l.s4 1983009808
        %v4327 = vunpack.c.0.s8 %v4326
        %v4328 = vlaneseq
        %v4329 = vshrl.u32 %v4328, 7
        %v4330 = vsub.s32 %v4327, %v4329
        %v4331 = vrot.slane %v4317, %v4330
        %v4332 = vcombine.low %v4324, %v4331
        %v4333 = vcombine.low %v3629, %v3637
        %v4334 = vcombine.low %v3645, %v3644
        %v4336 = vunpack.c.l.s4 1983009808
        %v4337 = vunpack.c.0.s8 %v4336
        %v4338 = vlaneseq
        %v4339 = vshrl.u32 %v4338, 7
        %v4340 = vsub.s32 %v4337, %v4339
        %v4341 = vrot.slane %v4333, %v4340
        %v4343 = vunpack.c.l.s4 1983009808
        %v4344 = vunpack.c.0.s8 %v4343
        %v4345 = vlaneseq
        %v4346 = vshrl.u32 %v4345, 7
        %v4347 = vsub.s32 %v4344, %v4346
        %v4348 = vrot.slane %v4334, %v4347
        %v4349 = vcombine.low %v4341, %v4348
        %v4351 = vunpack.c.l.s4 1983009808
        %v4352 = vunpack.c.0.s8 %v4351
        %v4353 = vlaneseq
        %v4354 = vshrl.u32 %v4353, 7
        %v4355 = vsub.s32 %v4352, %v4354
        %v4356 = vrot.slane %v3646, %v4355
        %v4357 = vcombine.low %v3654, %v3662
        %v4358 = vcombine.low %v3661, %v3663
        %v4360 = vunpack.c.l.s4 1983009808
        %v4361 = vunpack.c.0.s8 %v4360
        %v4362 = vlaneseq
        %v4363 = vshrl.u32 %v4362, 7
        %v4364 = vsub.s32 %v4361, %v4363
        %v4365 = vrot.slane %v4357, %v4364
        %v4367 = vunpack.c.l.s4 1983009808
        %v4368 = vunpack.c.0.s8 %v4367
        %v4369 = vlaneseq
        %v4370 = vshrl.u32 %v4369, 7
        %v4371 = vsub.s32 %v4368, %v4370
        %v4372 = vrot.slane %v4358, %v4371
        %v4373 = vcombine.low %v4365, %v4372
        %v4374 = vcombine.low %v3671, %v3679
        %v4375 = vcombine.low %v3678, %v3680
        %v4377 = vunpack.c.l.s4 1983009808
        %v4378 = vunpack.c.0.s8 %v4377
        %v4379 = vlaneseq
        %v4380 = vshrl.u32 %v4379, 7
        %v4381 = vsub.s32 %v4378, %v4380
        %v4382 = vrot.slane %v4374, %v4381
        %v4384 = vunpack.c.l.s4 1983009808
        %v4385 = vunpack.c.0.s8 %v4384
        %v4386 = vlaneseq
        %v4387 = vshrl.u32 %v4386, 7
        %v4388 = vsub.s32 %v4385, %v4387
        %v4389 = vrot.slane %v4375, %v4388
        %v4390 = vcombine.low %v4382, %v4389
        %v4392 = vunpack.c.l.s4 1983009808
        %v4393 = vunpack.c.0.s8 %v4392
        %v4394 = vlaneseq
        %v4395 = vshrl.u32 %v4394, 7
        %v4396 = vsub.s32 %v4393, %v4395
        %v4397 = vrot.slane %v3688, %v4396
        %v4398 = vcombine.low %v3696, %v3695
        %v4399 = vcombine.low %v3697, %v3705
        %v4401 = vunpack.c.l.s4 1983009808
        %v4402 = vunpack.c.0.s8 %v4401
        %v4403 = vlaneseq
        %v4404 = vshrl.u32 %v4403, 7
        %v4405 = vsub.s32 %v4402, %v4404
        %v4406 = vrot.slane %v4398, %v4405
        %v4408 = vunpack.c.l.s4 1983009808
        %v4409 = vunpack.c.0.s8 %v4408
        %v4410 = vlaneseq
        %v4411 = vshrl.u32 %v4410, 7
        %v4412 = vsub.s32 %v4409, %v4411
        %v4413 = vrot.slane %v4399, %v4412
        %v4414 = vcombine.low %v4406, %v4413
        %v4415 = vcombine.low %v3713, %v3712
        %v4416 = vcombine.low %v3714, %v3722
        %v4418 = vunpack.c.l.s4 1983009808
        %v4419 = vunpack.c.0.s8 %v4418
        %v4420 = vlaneseq
        %v4421 = vshrl.u32 %v4420, 7
        %v4422 = vsub.s32 %v4419, %v4421
        %v4423 = vrot.slane %v4415, %v4422
        %v4425 = vunpack.c.l.s4 1983009808
        %v4426 = vunpack.c.0.s8 %v4425
        %v4427 = vlaneseq
        %v4428 = vshrl.u32 %v4427, 7
        %v4429 = vsub.s32 %v4426, %v4428
        %v4430 = vrot.slane %v4416, %v4429
        %v4431 = vcombine.low %v4423, %v4430
        %v4433 = vunpack.c.l.s4 1983009808
        %v4434 = vunpack.c.0.s8 %v4433
        %v4435 = vlaneseq
        %v4436 = vshrl.u32 %v4435, 7
        %v4437 = vsub.s32 %v4434, %v4436
        %v4438 = vrot.slane %v3730, %v4437
        %v4439 = vcombine.low %v3729, %v3731
        %v4440 = vcombine.low %v3739, %v3747
        %v4442 = vunpack.c.l.s4 1983009808
        %v4443 = vunpack.c.0.s8 %v4442
        %v4444 = vlaneseq
        %v4445 = vshrl.u32 %v4444, 7
        %v4446 = vsub.s32 %v4443, %v4445
        %v4447 = vrot.slane %v4439, %v4446
        %v4449 = vunpack.c.l.s4 1983009808
        %v4450 = vunpack.c.0.s8 %v4449
        %v4451 = vlaneseq
        %v4452 = vshrl.u32 %v4451, 7
        %v4453 = vsub.s32 %v4450, %v4452
        %v4454 = vrot.slane %v4440, %v4453
        %v4455 = vcombine.low %v4447, %v4454
        %v4456 = vcombine.low %v3746, %v3748
        %v4457 = vcombine.low %v3756, %v3764
        %v4459 = vunpack.c.l.s4 1983009808
        %v4460 = vunpack.c.0.s8 %v4459
        %v4461 = vlaneseq
        %v4462 = vshrl.u32 %v4461, 7
        %v4463 = vsub.s32 %v4460, %v4462
        %v4464 = vrot.slane %v4456, %v4463
        %v4466 = vunpack.c.l.s4 1983009808
        %v4467 = vunpack.c.0.s8 %v4466
        %v4468 = vlaneseq
        %v4469 = vshrl.u32 %v4468, 7
        %v4470 = vsub.s32 %v4467, %v4469
        %v4471 = vrot.slane %v4457, %v4470
        %v4472 = vcombine.low %v4464, %v4471
        %v4474 = vunpack.c.l.s4 1983009808
        %v4475 = vunpack.c.0.s8 %v4474
        %v4476 = vlaneseq
        %v4477 = vshrl.u32 %v4476, 7
        %v4478 = vsub.s32 %v4475, %v4477
        %v4479 = vrot.slane %v3763, %v4478
        %v4480 = vcombine.low %v3765, %v3773
        %v4481 = vcombine.low %v3781, %v3780
        %v4483 = vunpack.c.l.s4 1983009808
        %v4484 = vunpack.c.0.s8 %v4483
        %v4485 = vlaneseq
        %v4486 = vshrl.u32 %v4485, 7
        %v4487 = vsub.s32 %v4484, %v4486
        %v4488 = vrot.slane %v4480, %v4487
        %v4490 = vunpack.c.l.s4 1983009808
        %v4491 = vunpack.c.0.s8 %v4490
        %v4492 = vlaneseq
        %v4493 = vshrl.u32 %v4492, 7
        %v4494 = vsub.s32 %v4491, %v4493
        %v4495 = vrot.slane %v4481, %v4494
        %v4496 = vcombine.low %v4488, %v4495
        %v4497 = vcombine.low %v3782, %v3790
        %v4498 = vcombine.low %v3798, %v3797
        %v4500 = vunpack.c.l.s4 1983009808
        %v4501 = vunpack.c.0.s8 %v4500
        %v4502 = vlaneseq
        %v4503 = vshrl.u32 %v4502, 7
        %v4504 = vsub.s32 %v4501, %v4503
        %v4505 = vrot.slane %v4497, %v4504
        %v4507 = vunpack.c.l.s4 1983009808
        %v4508 = vunpack.c.0.s8 %v4507
        %v4509 = vlaneseq
        %v4510 = vshrl.u32 %v4509, 7
        %v4511 = vsub.s32 %v4508, %v4510
        %v4512 = vrot.slane %v4498, %v4511
        %v4513 = vcombine.low %v4505, %v4512
        %v4515 = vunpack.c.l.s4 1983009808
        %v4516 = vunpack.c.0.s8 %v4515
        %v4517 = vlaneseq
        %v4518 = vshrl.u32 %v4517, 7
        %v4519 = vsub.s32 %v4516, %v4518
        %v4520 = vrot.slane %v3799, %v4519
        %v4521 = vcombine.low %v3807, %v3815
        %v4522 = vcombine.low %v3814, %v3816
        %v4524 = vunpack.c.l.s4 1983009808
        %v4525 = vunpack.c.0.s8 %v4524
        %v4526 = vlaneseq
        %v4527 = vshrl.u32 %v4526, 7
        %v4528 = vsub.s32 %v4525, %v4527
        %v4529 = vrot.slane %v4521, %v4528
        %v4531 = vunpack.c.l.s4 1983009808
        %v4532 = vunpack.c.0.s8 %v4531
        %v4533 = vlaneseq
        %v4534 = vshrl.u32 %v4533, 7
        %v4535 = vsub.s32 %v4532, %v4534
        %v4536 = vrot.slane %v4522, %v4535
        %v4537 = vcombine.low %v4529, %v4536
        %v4538 = vcombine.low %v3824, %v3832
        %v4539 = vcombine.low %v3831, %v3833
        %v4541 = vunpack.c.l.s4 1983009808
        %v4542 = vunpack.c.0.s8 %v4541
        %v4543 = vlaneseq
        %v4544 = vshrl.u32 %v4543, 7
        %v4545 = vsub.s32 %v4542, %v4544
        %v4546 = vrot.slane %v4538, %v4545
        %v4548 = vunpack.c.l.s4 1983009808
        %v4549 = vunpack.c.0.s8 %v4548
        %v4550 = vlaneseq
        %v4551 = vshrl.u32 %v4550, 7
        %v4552 = vsub.s32 %v4549, %v4551
        %v4553 = vrot.slane %v4539, %v4552
        %v4554 = vcombine.low %v4546, %v4553
        %v4556 = vunpack.c.l.s4 1983009808
        %v4557 = vunpack.c.0.s8 %v4556
        %v4558 = vlaneseq
        %v4559 = vshrl.u32 %v4558, 7
        %v4560 = vsub.s32 %v4557, %v4559
        %v4561 = vrot.slane %v3841, %v4560
        %v4562 = vcombine.low %v3849, %v3848
        %v4563 = vcombine.low %v3850, %v3858
        %v4565 = vunpack.c.l.s4 1983009808
        %v4566 = vunpack.c.0.s8 %v4565
        %v4567 = vlaneseq
        %v4568 = vshrl.u32 %v4567, 7
        %v4569 = vsub.s32 %v4566, %v4568
        %v4570 = vrot.slane %v4562, %v4569
        %v4572 = vunpack.c.l.s4 1983009808
        %v4573 = vunpack.c.0.s8 %v4572
        %v4574 = vlaneseq
        %v4575 = vshrl.u32 %v4574, 7
        %v4576 = vsub.s32 %v4573, %v4575
        %v4577 = vrot.slane %v4563, %v4576
        %v4578 = vcombine.low %v4570, %v4577
        %v4579 = vcombine.low %v3866, %v3865
        %v4580 = vcombine.low %v3867, %v3875
        %v4582 = vunpack.c.l.s4 1983009808
        %v4583 = vunpack.c.0.s8 %v4582
        %v4584 = vlaneseq
        %v4585 = vshrl.u32 %v4584, 7
        %v4586 = vsub.s32 %v4583, %v4585
        %v4587 = vrot.slane %v4579, %v4586
        %v4589 = vunpack.c.l.s4 1983009808
        %v4590 = vunpack.c.0.s8 %v4589
        %v4591 = vlaneseq
        %v4592 = vshrl.u32 %v4591, 7
        %v4593 = vsub.s32 %v4590, %v4592
        %v4594 = vrot.slane %v4580, %v4593
        %v4595 = vcombine.low %v4587, %v4594
        %v4597 = vunpack.c.l.s4 1983009808
        %v4598 = vunpack.c.0.s8 %v4597
        %v4599 = vlaneseq
        %v4600 = vshrl.u32 %v4599, 7
        %v4601 = vsub.s32 %v4598, %v4600
        %v4602 = vrot.slane %v3883, %v4601
        %v4603 = vcombine.low %v3882, %v3884
        %v4604 = vcombine.low %v3892, %v3900
        %v4606 = vunpack.c.l.s4 1983009808
        %v4607 = vunpack.c.0.s8 %v4606
        %v4608 = vlaneseq
        %v4609 = vshrl.u32 %v4608, 7
        %v4610 = vsub.s32 %v4607, %v4609
        %v4611 = vrot.slane %v4603, %v4610
        %v4613 = vunpack.c.l.s4 1983009808
        %v4614 = vunpack.c.0.s8 %v4613
        %v4615 = vlaneseq
        %v4616 = vshrl.u32 %v4615, 7
        %v4617 = vsub.s32 %v4614, %v4616
        %v4618 = vrot.slane %v4604, %v4617
        %v4619 = vcombine.low %v4611, %v4618
        %v4620 = vcombine.low %v3899, %v3901
        %v4621 = vcombine.low %v3909, %v3917
        %v4623 = vunpack.c.l.s4 1983009808
        %v4624 = vunpack.c.0.s8 %v4623
        %v4625 = vlaneseq
        %v4626 = vshrl.u32 %v4625, 7
        %v4627 = vsub.s32 %v4624, %v4626
        %v4628 = vrot.slane %v4620, %v4627
        %v4630 = vunpack.c.l.s4 1983009808
        %v4631 = vunpack.c.0.s8 %v4630
        %v4632 = vlaneseq
        %v4633 = vshrl.u32 %v4632, 7
        %v4634 = vsub.s32 %v4631, %v4633
        %v4635 = vrot.slane %v4621, %v4634
        %v4636 = vcombine.low %v4628, %v4635
        %v4638 = vunpack.c.l.s4 1983009808
        %v4639 = vunpack.c.0.s8 %v4638
        %v4640 = vlaneseq
        %v4641 = vshrl.u32 %v4640, 7
        %v4642 = vsub.s32 %v4639, %v4641
        %v4643 = vrot.slane %v3916, %v4642
        %v4644 = vcombine.low %v3918, %v3926
        %v4645 = vcombine.low %v3934, %v3933
        %v4647 = vunpack.c.l.s4 1983009808
        %v4648 = vunpack.c.0.s8 %v4647
        %v4649 = vlaneseq
        %v4650 = vshrl.u32 %v4649, 7
        %v4651 = vsub.s32 %v4648, %v4650
        %v4652 = vrot.slane %v4644, %v4651
        %v4654 = vunpack.c.l.s4 1983009808
        %v4655 = vunpack.c.0.s8 %v4654
        %v4656 = vlaneseq
        %v4657 = vshrl.u32 %v4656, 7
        %v4658 = vsub.s32 %v4655, %v4657
        %v4659 = vrot.slane %v4645, %v4658
        %v4660 = vcombine.low %v4652, %v4659
        %v4661 = vcombine.low %v3935, %v3943
        %v4662 = vcombine.low %v3951, %v3950
        %v4664 = vunpack.c.l.s4 1983009808
        %v4665 = vunpack.c.0.s8 %v4664
        %v4666 = vlaneseq
        %v4667 = vshrl.u32 %v4666, 7
        %v4668 = vsub.s32 %v4665, %v4667
        %v4669 = vrot.slane %v4661, %v4668
        %v4671 = vunpack.c.l.s4 1983009808
        %v4672 = vunpack.c.0.s8 %v4671
        %v4673 = vlaneseq
        %v4674 = vshrl.u32 %v4673, 7
        %v4675 = vsub.s32 %v4672, %v4674
        %v4676 = vrot.slane %v4662, %v4675
        %v4677 = vcombine.low %v4669, %v4676
        %v4679 = vunpack.c.l.s4 1983009808
        %v4680 = vunpack.c.0.s8 %v4679
        %v4681 = vlaneseq
        %v4682 = vshrl.u32 %v4681, 7
        %v4683 = vsub.s32 %v4680, %v4682
        %v4684 = vrot.slane %v3952, %v4683
        %v4685 = vcombine.low %v3960, %v3968
        %v4686 = vcombine.low %v3967, %v3969
        %v4688 = vunpack.c.l.s4 1983009808
        %v4689 = vunpack.c.0.s8 %v4688
        %v4690 = vlaneseq
        %v4691 = vshrl.u32 %v4690, 7
        %v4692 = vsub.s32 %v4689, %v4691
        %v4693 = vrot.slane %v4685, %v4692
        %v4695 = vunpack.c.l.s4 1983009808
        %v4696 = vunpack.c.0.s8 %v4695
        %v4697 = vlaneseq
        %v4698 = vshrl.u32 %v4697, 7
        %v4699 = vsub.s32 %v4696, %v4698
        %v4700 = vrot.slane %v4686, %v4699
        %v4701 = vcombine.low %v4693, %v4700
        %v4702 = vcombine.low %v3977, %v3985
        %v4703 = vcombine.low %v3984, %v3986
        %v4705 = vunpack.c.l.s4 1983009808
        %v4706 = vunpack.c.0.s8 %v4705
        %v4707 = vlaneseq
        %v4708 = vshrl.u32 %v4707, 7
        %v4709 = vsub.s32 %v4706, %v4708
        %v4710 = vrot.slane %v4702, %v4709
        %v4712 = vunpack.c.l.s4 1983009808
        %v4713 = vunpack.c.0.s8 %v4712
        %v4714 = vlaneseq
        %v4715 = vshrl.u32 %v4714, 7
        %v4716 = vsub.s32 %v4713, %v4715
        %v4717 = vrot.slane %v4703, %v4716
        %v4718 = vcombine.low %v4710, %v4717
        %v4720 = vunpack.c.l.s4 1983009808
        %v4721 = vunpack.c.0.s8 %v4720
        %v4722 = vlaneseq
        %v4723 = vshrl.u32 %v4722, 7
        %v4724 = vsub.s32 %v4721, %v4723
        %v4725 = vrot.slane %v3994, %v4724
        %v4726 = vcombine.low %v4002, %v4001
        %v4727 = vcombine.low %v4003, %v4011
        %v4729 = vunpack.c.l.s4 1983009808
        %v4730 = vunpack.c.0.s8 %v4729
        %v4731 = vlaneseq
        %v4732 = vshrl.u32 %v4731, 7
        %v4733 = vsub.s32 %v4730, %v4732
        %v4734 = vrot.slane %v4726, %v4733
        %v4736 = vunpack.c.l.s4 1983009808
        %v4737 = vunpack.c.0.s8 %v4736
        %v4738 = vlaneseq
        %v4739 = vshrl.u32 %v4738, 7
        %v4740 = vsub.s32 %v4737, %v4739
        %v4741 = vrot.slane %v4727, %v4740
        %v4742 = vcombine.low %v4734, %v4741
        %v4743 = vcombine.low %v4019, %v4018
        %v4744 = vcombine.low %v4020, %v4027
        %v4746 = vunpack.c.l.s4 1983009808
        %v4747 = vunpack.c.0.s8 %v4746
        %v4748 = vlaneseq
        %v4749 = vshrl.u32 %v4748, 7
        %v4750 = vsub.s32 %v4747, %v4749
        %v4751 = vrot.slane %v4743, %v4750
        %v4753 = vunpack.c.l.s4 1983009808
        %v4754 = vunpack.c.0.s8 %v4753
        %v4755 = vlaneseq
        %v4756 = vshrl.u32 %v4755, 7
        %v4757 = vsub.s32 %v4754, %v4756
        %v4758 = vrot.slane %v4744, %v4757
        %v4759 = vcombine.low %v4751, %v4758
        %v4761 = vunpack.c.l.s4 1983009808
        %v4762 = vunpack.c.0.s8 %v4761
        %v4763 = vlaneseq
        %v4764 = vshrl.u32 %v4763, 7
        %v4765 = vsub.s32 %v4762, %v4764
        %v4766 = vrot.slane %v4028, %v4765
        %vm4821 = vcmask 64512
        %4822 = vst.msk [vmem:[#allocation2] sm:$0xff] %vm4821, %v4045
        %4823 = vst.msk [vmem:[#allocation2 + $0x8] sm:$0xff] %vm4821, %v4062
        %vm4824 = vcmask 58368
        %4825 = vst.msk [vmem:[#allocation2 + $0x10] sm:$0x3] %vm4824, %v4069
        %4826 = vst.msk [vmem:[#allocation2 + $0x18] sm:$0xff] %vm4821, %v4086
        %4827 = vst.msk [vmem:[#allocation2 + $0x20] sm:$0xff] %vm4821, %v4103
        %4828 = vst.msk [vmem:[#allocation2 + $0x28] sm:$0x3] %vm4824, %v4110
        %4829 = vst.msk [vmem:[#allocation2 + $0x30] sm:$0xff] %vm4821, %v4127
        %4830 = vst.msk [vmem:[#allocation2 + $0x38] sm:$0xff] %vm4821, %v4144
        %4831 = vst.msk [vmem:[#allocation2 + $0x40] sm:$0x3] %vm4824, %v4151
        %4832 = vst.msk [vmem:[#allocation2 + $0x48] sm:$0xff] %vm4821, %v4168
        %4833 = vst.msk [vmem:[#allocation2 + $0x50] sm:$0xff] %vm4821, %v4185
        %4834 = vst.msk [vmem:[#allocation2 + $0x58] sm:$0x3] %vm4824, %v4192
        %4835 = vst.msk [vmem:[#allocation2 + $0x60] sm:$0xff] %vm4821, %v4209
        %4836 = vst.msk [vmem:[#allocation2 + $0x68] sm:$0xff] %vm4821, %v4226
        %4837 = vst.msk [vmem:[#allocation2 + $0x70] sm:$0x3] %vm4824, %v4233
        %4838 = vst.msk [vmem:[#allocation2 + $0x78] sm:$0xff] %vm4821, %v4250
        %4839 = vst.msk [vmem:[#allocation2 + $0x80] sm:$0xff] %vm4821, %v4267
        %4840 = vst.msk [vmem:[#allocation2 + $0x88] sm:$0x3] %vm4824, %v4274
        %4841 = vst.msk [vmem:[#allocation2 + $0x90] sm:$0xff] %vm4821, %v4291
        %4842 = vst.msk [vmem:[#allocation2 + $0x98] sm:$0xff] %vm4821, %v4308
        %4843 = vst.msk [vmem:[#allocation2 + $0xa0] sm:$0x3] %vm4824, %v4315
        %4844 = vst.msk [vmem:[#allocation2 + $0xa8] sm:$0xff] %vm4821, %v4332
        %4845 = vst.msk [vmem:[#allocation2 + $0xb0] sm:$0xff] %vm4821, %v4349
        %4846 = vst.msk [vmem:[#allocation2 + $0xb8] sm:$0x3] %vm4824, %v4356
        %4847 = vst.msk [vmem:[#allocation2 + $0xc0] sm:$0xff] %vm4821, %v4373
        %4848 = vst.msk [vmem:[#allocation2 + $0xc8] sm:$0xff] %vm4821, %v4390
        %4849 = vst.msk [vmem:[#allocation2 + $0xd0] sm:$0x3] %vm4824, %v4397
        %4850 = vst.msk [vmem:[#allocation2 + $0xd8] sm:$0xff] %vm4821, %v4414
        %4851 = vst.msk [vmem:[#allocation2 + $0xe0] sm:$0xff] %vm4821, %v4431
        %4852 = vst.msk [vmem:[#allocation2 + $0xe8] sm:$0x3] %vm4824, %v4438
        %4853 = vst.msk [vmem:[#allocation2 + $0xf0] sm:$0xff] %vm4821, %v4455
        %4854 = vst.msk [vmem:[#allocation2 + $0xf8] sm:$0xff] %vm4821, %v4472
        %4855 = vst.msk [vmem:[#allocation2 + $0x100] sm:$0x3] %vm4824, %v4479
        %4856 = vst.msk [vmem:[#allocation2 + $0x108] sm:$0xff] %vm4821, %v4496
        %4857 = vst.msk [vmem:[#allocation2 + $0x110] sm:$0xff] %vm4821, %v4513
        %4858 = vst.msk [vmem:[#allocation2 + $0x118] sm:$0x3] %vm4824, %v4520
        %4859 = vst.msk [vmem:[#allocation2 + $0x120] sm:$0xff] %vm4821, %v4537
        %4860 = vst.msk [vmem:[#allocation2 + $0x128] sm:$0xff] %vm4821, %v4554
        %4861 = vst.msk [vmem:[#allocation2 + $0x130] sm:$0x3] %vm4824, %v4561
        %4862 = vst.msk [vmem:[#allocation2 + $0x138] sm:$0xff] %vm4821, %v4578
        %4863 = vst.msk [vmem:[#allocation2 + $0x140] sm:$0xff] %vm4821, %v4595
        %4864 = vst.msk [vmem:[#allocation2 + $0x148] sm:$0x3] %vm4824, %v4602
        %4865 = vst.msk [vmem:[#allocation2 + $0x150] sm:$0xff] %vm4821, %v4619
        %4866 = vst.msk [vmem:[#allocation2 + $0x158] sm:$0xff] %vm4821, %v4636
        %4867 = vst.msk [vmem:[#allocation2 + $0x160] sm:$0x3] %vm4824, %v4643
        %4868 = vst.msk [vmem:[#allocation2 + $0x168] sm:$0xff] %vm4821, %v4660
        %4869 = vst.msk [vmem:[#allocation2 + $0x170] sm:$0xff] %vm4821, %v4677
        %4870 = vst.msk [vmem:[#allocation2 + $0x178] sm:$0x3] %vm4824, %v4684
        %4871 = vst.msk [vmem:[#allocation2 + $0x180] sm:$0xff] %vm4821, %v4701
        %4872 = vst.msk [vmem:[#allocation2 + $0x188] sm:$0xff] %vm4821, %v4718
        %4873 = vst.msk [vmem:[#allocation2 + $0x190] sm:$0x3] %vm4824, %v4725
        %4874 = vst.msk [vmem:[#allocation2 + $0x198] sm:$0xff] %vm4821, %v4742
        %4875 = vst.msk [vmem:[#allocation2 + $0x1a0] sm:$0xff] %vm4821, %v4759
        %4876 = vst.msk [vmem:[#allocation2 + $0x1a8] sm:$0x3] %vm4824, %v4766
        %vm4877 = vcmask 57344
        %4878 = vst.msk [vmem:[#allocation2] sm:$0x1] %vm4877, 0.0
        %4879 = vst.msk [vmem:[#allocation2 + $0x18] sm:$0x1] %vm4877, 0.0
        %4880 = vst.msk [vmem:[#allocation2 + $0x30] sm:$0x1] %vm4877, 0.0
        %4881 = vst.msk [vmem:[#allocation2 + $0x48] sm:$0x1] %vm4877, 0.0
        %4882 = vst.msk [vmem:[#allocation2 + $0x60] sm:$0x1] %vm4877, 0.0
        %4883 = vst.msk [vmem:[#allocation2 + $0x78] sm:$0x1] %vm4877, 0.0
        %4884 = vst.msk [vmem:[#allocation2 + $0x90] sm:$0x1] %vm4877, 0.0
        %4885 = vst.msk [vmem:[#allocation2 + $0xa8] sm:$0x1] %vm4877, 0.0
        %4886 = vst.msk [vmem:[#allocation2 + $0xc0] sm:$0x1] %vm4877, 0.0
        %4887 = vst.msk [vmem:[#allocation2 + $0xd8] sm:$0x1] %vm4877, 0.0
        %4888 = vst.msk [vmem:[#allocation2 + $0xf0] sm:$0x1] %vm4877, 0.0
        %4889 = vst.msk [vmem:[#allocation2 + $0x108] sm:$0x1] %vm4877, 0.0
        %4890 = vst.msk [vmem:[#allocation2 + $0x120] sm:$0x1] %vm4877, 0.0
        %4891 = vst.msk [vmem:[#allocation2 + $0x138] sm:$0x1] %vm4877, 0.0
        %4892 = vst.msk [vmem:[#allocation2 + $0x150] sm:$0x1] %vm4877, 0.0
        %4893 = vst.msk [vmem:[#allocation2 + $0x168] sm:$0x1] %vm4877, 0.0
        %4894 = vst.msk [vmem:[#allocation2 + $0x180] sm:$0x1] %vm4877, 0.0
        %4895 = vst.msk [vmem:[#allocation2 + $0x198] sm:$0x1] %vm4877, 0.0
        %4896 = vst.msk [vmem:[#allocation2 + $0x11] sm:$0x1] %vm4877, 0.0
        %4897 = vst.msk [vmem:[#allocation2 + $0x29] sm:$0x1] %vm4877, 0.0
        %4898 = vst.msk [vmem:[#allocation2 + $0x41] sm:$0x1] %vm4877, 0.0
        %4899 = vst.msk [vmem:[#allocation2 + $0x59] sm:$0x1] %vm4877, 0.0
        %4900 = vst.msk [vmem:[#allocation2 + $0x71] sm:$0x1] %vm4877, 0.0
        %4901 = vst.msk [vmem:[#allocation2 + $0x89] sm:$0x1] %vm4877, 0.0
        %4902 = vst.msk [vmem:[#allocation2 + $0xa1] sm:$0x1] %vm4877, 0.0
        %4903 = vst.msk [vmem:[#allocation2 + $0xb9] sm:$0x1] %vm4877, 0.0
        %4904 = vst.msk [vmem:[#allocation2 + $0xd1] sm:$0x1] %vm4877, 0.0
        %4905 = vst.msk [vmem:[#allocation2 + $0xe9] sm:$0x1] %vm4877, 0.0
        %4906 = vst.msk [vmem:[#allocation2 + $0x101] sm:$0x1] %vm4877, 0.0
        %4907 = vst.msk [vmem:[#allocation2 + $0x119] sm:$0x1] %vm4877, 0.0
        %4908 = vst.msk [vmem:[#allocation2 + $0x131] sm:$0x1] %vm4877, 0.0
        %4909 = vst.msk [vmem:[#allocation2 + $0x149] sm:$0x1] %vm4877, 0.0
        %4910 = vst.msk [vmem:[#allocation2 + $0x161] sm:$0x1] %vm4877, 0.0
        %4911 = vst.msk [vmem:[#allocation2 + $0x179] sm:$0x1] %vm4877, 0.0
        %4912 = vst.msk [vmem:[#allocation2 + $0x191] sm:$0x1] %vm4877, 0.0
        %4913 = vst.msk [vmem:[#allocation2 + $0x1a9] sm:$0x1] %vm4877, 0.0
        %p4914 = scmp.eq.s32.totalorder %s31, 0
        // Predicated region
        $region61: #{tpu_custom_call.1} parent=59 // pred_check
          %p4915 = pneg %p4914
        $region62: #{tpu_custom_call.1} parent=59 // pred_check_branch
          %4917 = sbr.rel (%p4915) target = $region64
        $region63: #{tpu_custom_call.1} parent=59 // pred_region
          %4918 = vst.msk [vmem:[#allocation2] sm:$0xff] %vm4821, 0.0
          %4919 = vst.msk [vmem:[#allocation2 + $0x8] sm:$0xff] %vm4821, 0.0
          %4920 = vst.msk [vmem:[#allocation2 + $0x10] sm:$0x3] %vm4824, 0.0
          %s4921 = scalar_lea.vmem [#allocation2], 408
          %4922 = vst.msk [vmem:[%s4921] sm:$0xff] %vm4821, 0.0
          %4923 = vst.msk [vmem:[%s4921 + $0x8] sm:$0xff] %vm4821, 0.0
          %4924 = vst.msk [vmem:[%s4921 + $0x10] sm:$0x3] %vm4824, 0.0
        $region64: #{tpu_custom_call.1} parent=59 // pred_fallthru
          _
        %v4925 = vld [vmem:[%s4] sm:$0xff]
        %v4926 = vld [vmem:[%s4 + $0x8] sm:$0x1]
        %v4927 = vld [vmem:[#allocation2] sm:$0xff]
        %v4928 = vld [vmem:[#allocation2 + $0x8] sm:$0xff]
        %v4929 = vld [vmem:[#allocation2 + $0x18] sm:$0xff]
        %v4930 = vld [vmem:[#allocation2 + $0x20] sm:$0xff]
        %v4931 = vld [vmem:[#allocation2 + $0x30] sm:$0xff]
        %v4932 = vld [vmem:[#allocation2 + $0x38] sm:$0xff]
        %v4933 = vld [vmem:[#allocation2 + $0x48] sm:$0xff]
        %v4934 = vld [vmem:[#allocation2 + $0x50] sm:$0xff]
        %v4935 = vld [vmem:[#allocation2 + $0x60] sm:$0xff]
        %v4936 = vld [vmem:[#allocation2 + $0x68] sm:$0xff]
        %v4937 = vld [vmem:[#allocation2 + $0x78] sm:$0xff]
        %v4938 = vld [vmem:[#allocation2 + $0x80] sm:$0xff]
        %v4939 = vld [vmem:[#allocation2 + $0x90] sm:$0xff]
        %v4940 = vld [vmem:[#allocation2 + $0x98] sm:$0xff]
        %v4941 = vld [vmem:[#allocation2 + $0xa8] sm:$0xff]
        %v4942 = vld [vmem:[#allocation2 + $0xb0] sm:$0xff]
        %v4943 = vld [vmem:[#allocation2 + $0xc0] sm:$0xff]
        %v4944 = vld [vmem:[#allocation2 + $0xc8] sm:$0xff]
        %v4945 = vld [vmem:[#allocation2 + $0xd8] sm:$0xff]
        %v4946 = vld [vmem:[#allocation2 + $0xe0] sm:$0xff]
        %v4947 = vld [vmem:[#allocation2 + $0xf0] sm:$0xff]
        %v4948 = vld [vmem:[#allocation2 + $0xf8] sm:$0xff]
        %v4949 = vld [vmem:[#allocation2 + $0x108] sm:$0xff]
        %v4950 = vld [vmem:[#allocation2 + $0x110] sm:$0xff]
        %v4951 = vld [vmem:[#allocation2 + $0x120] sm:$0xff]
        %v4952 = vld [vmem:[#allocation2 + $0x128] sm:$0xff]
        %v4953 = vld [vmem:[#allocation2 + $0x138] sm:$0xff]
        %v4954 = vld [vmem:[#allocation2 + $0x140] sm:$0xff]
        %v4955 = vld [vmem:[#allocation2 + $0x150] sm:$0xff]
        %v4956 = vld [vmem:[#allocation2 + $0x158] sm:$0xff]
        %v4957 = vld [vmem:[#allocation2 + $0x168] sm:$0xff]
        %v4958 = vld [vmem:[#allocation2 + $0x170] sm:$0xff]
        %v4959 = vlaneseq
        %v4960 = vshrl.u32 %v4959, 7
        %v4961 = vsub.s32 0, %v4960
        %v4962 = vrot.slane %v4925, %v4961
        %v4963 = vmul.f32 %v4927, %v4962
        %v4964 = vmul.f32 %v4928, %v4962
        %v4965 = vmul.f32 %v4929, %v4962
        %v4966 = vmul.f32 %v4930, %v4962
        %v4967 = vmul.f32 %v4931, %v4962
        %v4968 = vmul.f32 %v4932, %v4962
        %v4969 = vmul.f32 %v4933, %v4962
        %v4970 = vmul.f32 %v4934, %v4962
        %v4971 = vmul.f32 %v4935, %v4962
        %v4972 = vmul.f32 %v4936, %v4962
        %v4973 = vmul.f32 %v4937, %v4962
        %v4974 = vmul.f32 %v4938, %v4962
        %v4975 = vmul.f32 %v4939, %v4962
        %v4976 = vmul.f32 %v4940, %v4962
        %v4977 = vmul.f32 %v4941, %v4962
        %v4978 = vmul.f32 %v4942, %v4962
        %v4979 = vmul.f32 %v4943, %v4962
        %v4980 = vmul.f32 %v4944, %v4962
        %v4981 = vmul.f32 %v4945, %v4962
        %v4982 = vmul.f32 %v4946, %v4962
        %v4983 = vmul.f32 %v4947, %v4962
        %v4984 = vmul.f32 %v4948, %v4962
        %v4985 = vmul.f32 %v4949, %v4962
        %v4986 = vmul.f32 %v4950, %v4962
        %v4987 = vmul.f32 %v4951, %v4962
        %v4988 = vmul.f32 %v4952, %v4962
        %v4989 = vmul.f32 %v4953, %v4962
        %v4990 = vmul.f32 %v4954, %v4962
        %v4991 = vmul.f32 %v4955, %v4962
        %v4992 = vmul.f32 %v4956, %v4962
        %v4993 = vmul.f32 %v4957, %v4962
        %v4994 = vmul.f32 %v4958, %v4962
        %v4995 = vadd.f32 %v4963, 0.0
        %v4996 = vadd.f32 %v4964, 0.0
        %v4997 = vadd.f32 %v4965, 0.0
        %v4998 = vadd.f32 %v4966, 0.0
        %v4999 = vadd.f32 %v4967, 0.0
        %v5000 = vadd.f32 %v4968, 0.0
        %v5001 = vadd.f32 %v4969, 0.0
        %v5002 = vadd.f32 %v4970, 0.0
        %v5003 = vadd.f32 %v4971, 0.0
        %v5004 = vadd.f32 %v4972, 0.0
        %v5005 = vadd.f32 %v4973, 0.0
        %v5006 = vadd.f32 %v4974, 0.0
        %v5007 = vadd.f32 %v4975, 0.0
        %v5008 = vadd.f32 %v4976, 0.0
        %v5009 = vadd.f32 %v4977, 0.0
        %v5010 = vadd.f32 %v4978, 0.0
        %v5011 = vadd.f32 %v4979, 0.0
        %v5012 = vadd.f32 %v4980, 0.0
        %v5013 = vadd.f32 %v4981, 0.0
        %v5014 = vadd.f32 %v4982, 0.0
        %v5015 = vadd.f32 %v4983, 0.0
        %v5016 = vadd.f32 %v4984, 0.0
        %v5017 = vadd.f32 %v4985, 0.0
        %v5018 = vadd.f32 %v4986, 0.0
        %v5019 = vadd.f32 %v4987, 0.0
        %v5020 = vadd.f32 %v4988, 0.0
        %v5021 = vadd.f32 %v4989, 0.0
        %v5022 = vadd.f32 %v4990, 0.0
        %v5023 = vadd.f32 %v4991, 0.0
        %v5024 = vadd.f32 %v4992, 0.0
        %v5025 = vadd.f32 %v4993, 0.0
        %v5026 = vadd.f32 %v4994, 0.0
        %v5027 = vld [vmem:[#allocation2 + $0x1] sm:$0xff]
        %v5028 = vld [vmem:[#allocation2 + $0x9] sm:$0xff]
        %v5029 = vld [vmem:[#allocation2 + $0x19] sm:$0xff]
        %v5030 = vld [vmem:[#allocation2 + $0x21] sm:$0xff]
        %v5031 = vld [vmem:[#allocation2 + $0x31] sm:$0xff]
        %v5032 = vld [vmem:[#allocation2 + $0x39] sm:$0xff]
        %v5033 = vld [vmem:[#allocation2 + $0x49] sm:$0xff]
        %v5034 = vld [vmem:[#allocation2 + $0x51] sm:$0xff]
        %v5035 = vld [vmem:[#allocation2 + $0x61] sm:$0xff]
        %v5036 = vld [vmem:[#allocation2 + $0x69] sm:$0xff]
        %v5037 = vld [vmem:[#allocation2 + $0x79] sm:$0xff]
        %v5038 = vld [vmem:[#allocation2 + $0x81] sm:$0xff]
        %v5039 = vld [vmem:[#allocation2 + $0x91] sm:$0xff]
        %v5040 = vld [vmem:[#allocation2 + $0x99] sm:$0xff]
        %v5041 = vld [vmem:[#allocation2 + $0xa9] sm:$0xff]
        %v5042 = vld [vmem:[#allocation2 + $0xb1] sm:$0xff]
        %v5043 = vld [vmem:[#allocation2 + $0xc1] sm:$0xff]
        %v5044 = vld [vmem:[#allocation2 + $0xc9] sm:$0xff]
        %v5045 = vld [vmem:[#allocation2 + $0xd9] sm:$0xff]
        %v5046 = vld [vmem:[#allocation2 + $0xe1] sm:$0xff]
        %v5047 = vld [vmem:[#allocation2 + $0xf1] sm:$0xff]
        %v5048 = vld [vmem:[#allocation2 + $0xf9] sm:$0xff]
        %v5049 = vld [vmem:[#allocation2 + $0x109] sm:$0xff]
        %v5050 = vld [vmem:[#allocation2 + $0x111] sm:$0xff]
        %v5051 = vld [vmem:[#allocation2 + $0x121] sm:$0xff]
        %v5052 = vld [vmem:[#allocation2 + $0x129] sm:$0xff]
        %v5053 = vld [vmem:[#allocation2 + $0x139] sm:$0xff]
        %v5054 = vld [vmem:[#allocation2 + $0x141] sm:$0xff]
        %v5055 = vld [vmem:[#allocation2 + $0x151] sm:$0xff]
        %v5056 = vld [vmem:[#allocation2 + $0x159] sm:$0xff]
        %v5057 = vld [vmem:[#allocation2 + $0x169] sm:$0xff]
        %v5058 = vld [vmem:[#allocation2 + $0x171] sm:$0xff]
        %v5059 = vlaneseq
        %v5060 = vshrl.u32 %v5059, 7
        %v5061 = vsub.s32 1, %v5060
        %v5062 = vrot.slane %v4925, %v5061
        %v5063 = vmul.f32 %v5027, %v5062
        %v5064 = vmul.f32 %v5028, %v5062
        %v5065 = vmul.f32 %v5029, %v5062
        %v5066 = vmul.f32 %v5030, %v5062
        %v5067 = vmul.f32 %v5031, %v5062
        %v5068 = vmul.f32 %v5032, %v5062
        %v5069 = vmul.f32 %v5033, %v5062
        %v5070 = vmul.f32 %v5034, %v5062
        %v5071 = vmul.f32 %v5035, %v5062
        %v5072 = vmul.f32 %v5036, %v5062
        %v5073 = vmul.f32 %v5037, %v5062
        %v5074 = vmul.f32 %v5038, %v5062
        %v5075 = vmul.f32 %v5039, %v5062
        %v5076 = vmul.f32 %v5040, %v5062
        %v5077 = vmul.f32 %v5041, %v5062
        %v5078 = vmul.f32 %v5042, %v5062
        %v5079 = vmul.f32 %v5043, %v5062
        %v5080 = vmul.f32 %v5044, %v5062
        %v5081 = vmul.f32 %v5045, %v5062
        %v5082 = vmul.f32 %v5046, %v5062
        %v5083 = vmul.f32 %v5047, %v5062
        %v5084 = vmul.f32 %v5048, %v5062
        %v5085 = vmul.f32 %v5049, %v5062
        %v5086 = vmul.f32 %v5050, %v5062
        %v5087 = vmul.f32 %v5051, %v5062
        %v5088 = vmul.f32 %v5052, %v5062
        %v5089 = vmul.f32 %v5053, %v5062
        %v5090 = vmul.f32 %v5054, %v5062
        %v5091 = vmul.f32 %v5055, %v5062
        %v5092 = vmul.f32 %v5056, %v5062
        %v5093 = vmul.f32 %v5057, %v5062
        %v5094 = vmul.f32 %v5058, %v5062
        %v5095 = vadd.f32 %v4995, %v5063
        %v5096 = vadd.f32 %v4996, %v5064
        %v5097 = vadd.f32 %v4997, %v5065
        %v5098 = vadd.f32 %v4998, %v5066
        %v5099 = vadd.f32 %v4999, %v5067
        %v5100 = vadd.f32 %v5000, %v5068
        %v5101 = vadd.f32 %v5001, %v5069
        %v5102 = vadd.f32 %v5002, %v5070
        %v5103 = vadd.f32 %v5003, %v5071
        %v5104 = vadd.f32 %v5004, %v5072
        %v5105 = vadd.f32 %v5005, %v5073
        %v5106 = vadd.f32 %v5006, %v5074
        %v5107 = vadd.f32 %v5007, %v5075
        %v5108 = vadd.f32 %v5008, %v5076
        %v5109 = vadd.f32 %v5009, %v5077
        %v5110 = vadd.f32 %v5010, %v5078
        %v5111 = vadd.f32 %v5011, %v5079
        %v5112 = vadd.f32 %v5012, %v5080
        %v5113 = vadd.f32 %v5013, %v5081
        %v5114 = vadd.f32 %v5014, %v5082
        %v5115 = vadd.f32 %v5015, %v5083
        %v5116 = vadd.f32 %v5016, %v5084
        %v5117 = vadd.f32 %v5017, %v5085
        %v5118 = vadd.f32 %v5018, %v5086
        %v5119 = vadd.f32 %v5019, %v5087
        %v5120 = vadd.f32 %v5020, %v5088
        %v5121 = vadd.f32 %v5021, %v5089
        %v5122 = vadd.f32 %v5022, %v5090
        %v5123 = vadd.f32 %v5023, %v5091
        %v5124 = vadd.f32 %v5024, %v5092
        %v5125 = vadd.f32 %v5025, %v5093
        %v5126 = vadd.f32 %v5026, %v5094
        %v5127 = vld [vmem:[#allocation2 + $0x2] sm:$0xff]
        %v5128 = vld [vmem:[#allocation2 + $0xa] sm:$0xff]
        %v5129 = vld [vmem:[#allocation2 + $0x1a] sm:$0xff]
        %v5130 = vld [vmem:[#allocation2 + $0x22] sm:$0xff]
        %v5131 = vld [vmem:[#allocation2 + $0x32] sm:$0xff]
        %v5132 = vld [vmem:[#allocation2 + $0x3a] sm:$0xff]
        %v5133 = vld [vmem:[#allocation2 + $0x4a] sm:$0xff]
        %v5134 = vld [vmem:[#allocation2 + $0x52] sm:$0xff]
        %v5135 = vld [vmem:[#allocation2 + $0x62] sm:$0xff]
        %v5136 = vld [vmem:[#allocation2 + $0x6a] sm:$0xff]
        %v5137 = vld [vmem:[#allocation2 + $0x7a] sm:$0xff]
        %v5138 = vld [vmem:[#allocation2 + $0x82] sm:$0xff]
        %v5139 = vld [vmem:[#allocation2 + $0x92] sm:$0xff]
        %v5140 = vld [vmem:[#allocation2 + $0x9a] sm:$0xff]
        %v5141 = vld [vmem:[#allocation2 + $0xaa] sm:$0xff]
        %v5142 = vld [vmem:[#allocation2 + $0xb2] sm:$0xff]
        %v5143 = vld [vmem:[#allocation2 + $0xc2] sm:$0xff]
        %v5144 = vld [vmem:[#allocation2 + $0xca] sm:$0xff]
        %v5145 = vld [vmem:[#allocation2 + $0xda] sm:$0xff]
        %v5146 = vld [vmem:[#allocation2 + $0xe2] sm:$0xff]
        %v5147 = vld [vmem:[#allocation2 + $0xf2] sm:$0xff]
        %v5148 = vld [vmem:[#allocation2 + $0xfa] sm:$0xff]
        %v5149 = vld [vmem:[#allocation2 + $0x10a] sm:$0xff]
        %v5150 = vld [vmem:[#allocation2 + $0x112] sm:$0xff]
        %v5151 = vld [vmem:[#allocation2 + $0x122] sm:$0xff]
        %v5152 = vld [vmem:[#allocation2 + $0x12a] sm:$0xff]
        %v5153 = vld [vmem:[#allocation2 + $0x13a] sm:$0xff]
        %v5154 = vld [vmem:[#allocation2 + $0x142] sm:$0xff]
        %v5155 = vld [vmem:[#allocation2 + $0x152] sm:$0xff]
        %v5156 = vld [vmem:[#allocation2 + $0x15a] sm:$0xff]
        %v5157 = vld [vmem:[#allocation2 + $0x16a] sm:$0xff]
        %v5158 = vld [vmem:[#allocation2 + $0x172] sm:$0xff]
        %v5159 = vlaneseq
        %v5160 = vshrl.u32 %v5159, 7
        %v5161 = vsub.s32 2, %v5160
        %v5162 = vrot.slane %v4925, %v5161
        %v5163 = vmul.f32 %v5127, %v5162
        %v5164 = vmul.f32 %v5128, %v5162
        %v5165 = vmul.f32 %v5129, %v5162
        %v5166 = vmul.f32 %v5130, %v5162
        %v5167 = vmul.f32 %v5131, %v5162
        %v5168 = vmul.f32 %v5132, %v5162
        %v5169 = vmul.f32 %v5133, %v5162
        %v5170 = vmul.f32 %v5134, %v5162
        %v5171 = vmul.f32 %v5135, %v5162
        %v5172 = vmul.f32 %v5136, %v5162
        %v5173 = vmul.f32 %v5137, %v5162
        %v5174 = vmul.f32 %v5138, %v5162
        %v5175 = vmul.f32 %v5139, %v5162
        %v5176 = vmul.f32 %v5140, %v5162
        %v5177 = vmul.f32 %v5141, %v5162
        %v5178 = vmul.f32 %v5142, %v5162
        %v5179 = vmul.f32 %v5143, %v5162
        %v5180 = vmul.f32 %v5144, %v5162
        %v5181 = vmul.f32 %v5145, %v5162
        %v5182 = vmul.f32 %v5146, %v5162
        %v5183 = vmul.f32 %v5147, %v5162
        %v5184 = vmul.f32 %v5148, %v5162
        %v5185 = vmul.f32 %v5149, %v5162
        %v5186 = vmul.f32 %v5150, %v5162
        %v5187 = vmul.f32 %v5151, %v5162
        %v5188 = vmul.f32 %v5152, %v5162
        %v5189 = vmul.f32 %v5153, %v5162
        %v5190 = vmul.f32 %v5154, %v5162
        %v5191 = vmul.f32 %v5155, %v5162
        %v5192 = vmul.f32 %v5156, %v5162
        %v5193 = vmul.f32 %v5157, %v5162
        %v5194 = vmul.f32 %v5158, %v5162
        %v5195 = vadd.f32 %v5095, %v5163
        %v5196 = vadd.f32 %v5096, %v5164
        %v5197 = vadd.f32 %v5097, %v5165
        %v5198 = vadd.f32 %v5098, %v5166
        %v5199 = vadd.f32 %v5099, %v5167
        %v5200 = vadd.f32 %v5100, %v5168
        %v5201 = vadd.f32 %v5101, %v5169
        %v5202 = vadd.f32 %v5102, %v5170
        %v5203 = vadd.f32 %v5103, %v5171
        %v5204 = vadd.f32 %v5104, %v5172
        %v5205 = vadd.f32 %v5105, %v5173
        %v5206 = vadd.f32 %v5106, %v5174
        %v5207 = vadd.f32 %v5107, %v5175
        %v5208 = vadd.f32 %v5108, %v5176
        %v5209 = vadd.f32 %v5109, %v5177
        %v5210 = vadd.f32 %v5110, %v5178
        %v5211 = vadd.f32 %v5111, %v5179
        %v5212 = vadd.f32 %v5112, %v5180
        %v5213 = vadd.f32 %v5113, %v5181
        %v5214 = vadd.f32 %v5114, %v5182
        %v5215 = vadd.f32 %v5115, %v5183
        %v5216 = vadd.f32 %v5116, %v5184
        %v5217 = vadd.f32 %v5117, %v5185
        %v5218 = vadd.f32 %v5118, %v5186
        %v5219 = vadd.f32 %v5119, %v5187
        %v5220 = vadd.f32 %v5120, %v5188
        %v5221 = vadd.f32 %v5121, %v5189
        %v5222 = vadd.f32 %v5122, %v5190
        %v5223 = vadd.f32 %v5123, %v5191
        %v5224 = vadd.f32 %v5124, %v5192
        %v5225 = vadd.f32 %v5125, %v5193
        %v5226 = vadd.f32 %v5126, %v5194
        %s5227 = scalar_lea.vmem [#allocation2], 24
        %v5228 = vld [vmem:[%s5227] sm:$0xff]
        %v5229 = vld [vmem:[%s5227 + $0x8] sm:$0xff]
        %v5230 = vld [vmem:[%s5227 + $0x18] sm:$0xff]
        %v5231 = vld [vmem:[%s5227 + $0x20] sm:$0xff]
        %v5232 = vld [vmem:[%s5227 + $0x30] sm:$0xff]
        %v5233 = vld [vmem:[%s5227 + $0x38] sm:$0xff]
        %v5234 = vld [vmem:[%s5227 + $0x48] sm:$0xff]
        %v5235 = vld [vmem:[%s5227 + $0x50] sm:$0xff]
        %v5236 = vld [vmem:[%s5227 + $0x60] sm:$0xff]
        %v5237 = vld [vmem:[%s5227 + $0x68] sm:$0xff]
        %v5238 = vld [vmem:[%s5227 + $0x78] sm:$0xff]
        %v5239 = vld [vmem:[%s5227 + $0x80] sm:$0xff]
        %v5240 = vld [vmem:[%s5227 + $0x90] sm:$0xff]
        %v5241 = vld [vmem:[%s5227 + $0x98] sm:$0xff]
        %v5242 = vld [vmem:[%s5227 + $0xa8] sm:$0xff]
        %v5243 = vld [vmem:[%s5227 + $0xb0] sm:$0xff]
        %v5244 = vld [vmem:[%s5227 + $0xc0] sm:$0xff]
        %v5245 = vld [vmem:[%s5227 + $0xc8] sm:$0xff]
        %v5246 = vld [vmem:[%s5227 + $0xd8] sm:$0xff]
        %v5247 = vld [vmem:[%s5227 + $0xe0] sm:$0xff]
        %v5248 = vld [vmem:[%s5227 + $0xf0] sm:$0xff]
        %v5249 = vld [vmem:[%s5227 + $0xf8] sm:$0xff]
        %v5250 = vld [vmem:[%s5227 + $0x108] sm:$0xff]
        %v5251 = vld [vmem:[%s5227 + $0x110] sm:$0xff]
        %v5252 = vld [vmem:[%s5227 + $0x120] sm:$0xff]
        %v5253 = vld [vmem:[%s5227 + $0x128] sm:$0xff]
        %v5254 = vld [vmem:[%s5227 + $0x138] sm:$0xff]
        %v5255 = vld [vmem:[%s5227 + $0x140] sm:$0xff]
        %v5256 = vld [vmem:[%s5227 + $0x150] sm:$0xff]
        %v5257 = vld [vmem:[%s5227 + $0x158] sm:$0xff]
        %v5258 = vld [vmem:[%s5227 + $0x168] sm:$0xff]
        %v5259 = vld [vmem:[%s5227 + $0x170] sm:$0xff]
        %v5260 = vlaneseq
        %v5261 = vshrl.u32 %v5260, 7
        %v5262 = vsub.s32 3, %v5261
        %v5263 = vrot.slane %v4925, %v5262
        %v5264 = vmul.f32 %v5228, %v5263
        %v5265 = vmul.f32 %v5229, %v5263
        %v5266 = vmul.f32 %v5230, %v5263
        %v5267 = vmul.f32 %v5231, %v5263
        %v5268 = vmul.f32 %v5232, %v5263
        %v5269 = vmul.f32 %v5233, %v5263
        %v5270 = vmul.f32 %v5234, %v5263
        %v5271 = vmul.f32 %v5235, %v5263
        %v5272 = vmul.f32 %v5236, %v5263
        %v5273 = vmul.f32 %v5237, %v5263
        %v5274 = vmul.f32 %v5238, %v5263
        %v5275 = vmul.f32 %v5239, %v5263
        %v5276 = vmul.f32 %v5240, %v5263
        %v5277 = vmul.f32 %v5241, %v5263
        %v5278 = vmul.f32 %v5242, %v5263
        %v5279 = vmul.f32 %v5243, %v5263
        %v5280 = vmul.f32 %v5244, %v5263
        %v5281 = vmul.f32 %v5245, %v5263
        %v5282 = vmul.f32 %v5246, %v5263
        %v5283 = vmul.f32 %v5247, %v5263
        %v5284 = vmul.f32 %v5248, %v5263
        %v5285 = vmul.f32 %v5249, %v5263
        %v5286 = vmul.f32 %v5250, %v5263
        %v5287 = vmul.f32 %v5251, %v5263
        %v5288 = vmul.f32 %v5252, %v5263
        %v5289 = vmul.f32 %v5253, %v5263
        %v5290 = vmul.f32 %v5254, %v5263
        %v5291 = vmul.f32 %v5255, %v5263
        %v5292 = vmul.f32 %v5256, %v5263
        %v5293 = vmul.f32 %v5257, %v5263
        %v5294 = vmul.f32 %v5258, %v5263
        %v5295 = vmul.f32 %v5259, %v5263
        %v5296 = vadd.f32 %v5195, %v5264
        %v5297 = vadd.f32 %v5196, %v5265
        %v5298 = vadd.f32 %v5197, %v5266
        %v5299 = vadd.f32 %v5198, %v5267
        %v5300 = vadd.f32 %v5199, %v5268
        %v5301 = vadd.f32 %v5200, %v5269
        %v5302 = vadd.f32 %v5201, %v5270
        %v5303 = vadd.f32 %v5202, %v5271
        %v5304 = vadd.f32 %v5203, %v5272
        %v5305 = vadd.f32 %v5204, %v5273
        %v5306 = vadd.f32 %v5205, %v5274
        %v5307 = vadd.f32 %v5206, %v5275
        %v5308 = vadd.f32 %v5207, %v5276
        %v5309 = vadd.f32 %v5208, %v5277
        %v5310 = vadd.f32 %v5209, %v5278
        %v5311 = vadd.f32 %v5210, %v5279
        %v5312 = vadd.f32 %v5211, %v5280
        %v5313 = vadd.f32 %v5212, %v5281
        %v5314 = vadd.f32 %v5213, %v5282
        %v5315 = vadd.f32 %v5214, %v5283
        %v5316 = vadd.f32 %v5215, %v5284
        %v5317 = vadd.f32 %v5216, %v5285
        %v5318 = vadd.f32 %v5217, %v5286
        %v5319 = vadd.f32 %v5218, %v5287
        %v5320 = vadd.f32 %v5219, %v5288
        %v5321 = vadd.f32 %v5220, %v5289
        %v5322 = vadd.f32 %v5221, %v5290
        %v5323 = vadd.f32 %v5222, %v5291
        %v5324 = vadd.f32 %v5223, %v5292
        %v5325 = vadd.f32 %v5224, %v5293
        %v5326 = vadd.f32 %v5225, %v5294
        %v5327 = vadd.f32 %v5226, %v5295
        %v5328 = vld [vmem:[%s5227 + $0x1] sm:$0xff]
        %v5329 = vld [vmem:[%s5227 + $0x9] sm:$0xff]
        %v5330 = vld [vmem:[%s5227 + $0x19] sm:$0xff]
        %v5331 = vld [vmem:[%s5227 + $0x21] sm:$0xff]
        %v5332 = vld [vmem:[%s5227 + $0x31] sm:$0xff]
        %v5333 = vld [vmem:[%s5227 + $0x39] sm:$0xff]
        %v5334 = vld [vmem:[%s5227 + $0x49] sm:$0xff]
        %v5335 = vld [vmem:[%s5227 + $0x51] sm:$0xff]
        %v5336 = vld [vmem:[%s5227 + $0x61] sm:$0xff]
        %v5337 = vld [vmem:[%s5227 + $0x69] sm:$0xff]
        %v5338 = vld [vmem:[%s5227 + $0x79] sm:$0xff]
        %v5339 = vld [vmem:[%s5227 + $0x81] sm:$0xff]
        %v5340 = vld [vmem:[%s5227 + $0x91] sm:$0xff]
        %v5341 = vld [vmem:[%s5227 + $0x99] sm:$0xff]
        %v5342 = vld [vmem:[%s5227 + $0xa9] sm:$0xff]
        %v5343 = vld [vmem:[%s5227 + $0xb1] sm:$0xff]
        %v5344 = vld [vmem:[%s5227 + $0xc1] sm:$0xff]
        %v5345 = vld [vmem:[%s5227 + $0xc9] sm:$0xff]
        %v5346 = vld [vmem:[%s5227 + $0xd9] sm:$0xff]
        %v5347 = vld [vmem:[%s5227 + $0xe1] sm:$0xff]
        %v5348 = vld [vmem:[%s5227 + $0xf1] sm:$0xff]
        %v5349 = vld [vmem:[%s5227 + $0xf9] sm:$0xff]
        %v5350 = vld [vmem:[%s5227 + $0x109] sm:$0xff]
        %v5351 = vld [vmem:[%s5227 + $0x111] sm:$0xff]
        %v5352 = vld [vmem:[%s5227 + $0x121] sm:$0xff]
        %v5353 = vld [vmem:[%s5227 + $0x129] sm:$0xff]
        %v5354 = vld [vmem:[%s5227 + $0x139] sm:$0xff]
        %v5355 = vld [vmem:[%s5227 + $0x141] sm:$0xff]
        %v5356 = vld [vmem:[%s5227 + $0x151] sm:$0xff]
        %v5357 = vld [vmem:[%s5227 + $0x159] sm:$0xff]
        %v5358 = vld [vmem:[%s5227 + $0x169] sm:$0xff]
        %v5359 = vld [vmem:[%s5227 + $0x171] sm:$0xff]
        %v5360 = vlaneseq
        %v5361 = vshrl.u32 %v5360, 7
        %v5362 = vsub.s32 4, %v5361
        %v5363 = vrot.slane %v4925, %v5362
        %v5364 = vmul.f32 %v5328, %v5363
        %v5365 = vmul.f32 %v5329, %v5363
        %v5366 = vmul.f32 %v5330, %v5363
        %v5367 = vmul.f32 %v5331, %v5363
        %v5368 = vmul.f32 %v5332, %v5363
        %v5369 = vmul.f32 %v5333, %v5363
        %v5370 = vmul.f32 %v5334, %v5363
        %v5371 = vmul.f32 %v5335, %v5363
        %v5372 = vmul.f32 %v5336, %v5363
        %v5373 = vmul.f32 %v5337, %v5363
        %v5374 = vmul.f32 %v5338, %v5363
        %v5375 = vmul.f32 %v5339, %v5363
        %v5376 = vmul.f32 %v5340, %v5363
        %v5377 = vmul.f32 %v5341, %v5363
        %v5378 = vmul.f32 %v5342, %v5363
        %v5379 = vmul.f32 %v5343, %v5363
        %v5380 = vmul.f32 %v5344, %v5363
        %v5381 = vmul.f32 %v5345, %v5363
        %v5382 = vmul.f32 %v5346, %v5363
        %v5383 = vmul.f32 %v5347, %v5363
        %v5384 = vmul.f32 %v5348, %v5363
        %v5385 = vmul.f32 %v5349, %v5363
        %v5386 = vmul.f32 %v5350, %v5363
        %v5387 = vmul.f32 %v5351, %v5363
        %v5388 = vmul.f32 %v5352, %v5363
        %v5389 = vmul.f32 %v5353, %v5363
        %v5390 = vmul.f32 %v5354, %v5363
        %v5391 = vmul.f32 %v5355, %v5363
        %v5392 = vmul.f32 %v5356, %v5363
        %v5393 = vmul.f32 %v5357, %v5363
        %v5394 = vmul.f32 %v5358, %v5363
        %v5395 = vmul.f32 %v5359, %v5363
        %v5396 = vadd.f32 %v5296, %v5364
        %v5397 = vadd.f32 %v5297, %v5365
        %v5398 = vadd.f32 %v5298, %v5366
        %v5399 = vadd.f32 %v5299, %v5367
        %v5400 = vadd.f32 %v5300, %v5368
        %v5401 = vadd.f32 %v5301, %v5369
        %v5402 = vadd.f32 %v5302, %v5370
        %v5403 = vadd.f32 %v5303, %v5371
        %v5404 = vadd.f32 %v5304, %v5372
        %v5405 = vadd.f32 %v5305, %v5373
        %v5406 = vadd.f32 %v5306, %v5374
        %v5407 = vadd.f32 %v5307, %v5375
        %v5408 = vadd.f32 %v5308, %v5376
        %v5409 = vadd.f32 %v5309, %v5377
        %v5410 = vadd.f32 %v5310, %v5378
        %v5411 = vadd.f32 %v5311, %v5379
        %v5412 = vadd.f32 %v5312, %v5380
        %v5413 = vadd.f32 %v5313, %v5381
        %v5414 = vadd.f32 %v5314, %v5382
        %v5415 = vadd.f32 %v5315, %v5383
        %v5416 = vadd.f32 %v5316, %v5384
        %v5417 = vadd.f32 %v5317, %v5385
        %v5418 = vadd.f32 %v5318, %v5386
        %v5419 = vadd.f32 %v5319, %v5387
        %v5420 = vadd.f32 %v5320, %v5388
        %v5421 = vadd.f32 %v5321, %v5389
        %v5422 = vadd.f32 %v5322, %v5390
        %v5423 = vadd.f32 %v5323, %v5391
        %v5424 = vadd.f32 %v5324, %v5392
        %v5425 = vadd.f32 %v5325, %v5393
        %v5426 = vadd.f32 %v5326, %v5394
        %v5427 = vadd.f32 %v5327, %v5395
        %v5428 = vld [vmem:[%s5227 + $0x2] sm:$0xff]
        %v5429 = vld [vmem:[%s5227 + $0xa] sm:$0xff]
        %v5430 = vld [vmem:[%s5227 + $0x1a] sm:$0xff]
        %v5431 = vld [vmem:[%s5227 + $0x22] sm:$0xff]
        %v5432 = vld [vmem:[%s5227 + $0x32] sm:$0xff]
        %v5433 = vld [vmem:[%s5227 + $0x3a] sm:$0xff]
        %v5434 = vld [vmem:[%s5227 + $0x4a] sm:$0xff]
        %v5435 = vld [vmem:[%s5227 + $0x52] sm:$0xff]
        %v5436 = vld [vmem:[%s5227 + $0x62] sm:$0xff]
        %v5437 = vld [vmem:[%s5227 + $0x6a] sm:$0xff]
        %v5438 = vld [vmem:[%s5227 + $0x7a] sm:$0xff]
        %v5439 = vld [vmem:[%s5227 + $0x82] sm:$0xff]
        %v5440 = vld [vmem:[%s5227 + $0x92] sm:$0xff]
        %v5441 = vld [vmem:[%s5227 + $0x9a] sm:$0xff]
        %v5442 = vld [vmem:[%s5227 + $0xaa] sm:$0xff]
        %v5443 = vld [vmem:[%s5227 + $0xb2] sm:$0xff]
        %v5444 = vld [vmem:[%s5227 + $0xc2] sm:$0xff]
        %v5445 = vld [vmem:[%s5227 + $0xca] sm:$0xff]
        %v5446 = vld [vmem:[%s5227 + $0xda] sm:$0xff]
        %v5447 = vld [vmem:[%s5227 + $0xe2] sm:$0xff]
        %v5448 = vld [vmem:[%s5227 + $0xf2] sm:$0xff]
        %v5449 = vld [vmem:[%s5227 + $0xfa] sm:$0xff]
        %v5450 = vld [vmem:[%s5227 + $0x10a] sm:$0xff]
        %v5451 = vld [vmem:[%s5227 + $0x112] sm:$0xff]
        %v5452 = vld [vmem:[%s5227 + $0x122] sm:$0xff]
        %v5453 = vld [vmem:[%s5227 + $0x12a] sm:$0xff]
        %v5454 = vld [vmem:[%s5227 + $0x13a] sm:$0xff]
        %v5455 = vld [vmem:[%s5227 + $0x142] sm:$0xff]
        %v5456 = vld [vmem:[%s5227 + $0x152] sm:$0xff]
        %v5457 = vld [vmem:[%s5227 + $0x15a] sm:$0xff]
        %v5458 = vld [vmem:[%s5227 + $0x16a] sm:$0xff]
        %v5459 = vld [vmem:[%s5227 + $0x172] sm:$0xff]
        %v5460 = vlaneseq
        %v5461 = vshrl.u32 %v5460, 7
        %v5462 = vsub.s32 5, %v5461
        %v5463 = vrot.slane %v4925, %v5462
        %v5464 = vmul.f32 %v5428, %v5463
        %v5465 = vmul.f32 %v5429, %v5463
        %v5466 = vmul.f32 %v5430, %v5463
        %v5467 = vmul.f32 %v5431, %v5463
        %v5468 = vmul.f32 %v5432, %v5463
        %v5469 = vmul.f32 %v5433, %v5463
        %v5470 = vmul.f32 %v5434, %v5463
        %v5471 = vmul.f32 %v5435, %v5463
        %v5472 = vmul.f32 %v5436, %v5463
        %v5473 = vmul.f32 %v5437, %v5463
        %v5474 = vmul.f32 %v5438, %v5463
        %v5475 = vmul.f32 %v5439, %v5463
        %v5476 = vmul.f32 %v5440, %v5463
        %v5477 = vmul.f32 %v5441, %v5463
        %v5478 = vmul.f32 %v5442, %v5463
        %v5479 = vmul.f32 %v5443, %v5463
        %v5480 = vmul.f32 %v5444, %v5463
        %v5481 = vmul.f32 %v5445, %v5463
        %v5482 = vmul.f32 %v5446, %v5463
        %v5483 = vmul.f32 %v5447, %v5463
        %v5484 = vmul.f32 %v5448, %v5463
        %v5485 = vmul.f32 %v5449, %v5463
        %v5486 = vmul.f32 %v5450, %v5463
        %v5487 = vmul.f32 %v5451, %v5463
        %v5488 = vmul.f32 %v5452, %v5463
        %v5489 = vmul.f32 %v5453, %v5463
        %v5490 = vmul.f32 %v5454, %v5463
        %v5491 = vmul.f32 %v5455, %v5463
        %v5492 = vmul.f32 %v5456, %v5463
        %v5493 = vmul.f32 %v5457, %v5463
        %v5494 = vmul.f32 %v5458, %v5463
        %v5495 = vmul.f32 %v5459, %v5463
        %v5496 = vadd.f32 %v5396, %v5464
        %v5497 = vadd.f32 %v5397, %v5465
        %v5498 = vadd.f32 %v5398, %v5466
        %v5499 = vadd.f32 %v5399, %v5467
        %v5500 = vadd.f32 %v5400, %v5468
        %v5501 = vadd.f32 %v5401, %v5469
        %v5502 = vadd.f32 %v5402, %v5470
        %v5503 = vadd.f32 %v5403, %v5471
        %v5504 = vadd.f32 %v5404, %v5472
        %v5505 = vadd.f32 %v5405, %v5473
        %v5506 = vadd.f32 %v5406, %v5474
        %v5507 = vadd.f32 %v5407, %v5475
        %v5508 = vadd.f32 %v5408, %v5476
        %v5509 = vadd.f32 %v5409, %v5477
        %v5510 = vadd.f32 %v5410, %v5478
        %v5511 = vadd.f32 %v5411, %v5479
        %v5512 = vadd.f32 %v5412, %v5480
        %v5513 = vadd.f32 %v5413, %v5481
        %v5514 = vadd.f32 %v5414, %v5482
        %v5515 = vadd.f32 %v5415, %v5483
        %v5516 = vadd.f32 %v5416, %v5484
        %v5517 = vadd.f32 %v5417, %v5485
        %v5518 = vadd.f32 %v5418, %v5486
        %v5519 = vadd.f32 %v5419, %v5487
        %v5520 = vadd.f32 %v5420, %v5488
        %v5521 = vadd.f32 %v5421, %v5489
        %v5522 = vadd.f32 %v5422, %v5490
        %v5523 = vadd.f32 %v5423, %v5491
        %v5524 = vadd.f32 %v5424, %v5492
        %v5525 = vadd.f32 %v5425, %v5493
        %v5526 = vadd.f32 %v5426, %v5494
        %v5527 = vadd.f32 %v5427, %v5495
        %s5528 = scalar_lea.vmem [#allocation2], 48
        %v5529 = vld [vmem:[%s5528] sm:$0xff]
        %v5530 = vld [vmem:[%s5528 + $0x8] sm:$0xff]
        %v5531 = vld [vmem:[%s5528 + $0x18] sm:$0xff]
        %v5532 = vld [vmem:[%s5528 + $0x20] sm:$0xff]
        %v5533 = vld [vmem:[%s5528 + $0x30] sm:$0xff]
        %v5534 = vld [vmem:[%s5528 + $0x38] sm:$0xff]
        %v5535 = vld [vmem:[%s5528 + $0x48] sm:$0xff]
        %v5536 = vld [vmem:[%s5528 + $0x50] sm:$0xff]
        %v5537 = vld [vmem:[%s5528 + $0x60] sm:$0xff]
        %v5538 = vld [vmem:[%s5528 + $0x68] sm:$0xff]
        %v5539 = vld [vmem:[%s5528 + $0x78] sm:$0xff]
        %v5540 = vld [vmem:[%s5528 + $0x80] sm:$0xff]
        %v5541 = vld [vmem:[%s5528 + $0x90] sm:$0xff]
        %v5542 = vld [vmem:[%s5528 + $0x98] sm:$0xff]
        %v5543 = vld [vmem:[%s5528 + $0xa8] sm:$0xff]
        %v5544 = vld [vmem:[%s5528 + $0xb0] sm:$0xff]
        %v5545 = vld [vmem:[%s5528 + $0xc0] sm:$0xff]
        %v5546 = vld [vmem:[%s5528 + $0xc8] sm:$0xff]
        %v5547 = vld [vmem:[%s5528 + $0xd8] sm:$0xff]
        %v5548 = vld [vmem:[%s5528 + $0xe0] sm:$0xff]
        %v5549 = vld [vmem:[%s5528 + $0xf0] sm:$0xff]
        %v5550 = vld [vmem:[%s5528 + $0xf8] sm:$0xff]
        %v5551 = vld [vmem:[%s5528 + $0x108] sm:$0xff]
        %v5552 = vld [vmem:[%s5528 + $0x110] sm:$0xff]
        %v5553 = vld [vmem:[%s5528 + $0x120] sm:$0xff]
        %v5554 = vld [vmem:[%s5528 + $0x128] sm:$0xff]
        %v5555 = vld [vmem:[%s5528 + $0x138] sm:$0xff]
        %v5556 = vld [vmem:[%s5528 + $0x140] sm:$0xff]
        %v5557 = vld [vmem:[%s5528 + $0x150] sm:$0xff]
        %v5558 = vld [vmem:[%s5528 + $0x158] sm:$0xff]
        %v5559 = vld [vmem:[%s5528 + $0x168] sm:$0xff]
        %v5560 = vld [vmem:[%s5528 + $0x170] sm:$0xff]
        %v5561 = vlaneseq
        %v5562 = vshrl.u32 %v5561, 7
        %v5563 = vsub.s32 6, %v5562
        %v5564 = vrot.slane %v4925, %v5563
        %v5565 = vmul.f32 %v5529, %v5564
        %v5566 = vmul.f32 %v5530, %v5564
        %v5567 = vmul.f32 %v5531, %v5564
        %v5568 = vmul.f32 %v5532, %v5564
        %v5569 = vmul.f32 %v5533, %v5564
        %v5570 = vmul.f32 %v5534, %v5564
        %v5571 = vmul.f32 %v5535, %v5564
        %v5572 = vmul.f32 %v5536, %v5564
        %v5573 = vmul.f32 %v5537, %v5564
        %v5574 = vmul.f32 %v5538, %v5564
        %v5575 = vmul.f32 %v5539, %v5564
        %v5576 = vmul.f32 %v5540, %v5564
        %v5577 = vmul.f32 %v5541, %v5564
        %v5578 = vmul.f32 %v5542, %v5564
        %v5579 = vmul.f32 %v5543, %v5564
        %v5580 = vmul.f32 %v5544, %v5564
        %v5581 = vmul.f32 %v5545, %v5564
        %v5582 = vmul.f32 %v5546, %v5564
        %v5583 = vmul.f32 %v5547, %v5564
        %v5584 = vmul.f32 %v5548, %v5564
        %v5585 = vmul.f32 %v5549, %v5564
        %v5586 = vmul.f32 %v5550, %v5564
        %v5587 = vmul.f32 %v5551, %v5564
        %v5588 = vmul.f32 %v5552, %v5564
        %v5589 = vmul.f32 %v5553, %v5564
        %v5590 = vmul.f32 %v5554, %v5564
        %v5591 = vmul.f32 %v5555, %v5564
        %v5592 = vmul.f32 %v5556, %v5564
        %v5593 = vmul.f32 %v5557, %v5564
        %v5594 = vmul.f32 %v5558, %v5564
        %v5595 = vmul.f32 %v5559, %v5564
        %v5596 = vmul.f32 %v5560, %v5564
        %v5597 = vadd.f32 %v5496, %v5565
        %v5598 = vadd.f32 %v5497, %v5566
        %v5599 = vadd.f32 %v5498, %v5567
        %v5600 = vadd.f32 %v5499, %v5568
        %v5601 = vadd.f32 %v5500, %v5569
        %v5602 = vadd.f32 %v5501, %v5570
        %v5603 = vadd.f32 %v5502, %v5571
        %v5604 = vadd.f32 %v5503, %v5572
        %v5605 = vadd.f32 %v5504, %v5573
        %v5606 = vadd.f32 %v5505, %v5574
        %v5607 = vadd.f32 %v5506, %v5575
        %v5608 = vadd.f32 %v5507, %v5576
        %v5609 = vadd.f32 %v5508, %v5577
        %v5610 = vadd.f32 %v5509, %v5578
        %v5611 = vadd.f32 %v5510, %v5579
        %v5612 = vadd.f32 %v5511, %v5580
        %v5613 = vadd.f32 %v5512, %v5581
        %v5614 = vadd.f32 %v5513, %v5582
        %v5615 = vadd.f32 %v5514, %v5583
        %v5616 = vadd.f32 %v5515, %v5584
        %v5617 = vadd.f32 %v5516, %v5585
        %v5618 = vadd.f32 %v5517, %v5586
        %v5619 = vadd.f32 %v5518, %v5587
        %v5620 = vadd.f32 %v5519, %v5588
        %v5621 = vadd.f32 %v5520, %v5589
        %v5622 = vadd.f32 %v5521, %v5590
        %v5623 = vadd.f32 %v5522, %v5591
        %v5624 = vadd.f32 %v5523, %v5592
        %v5625 = vadd.f32 %v5524, %v5593
        %v5626 = vadd.f32 %v5525, %v5594
        %v5627 = vadd.f32 %v5526, %v5595
        %v5628 = vadd.f32 %v5527, %v5596
        %v5629 = vld [vmem:[%s5528 + $0x1] sm:$0xff]
        %v5630 = vld [vmem:[%s5528 + $0x9] sm:$0xff]
        %v5631 = vld [vmem:[%s5528 + $0x19] sm:$0xff]
        %v5632 = vld [vmem:[%s5528 + $0x21] sm:$0xff]
        %v5633 = vld [vmem:[%s5528 + $0x31] sm:$0xff]
        %v5634 = vld [vmem:[%s5528 + $0x39] sm:$0xff]
        %v5635 = vld [vmem:[%s5528 + $0x49] sm:$0xff]
        %v5636 = vld [vmem:[%s5528 + $0x51] sm:$0xff]
        %v5637 = vld [vmem:[%s5528 + $0x61] sm:$0xff]
        %v5638 = vld [vmem:[%s5528 + $0x69] sm:$0xff]
        %v5639 = vld [vmem:[%s5528 + $0x79] sm:$0xff]
        %v5640 = vld [vmem:[%s5528 + $0x81] sm:$0xff]
        %v5641 = vld [vmem:[%s5528 + $0x91] sm:$0xff]
        %v5642 = vld [vmem:[%s5528 + $0x99] sm:$0xff]
        %v5643 = vld [vmem:[%s5528 + $0xa9] sm:$0xff]
        %v5644 = vld [vmem:[%s5528 + $0xb1] sm:$0xff]
        %v5645 = vld [vmem:[%s5528 + $0xc1] sm:$0xff]
        %v5646 = vld [vmem:[%s5528 + $0xc9] sm:$0xff]
        %v5647 = vld [vmem:[%s5528 + $0xd9] sm:$0xff]
        %v5648 = vld [vmem:[%s5528 + $0xe1] sm:$0xff]
        %v5649 = vld [vmem:[%s5528 + $0xf1] sm:$0xff]
        %v5650 = vld [vmem:[%s5528 + $0xf9] sm:$0xff]
        %v5651 = vld [vmem:[%s5528 + $0x109] sm:$0xff]
        %v5652 = vld [vmem:[%s5528 + $0x111] sm:$0xff]
        %v5653 = vld [vmem:[%s5528 + $0x121] sm:$0xff]
        %v5654 = vld [vmem:[%s5528 + $0x129] sm:$0xff]
        %v5655 = vld [vmem:[%s5528 + $0x139] sm:$0xff]
        %v5656 = vld [vmem:[%s5528 + $0x141] sm:$0xff]
        %v5657 = vld [vmem:[%s5528 + $0x151] sm:$0xff]
        %v5658 = vld [vmem:[%s5528 + $0x159] sm:$0xff]
        %v5659 = vld [vmem:[%s5528 + $0x169] sm:$0xff]
        %v5660 = vld [vmem:[%s5528 + $0x171] sm:$0xff]
        %v5661 = vlaneseq
        %v5662 = vshrl.u32 %v5661, 7
        %v5663 = vsub.s32 7, %v5662
        %v5664 = vrot.slane %v4925, %v5663
        %v5665 = vmul.f32 %v5629, %v5664
        %v5666 = vmul.f32 %v5630, %v5664
        %v5667 = vmul.f32 %v5631, %v5664
        %v5668 = vmul.f32 %v5632, %v5664
        %v5669 = vmul.f32 %v5633, %v5664
        %v5670 = vmul.f32 %v5634, %v5664
        %v5671 = vmul.f32 %v5635, %v5664
        %v5672 = vmul.f32 %v5636, %v5664
        %v5673 = vmul.f32 %v5637, %v5664
        %v5674 = vmul.f32 %v5638, %v5664
        %v5675 = vmul.f32 %v5639, %v5664
        %v5676 = vmul.f32 %v5640, %v5664
        %v5677 = vmul.f32 %v5641, %v5664
        %v5678 = vmul.f32 %v5642, %v5664
        %v5679 = vmul.f32 %v5643, %v5664
        %v5680 = vmul.f32 %v5644, %v5664
        %v5681 = vmul.f32 %v5645, %v5664
        %v5682 = vmul.f32 %v5646, %v5664
        %v5683 = vmul.f32 %v5647, %v5664
        %v5684 = vmul.f32 %v5648, %v5664
        %v5685 = vmul.f32 %v5649, %v5664
        %v5686 = vmul.f32 %v5650, %v5664
        %v5687 = vmul.f32 %v5651, %v5664
        %v5688 = vmul.f32 %v5652, %v5664
        %v5689 = vmul.f32 %v5653, %v5664
        %v5690 = vmul.f32 %v5654, %v5664
        %v5691 = vmul.f32 %v5655, %v5664
        %v5692 = vmul.f32 %v5656, %v5664
        %v5693 = vmul.f32 %v5657, %v5664
        %v5694 = vmul.f32 %v5658, %v5664
        %v5695 = vmul.f32 %v5659, %v5664
        %v5696 = vmul.f32 %v5660, %v5664
        %v5697 = vadd.f32 %v5597, %v5665
        %v5698 = vadd.f32 %v5598, %v5666
        %v5699 = vadd.f32 %v5599, %v5667
        %v5700 = vadd.f32 %v5600, %v5668
        %v5701 = vadd.f32 %v5601, %v5669
        %v5702 = vadd.f32 %v5602, %v5670
        %v5703 = vadd.f32 %v5603, %v5671
        %v5704 = vadd.f32 %v5604, %v5672
        %v5705 = vadd.f32 %v5605, %v5673
        %v5706 = vadd.f32 %v5606, %v5674
        %v5707 = vadd.f32 %v5607, %v5675
        %v5708 = vadd.f32 %v5608, %v5676
        %v5709 = vadd.f32 %v5609, %v5677
        %v5710 = vadd.f32 %v5610, %v5678
        %v5711 = vadd.f32 %v5611, %v5679
        %v5712 = vadd.f32 %v5612, %v5680
        %v5713 = vadd.f32 %v5613, %v5681
        %v5714 = vadd.f32 %v5614, %v5682
        %v5715 = vadd.f32 %v5615, %v5683
        %v5716 = vadd.f32 %v5616, %v5684
        %v5717 = vadd.f32 %v5617, %v5685
        %v5718 = vadd.f32 %v5618, %v5686
        %v5719 = vadd.f32 %v5619, %v5687
        %v5720 = vadd.f32 %v5620, %v5688
        %v5721 = vadd.f32 %v5621, %v5689
        %v5722 = vadd.f32 %v5622, %v5690
        %v5723 = vadd.f32 %v5623, %v5691
        %v5724 = vadd.f32 %v5624, %v5692
        %v5725 = vadd.f32 %v5625, %v5693
        %v5726 = vadd.f32 %v5626, %v5694
        %v5727 = vadd.f32 %v5627, %v5695
        %v5728 = vadd.f32 %v5628, %v5696
        %v5729 = vld [vmem:[%s5528 + $0x2] sm:$0xff]
        %v5730 = vld [vmem:[%s5528 + $0xa] sm:$0xff]
        %v5731 = vld [vmem:[%s5528 + $0x1a] sm:$0xff]
        %v5732 = vld [vmem:[%s5528 + $0x22] sm:$0xff]
        %v5733 = vld [vmem:[%s5528 + $0x32] sm:$0xff]
        %v5734 = vld [vmem:[%s5528 + $0x3a] sm:$0xff]
        %v5735 = vld [vmem:[%s5528 + $0x4a] sm:$0xff]
        %v5736 = vld [vmem:[%s5528 + $0x52] sm:$0xff]
        %v5737 = vld [vmem:[%s5528 + $0x62] sm:$0xff]
        %v5738 = vld [vmem:[%s5528 + $0x6a] sm:$0xff]
        %v5739 = vld [vmem:[%s5528 + $0x7a] sm:$0xff]
        %v5740 = vld [vmem:[%s5528 + $0x82] sm:$0xff]
        %v5741 = vld [vmem:[%s5528 + $0x92] sm:$0xff]
        %v5742 = vld [vmem:[%s5528 + $0x9a] sm:$0xff]
        %v5743 = vld [vmem:[%s5528 + $0xaa] sm:$0xff]
        %v5744 = vld [vmem:[%s5528 + $0xb2] sm:$0xff]
        %v5745 = vld [vmem:[%s5528 + $0xc2] sm:$0xff]
        %v5746 = vld [vmem:[%s5528 + $0xca] sm:$0xff]
        %v5747 = vld [vmem:[%s5528 + $0xda] sm:$0xff]
        %v5748 = vld [vmem:[%s5528 + $0xe2] sm:$0xff]
        %v5749 = vld [vmem:[%s5528 + $0xf2] sm:$0xff]
        %v5750 = vld [vmem:[%s5528 + $0xfa] sm:$0xff]
        %v5751 = vld [vmem:[%s5528 + $0x10a] sm:$0xff]
        %v5752 = vld [vmem:[%s5528 + $0x112] sm:$0xff]
        %v5753 = vld [vmem:[%s5528 + $0x122] sm:$0xff]
        %v5754 = vld [vmem:[%s5528 + $0x12a] sm:$0xff]
        %v5755 = vld [vmem:[%s5528 + $0x13a] sm:$0xff]
        %v5756 = vld [vmem:[%s5528 + $0x142] sm:$0xff]
        %v5757 = vld [vmem:[%s5528 + $0x152] sm:$0xff]
        %v5758 = vld [vmem:[%s5528 + $0x15a] sm:$0xff]
        %v5759 = vld [vmem:[%s5528 + $0x16a] sm:$0xff]
        %v5760 = vld [vmem:[%s5528 + $0x172] sm:$0xff]
        %v5761 = vlaneseq
        %v5762 = vshrl.u32 %v5761, 7
        %v5763 = vsub.s32 0, %v5762
        %v5764 = vrot.slane %v4926, %v5763
        %v5765 = vmul.f32 %v5729, %v5764
        %v5766 = vmul.f32 %v5730, %v5764
        %v5767 = vmul.f32 %v5731, %v5764
        %v5768 = vmul.f32 %v5732, %v5764
        %v5769 = vmul.f32 %v5733, %v5764
        %v5770 = vmul.f32 %v5734, %v5764
        %v5771 = vmul.f32 %v5735, %v5764
        %v5772 = vmul.f32 %v5736, %v5764
        %v5773 = vmul.f32 %v5737, %v5764
        %v5774 = vmul.f32 %v5738, %v5764
        %v5775 = vmul.f32 %v5739, %v5764
        %v5776 = vmul.f32 %v5740, %v5764
        %v5777 = vmul.f32 %v5741, %v5764
        %v5778 = vmul.f32 %v5742, %v5764
        %v5779 = vmul.f32 %v5743, %v5764
        %v5780 = vmul.f32 %v5744, %v5764
        %v5781 = vmul.f32 %v5745, %v5764
        %v5782 = vmul.f32 %v5746, %v5764
        %v5783 = vmul.f32 %v5747, %v5764
        %v5784 = vmul.f32 %v5748, %v5764
        %v5785 = vmul.f32 %v5749, %v5764
        %v5786 = vmul.f32 %v5750, %v5764
        %v5787 = vmul.f32 %v5751, %v5764
        %v5788 = vmul.f32 %v5752, %v5764
        %v5789 = vmul.f32 %v5753, %v5764
        %v5790 = vmul.f32 %v5754, %v5764
        %v5791 = vmul.f32 %v5755, %v5764
        %v5792 = vmul.f32 %v5756, %v5764
        %v5793 = vmul.f32 %v5757, %v5764
        %v5794 = vmul.f32 %v5758, %v5764
        %v5795 = vmul.f32 %v5759, %v5764
        %v5796 = vmul.f32 %v5760, %v5764
        %v5797 = vadd.f32 %v5697, %v5765
        %v5798 = vadd.f32 %v5698, %v5766
        %v5799 = vadd.f32 %v5699, %v5767
        %v5800 = vadd.f32 %v5700, %v5768
        %v5801 = vadd.f32 %v5701, %v5769
        %v5802 = vadd.f32 %v5702, %v5770
        %v5803 = vadd.f32 %v5703, %v5771
        %v5804 = vadd.f32 %v5704, %v5772
        %v5805 = vadd.f32 %v5705, %v5773
        %v5806 = vadd.f32 %v5706, %v5774
        %v5807 = vadd.f32 %v5707, %v5775
        %v5808 = vadd.f32 %v5708, %v5776
        %v5809 = vadd.f32 %v5709, %v5777
        %v5810 = vadd.f32 %v5710, %v5778
        %v5811 = vadd.f32 %v5711, %v5779
        %v5812 = vadd.f32 %v5712, %v5780
        %v5813 = vadd.f32 %v5713, %v5781
        %v5814 = vadd.f32 %v5714, %v5782
        %v5815 = vadd.f32 %v5715, %v5783
        %v5816 = vadd.f32 %v5716, %v5784
        %v5817 = vadd.f32 %v5717, %v5785
        %v5818 = vadd.f32 %v5718, %v5786
        %v5819 = vadd.f32 %v5719, %v5787
        %v5820 = vadd.f32 %v5720, %v5788
        %v5821 = vadd.f32 %v5721, %v5789
        %v5822 = vadd.f32 %v5722, %v5790
        %v5823 = vadd.f32 %v5723, %v5791
        %v5824 = vadd.f32 %v5724, %v5792
        %v5825 = vadd.f32 %v5725, %v5793
        %v5826 = vadd.f32 %v5726, %v5794
        %v5827 = vadd.f32 %v5727, %v5795
        %v5828 = vadd.f32 %v5728, %v5796
        %v5829 = vld [vmem:[%s5] sm:$0x1]
        %v5831 = vlaneseq
        %v5832 = vshrl.u32 %v5831, 7
        %v5833 = vsub.s32 0, %v5832
        %v5834 = vrot.slane %v5829, %v5833
        %v5836 = vmul.f32 %v5797, %v5834
        %v5837 = vmul.f32 %v5798, %v5834
        %v5838 = vmul.f32 %v5799, %v5834
        %v5839 = vmul.f32 %v5800, %v5834
        %v5840 = vmul.f32 %v5801, %v5834
        %v5841 = vmul.f32 %v5802, %v5834
        %v5842 = vmul.f32 %v5803, %v5834
        %v5843 = vmul.f32 %v5804, %v5834
        %v5844 = vmul.f32 %v5805, %v5834
        %v5845 = vmul.f32 %v5806, %v5834
        %v5846 = vmul.f32 %v5807, %v5834
        %v5847 = vmul.f32 %v5808, %v5834
        %v5848 = vmul.f32 %v5809, %v5834
        %v5849 = vmul.f32 %v5810, %v5834
        %v5850 = vmul.f32 %v5811, %v5834
        %v5851 = vmul.f32 %v5812, %v5834
        %v5852 = vmul.f32 %v5813, %v5834
        %v5853 = vmul.f32 %v5814, %v5834
        %v5854 = vmul.f32 %v5815, %v5834
        %v5855 = vmul.f32 %v5816, %v5834
        %v5856 = vmul.f32 %v5817, %v5834
        %v5857 = vmul.f32 %v5818, %v5834
        %v5858 = vmul.f32 %v5819, %v5834
        %v5859 = vmul.f32 %v5820, %v5834
        %v5860 = vmul.f32 %v5821, %v5834
        %v5861 = vmul.f32 %v5822, %v5834
        %v5862 = vmul.f32 %v5823, %v5834
        %v5863 = vmul.f32 %v5824, %v5834
        %v5864 = vmul.f32 %v5825, %v5834
        %v5865 = vmul.f32 %v5826, %v5834
        %v5866 = vmul.f32 %v5827, %v5834
        %v5867 = vmul.f32 %v5828, %v5834
        %v5868 = vld [vmem:[%s6] sm:$0x1]
        %v5870 = vlaneseq
        %v5871 = vshrl.u32 %v5870, 7
        %v5872 = vsub.s32 0, %v5871
        %v5873 = vrot.slane %v5868, %v5872
        %v5875 = vadd.f32 %v5836, %v5873
        %v5876 = vadd.f32 %v5837, %v5873
        %v5877 = vadd.f32 %v5838, %v5873
        %v5878 = vadd.f32 %v5839, %v5873
        %v5879 = vadd.f32 %v5840, %v5873
        %v5880 = vadd.f32 %v5841, %v5873
        %v5881 = vadd.f32 %v5842, %v5873
        %v5882 = vadd.f32 %v5843, %v5873
        %v5883 = vadd.f32 %v5844, %v5873
        %v5884 = vadd.f32 %v5845, %v5873
        %v5885 = vadd.f32 %v5846, %v5873
        %v5886 = vadd.f32 %v5847, %v5873
        %v5887 = vadd.f32 %v5848, %v5873
        %v5888 = vadd.f32 %v5849, %v5873
        %v5889 = vadd.f32 %v5850, %v5873
        %v5890 = vadd.f32 %v5851, %v5873
        %v5891 = vadd.f32 %v5852, %v5873
        %v5892 = vadd.f32 %v5853, %v5873
        %v5893 = vadd.f32 %v5854, %v5873
        %v5894 = vadd.f32 %v5855, %v5873
        %v5895 = vadd.f32 %v5856, %v5873
        %v5896 = vadd.f32 %v5857, %v5873
        %v5897 = vadd.f32 %v5858, %v5873
        %v5898 = vadd.f32 %v5859, %v5873
        %v5899 = vadd.f32 %v5860, %v5873
        %v5900 = vadd.f32 %v5861, %v5873
        %v5901 = vadd.f32 %v5862, %v5873
        %v5902 = vadd.f32 %v5863, %v5873
        %v5903 = vadd.f32 %v5864, %v5873
        %v5904 = vadd.f32 %v5865, %v5873
        %v5905 = vadd.f32 %v5866, %v5873
        %v5906 = vadd.f32 %v5867, %v5873
        %v5907 = vxor.u32 %v5875, 2147483648
        %v5908 = vxor.u32 %v5876, 2147483648
        %v5909 = vxor.u32 %v5877, 2147483648
        %v5910 = vxor.u32 %v5878, 2147483648
        %v5911 = vxor.u32 %v5879, 2147483648
        %v5912 = vxor.u32 %v5880, 2147483648
        %v5913 = vxor.u32 %v5881, 2147483648
        %v5914 = vxor.u32 %v5882, 2147483648
        %v5915 = vxor.u32 %v5883, 2147483648
        %v5916 = vxor.u32 %v5884, 2147483648
        %v5917 = vxor.u32 %v5885, 2147483648
        %v5918 = vxor.u32 %v5886, 2147483648
        %v5919 = vxor.u32 %v5887, 2147483648
        %v5920 = vxor.u32 %v5888, 2147483648
        %v5921 = vxor.u32 %v5889, 2147483648
        %v5922 = vxor.u32 %v5890, 2147483648
        %v5923 = vxor.u32 %v5891, 2147483648
        %v5924 = vxor.u32 %v5892, 2147483648
        %v5925 = vxor.u32 %v5893, 2147483648
        %v5926 = vxor.u32 %v5894, 2147483648
        %v5927 = vxor.u32 %v5895, 2147483648
        %v5928 = vxor.u32 %v5896, 2147483648
        %v5929 = vxor.u32 %v5897, 2147483648
        %v5930 = vxor.u32 %v5898, 2147483648
        %v5931 = vxor.u32 %v5899, 2147483648
        %v5932 = vxor.u32 %v5900, 2147483648
        %v5933 = vxor.u32 %v5901, 2147483648
        %v5934 = vxor.u32 %v5902, 2147483648
        %v5935 = vxor.u32 %v5903, 2147483648
        %v5936 = vxor.u32 %v5904, 2147483648
        %v5937 = vxor.u32 %v5905, 2147483648
        %v5938 = vxor.u32 %v5906, 2147483648
        %v5939 = vmul.f32 %v5907, 1.442695
        %v5940 = vpow.pop %v5939
        %v5941 = vmul.f32 %v5908, 1.442695
        %v5942 = vpow.pop %v5941
        %v5943 = vmul.f32 %v5909, 1.442695
        %v5944 = vpow.pop %v5943
        %v5945 = vmul.f32 %v5910, 1.442695
        %v5946 = vpow.pop %v5945
        %v5947 = vmul.f32 %v5911, 1.442695
        %v5948 = vpow.pop %v5947
        %v5949 = vmul.f32 %v5912, 1.442695
        %v5950 = vpow.pop %v5949
        %v5951 = vmul.f32 %v5913, 1.442695
        %v5952 = vpow.pop %v5951
        %v5953 = vmul.f32 %v5914, 1.442695
        %v5954 = vpow.pop %v5953
        %v5955 = vmul.f32 %v5915, 1.442695
        %v5956 = vpow.pop %v5955
        %v5957 = vmul.f32 %v5916, 1.442695
        %v5958 = vpow.pop %v5957
        %v5959 = vmul.f32 %v5917, 1.442695
        %v5960 = vpow.pop %v5959
        %v5961 = vmul.f32 %v5918, 1.442695
        %v5962 = vpow.pop %v5961
        %v5963 = vmul.f32 %v5919, 1.442695
        %v5964 = vpow.pop %v5963
        %v5965 = vmul.f32 %v5920, 1.442695
        %v5966 = vpow.pop %v5965
        %v5967 = vmul.f32 %v5921, 1.442695
        %v5968 = vpow.pop %v5967
        %v5969 = vmul.f32 %v5922, 1.442695
        %v5970 = vpow.pop %v5969
        %v5971 = vmul.f32 %v5923, 1.442695
        %v5972 = vpow.pop %v5971
        %v5973 = vmul.f32 %v5924, 1.442695
        %v5974 = vpow.pop %v5973
        %v5975 = vmul.f32 %v5925, 1.442695
        %v5976 = vpow.pop %v5975
        %v5977 = vmul.f32 %v5926, 1.442695
        %v5978 = vpow.pop %v5977
        %v5979 = vmul.f32 %v5927, 1.442695
        %v5980 = vpow.pop %v5979
        %v5981 = vmul.f32 %v5928, 1.442695
        %v5982 = vpow.pop %v5981
        %v5983 = vmul.f32 %v5929, 1.442695
        %v5984 = vpow.pop %v5983
        %v5985 = vmul.f32 %v5930, 1.442695
        %v5986 = vpow.pop %v5985
        %v5987 = vmul.f32 %v5931, 1.442695
        %v5988 = vpow.pop %v5987
        %v5989 = vmul.f32 %v5932, 1.442695
        %v5990 = vpow.pop %v5989
        %v5991 = vmul.f32 %v5933, 1.442695
        %v5992 = vpow.pop %v5991
        %v5993 = vmul.f32 %v5934, 1.442695
        %v5994 = vpow.pop %v5993
        %v5995 = vmul.f32 %v5935, 1.442695
        %v5996 = vpow.pop %v5995
        %v5997 = vmul.f32 %v5936, 1.442695
        %v5998 = vpow.pop %v5997
        %v5999 = vmul.f32 %v5937, 1.442695
        %v6000 = vpow.pop %v5999
        %v6001 = vmul.f32 %v5938, 1.442695
        %v6002 = vpow.pop %v6001
        %v6003 = vadd.f32 %v5940, 1.0
        %v6004 = vadd.f32 %v5942, 1.0
        %v6005 = vadd.f32 %v5944, 1.0
        %v6006 = vadd.f32 %v5946, 1.0
        %v6007 = vadd.f32 %v5948, 1.0
        %v6008 = vadd.f32 %v5950, 1.0
        %v6009 = vadd.f32 %v5952, 1.0
        %v6010 = vadd.f32 %v5954, 1.0
        %v6011 = vadd.f32 %v5956, 1.0
        %v6012 = vadd.f32 %v5958, 1.0
        %v6013 = vadd.f32 %v5960, 1.0
        %v6014 = vadd.f32 %v5962, 1.0
        %v6015 = vadd.f32 %v5964, 1.0
        %v6016 = vadd.f32 %v5966, 1.0
        %v6017 = vadd.f32 %v5968, 1.0
        %v6018 = vadd.f32 %v5970, 1.0
        %v6019 = vadd.f32 %v5972, 1.0
        %v6020 = vadd.f32 %v5974, 1.0
        %v6021 = vadd.f32 %v5976, 1.0
        %v6022 = vadd.f32 %v5978, 1.0
        %v6023 = vadd.f32 %v5980, 1.0
        %v6024 = vadd.f32 %v5982, 1.0
        %v6025 = vadd.f32 %v5984, 1.0
        %v6026 = vadd.f32 %v5986, 1.0
        %v6027 = vadd.f32 %v5988, 1.0
        %v6028 = vadd.f32 %v5990, 1.0
        %v6029 = vadd.f32 %v5992, 1.0
        %v6030 = vadd.f32 %v5994, 1.0
        %v6031 = vadd.f32 %v5996, 1.0
        %v6032 = vadd.f32 %v5998, 1.0
        %v6033 = vadd.f32 %v6000, 1.0
        %v6034 = vadd.f32 %v6002, 1.0
        %v6035 = vrcp.pop %v6003
        %v6036 = vmul.f32 1.0, %v6035
        %v6037 = vrcp.pop %v6004
        %v6038 = vmul.f32 1.0, %v6037
        %v6039 = vrcp.pop %v6005
        %v6040 = vmul.f32 1.0, %v6039
        %v6041 = vrcp.pop %v6006
        %v6042 = vmul.f32 1.0, %v6041
        %v6043 = vrcp.pop %v6007
        %v6044 = vmul.f32 1.0, %v6043
        %v6045 = vrcp.pop %v6008
        %v6046 = vmul.f32 1.0, %v6045
        %v6047 = vrcp.pop %v6009
        %v6048 = vmul.f32 1.0, %v6047
        %v6049 = vrcp.pop %v6010
        %v6050 = vmul.f32 1.0, %v6049
        %v6051 = vrcp.pop %v6011
        %v6052 = vmul.f32 1.0, %v6051
        %v6053 = vrcp.pop %v6012
        %v6054 = vmul.f32 1.0, %v6053
        %v6055 = vrcp.pop %v6013
        %v6056 = vmul.f32 1.0, %v6055
        %v6057 = vrcp.pop %v6014
        %v6058 = vmul.f32 1.0, %v6057
        %v6059 = vrcp.pop %v6015
        %v6060 = vmul.f32 1.0, %v6059
        %v6061 = vrcp.pop %v6016
        %v6062 = vmul.f32 1.0, %v6061
        %v6063 = vrcp.pop %v6017
        %v6064 = vmul.f32 1.0, %v6063
        %v6065 = vrcp.pop %v6018
        %v6066 = vmul.f32 1.0, %v6065
        %v6067 = vrcp.pop %v6019
        %v6068 = vmul.f32 1.0, %v6067
        %v6069 = vrcp.pop %v6020
        %v6070 = vmul.f32 1.0, %v6069
        %v6071 = vrcp.pop %v6021
        %v6072 = vmul.f32 1.0, %v6071
        %v6073 = vrcp.pop %v6022
        %v6074 = vmul.f32 1.0, %v6073
        %v6075 = vrcp.pop %v6023
        %v6076 = vmul.f32 1.0, %v6075
        %v6077 = vrcp.pop %v6024
        %v6078 = vmul.f32 1.0, %v6077
        %v6079 = vrcp.pop %v6025
        %v6080 = vmul.f32 1.0, %v6079
        %v6081 = vrcp.pop %v6026
        %v6082 = vmul.f32 1.0, %v6081
        %v6083 = vrcp.pop %v6027
        %v6084 = vmul.f32 1.0, %v6083
        %v6085 = vrcp.pop %v6028
        %v6086 = vmul.f32 1.0, %v6085
        %v6087 = vrcp.pop %v6029
        %v6088 = vmul.f32 1.0, %v6087
        %v6089 = vrcp.pop %v6030
        %v6090 = vmul.f32 1.0, %v6089
        %v6091 = vrcp.pop %v6031
        %v6092 = vmul.f32 1.0, %v6091
        %v6093 = vrcp.pop %v6032
        %v6094 = vmul.f32 1.0, %v6093
        %v6095 = vrcp.pop %v6033
        %v6096 = vmul.f32 1.0, %v6095
        %v6097 = vrcp.pop %v6034
        %v6098 = vmul.f32 1.0, %v6097
        %v6099 = vmul.f32 %v5875, %v6036
        %v6100 = vmul.f32 %v5876, %v6038
        %v6101 = vmul.f32 %v5877, %v6040
        %v6102 = vmul.f32 %v5878, %v6042
        %v6103 = vmul.f32 %v5879, %v6044
        %v6104 = vmul.f32 %v5880, %v6046
        %v6105 = vmul.f32 %v5881, %v6048
        %v6106 = vmul.f32 %v5882, %v6050
        %v6107 = vmul.f32 %v5883, %v6052
        %v6108 = vmul.f32 %v5884, %v6054
        %v6109 = vmul.f32 %v5885, %v6056
        %v6110 = vmul.f32 %v5886, %v6058
        %v6111 = vmul.f32 %v5887, %v6060
        %v6112 = vmul.f32 %v5888, %v6062
        %v6113 = vmul.f32 %v5889, %v6064
        %v6114 = vmul.f32 %v5890, %v6066
        %v6115 = vmul.f32 %v5891, %v6068
        %v6116 = vmul.f32 %v5892, %v6070
        %v6117 = vmul.f32 %v5893, %v6072
        %v6118 = vmul.f32 %v5894, %v6074
        %v6119 = vmul.f32 %v5895, %v6076
        %v6120 = vmul.f32 %v5896, %v6078
        %v6121 = vmul.f32 %v5897, %v6080
        %v6122 = vmul.f32 %v5898, %v6082
        %v6123 = vmul.f32 %v5899, %v6084
        %v6124 = vmul.f32 %v5900, %v6086
        %v6125 = vmul.f32 %v5901, %v6088
        %v6126 = vmul.f32 %v5902, %v6090
        %v6127 = vmul.f32 %v5903, %v6092
        %v6128 = vmul.f32 %v5904, %v6094
        %v6129 = vmul.f32 %v5905, %v6096
        %v6130 = vmul.f32 %v5906, %v6098
        %v6131 = vpack.c.bf16 %v6100, %v6099
        %v6132 = vpack.c.bf16 %v6102, %v6101
        %v6133 = vpack.c.bf16 %v6104, %v6103
        %v6134 = vpack.c.bf16 %v6106, %v6105
        %v6135 = vpack.c.bf16 %v6108, %v6107
        %v6136 = vpack.c.bf16 %v6110, %v6109
        %v6137 = vpack.c.bf16 %v6112, %v6111
        %v6138 = vpack.c.bf16 %v6114, %v6113
        %v6139 = vpack.c.bf16 %v6116, %v6115
        %v6140 = vpack.c.bf16 %v6118, %v6117
        %v6141 = vpack.c.bf16 %v6120, %v6119
        %v6142 = vpack.c.bf16 %v6122, %v6121
        %v6143 = vpack.c.bf16 %v6124, %v6123
        %v6144 = vpack.c.bf16 %v6126, %v6125
        %v6145 = vpack.c.bf16 %v6128, %v6127
        %v6146 = vpack.c.bf16 %v6130, %v6129
        %v6147 = vld [vmem:[%s7] sm:$0xf]
        %v6149 = vsel %vm4821, %v6131, 0
        %v6152 = vsel %vm4821, %v6132, 0
        %v6155 = vsel %vm4821, %v6133, 0
        %v6158 = vsel %vm4821, %v6134, 0
        %v6161 = vsel %vm4821, %v6135, 0
        %v6164 = vsel %vm4821, %v6136, 0
        %v6167 = vsel %vm4821, %v6137, 0
        %v6170 = vsel %vm4821, %v6138, 0
        %v6173 = vsel %vm4821, %v6139, 0
        %v6176 = vsel %vm4821, %v6140, 0
        %v6179 = vsel %vm4821, %v6141, 0
        %v6182 = vsel %vm4821, %v6142, 0
        %v6185 = vsel %vm4821, %v6143, 0
        %v6188 = vsel %vm4821, %v6144, 0
        %v6191 = vsel %vm4821, %v6145, 0
        %v6194 = vsel %vm4821, %v6146, 0
        %vm6196 = vcmask 1043456
        %v6198 = vsel %vm6196, %v6147, 0
        %6200 = vmatprep.subr.bf16.mxu0 0
        %6201 = vmatpush1.bf16.msra.mxu0 %v6198
        %6202 = vmatprep.subr.bf16.mxu0 0
        %6203 = vmatpush1.bf16.msra.mxu0 0
        %6204 = vmatprep.subr.bf16.mxu0 0
        %6205 = vmatpush1.bf16.msra.mxu0 0
        %6206 = vmatprep.subr.bf16.mxu0 0
        %6207 = vmatpush1.bf16.msra.mxu0 0
        %6208 = vmatprep.subr.bf16.mxu0 0
        %6209 = vmatpush1.bf16.msra.mxu0 0
        %6210 = vmatprep.subr.bf16.mxu0 0
        %6211 = vmatpush1.bf16.msra.mxu0 0
        %6212 = vmatprep.subr.bf16.mxu0 0
        %6213 = vmatpush1.bf16.msra.mxu0 0
        %6214 = vmatprep.subr.bf16.mxu0 0
        %6215 = vmatpush1.bf16.msra.mxu0 0
        %6216 = vmatprep.subr.bf16.mxu0 0
        %6217 = vmatpush1.bf16.msra.mxu0 0
        %6218 = vmatprep.subr.bf16.mxu0 0
        %6219 = vmatpush1.bf16.msra.mxu0 0
        %6220 = vmatprep.subr.bf16.mxu0 0
        %6221 = vmatpush1.bf16.msra.mxu0 0
        %6222 = vmatprep.subr.bf16.mxu0 0
        %6223 = vmatpush1.bf16.msra.mxu0 0
        %6224 = vmatprep.subr.bf16.mxu0 0
        %6225 = vmatpush1.bf16.msra.mxu0 0
        %6226 = vmatprep.subr.bf16.mxu0 0
        %6227 = vmatpush1.bf16.msra.mxu0 0
        %6228 = vmatprep.subr.bf16.mxu0 0
        %6229 = vmatpush1.bf16.msra.mxu0 0
        %6230 = vmatprep.subr.bf16.mxu0 0
        %6231 = vmatpush1.bf16.msra.mxu0 0
        %6232 = vmatprep.mubr.bf16.mxu0 0
        %6233 = vmatmul.mubr.bf16.gmra.mrb[0].mxu0 %v6149
        %v6234 = vpop.f32.mrb[0].mxu0
        %v6235 = vadd.f32 0.0, %v6234
        %v6236 = vpop.f32.mrb[0].mxu0
        %v6237 = vpop.f32.mrb[0].mxu0
        %v6238 = vadd.f32 0.0, %v6237
        %v6239 = vpop.f32.mrb[0].mxu0
        %6240 = vmatprep.mubr.bf16.mxu0 0
        %6241 = vmatmul.mubr.bf16.gmra.mrb[0].mxu0 %v6152
        %v6242 = vpop.f32.mrb[0].mxu0
        %v6243 = vadd.f32 0.0, %v6242
        %v6244 = vpop.f32.mrb[0].mxu0
        %v6245 = vpop.f32.mrb[0].mxu0
        %v6246 = vadd.f32 0.0, %v6245
        %v6247 = vpop.f32.mrb[0].mxu0
        %6248 = vmatprep.mubr.bf16.mxu0 0
        %6249 = vmatmul.mubr.bf16.gmra.mrb[0].mxu0 %v6155
        %v6250 = vpop.f32.mrb[0].mxu0
        %v6251 = vadd.f32 0.0, %v6250
        %v6252 = vpop.f32.mrb[0].mxu0
        %v6253 = vpop.f32.mrb[0].mxu0
        %v6254 = vadd.f32 0.0, %v6253
        %v6255 = vpop.f32.mrb[0].mxu0
        %6256 = vmatprep.mubr.bf16.mxu0 0
        %6257 = vmatmul.mubr.bf16.gmra.mrb[0].mxu0 %v6158
        %v6258 = vpop.f32.mrb[0].mxu0
        %v6259 = vadd.f32 0.0, %v6258
        %v6260 = vpop.f32.mrb[0].mxu0
        %v6261 = vpop.f32.mrb[0].mxu0
        %v6262 = vadd.f32 0.0, %v6261
        %v6263 = vpop.f32.mrb[0].mxu0
        %6264 = vmatprep.mubr.bf16.mxu0 0
        %6265 = vmatmul.mubr.bf16.gmra.mrb[0].mxu0 %v6161
        %v6266 = vpop.f32.mrb[0].mxu0
        %v6267 = vadd.f32 0.0, %v6266
        %v6268 = vpop.f32.mrb[0].mxu0
        %v6269 = vpop.f32.mrb[0].mxu0
        %v6270 = vadd.f32 0.0, %v6269
        %v6271 = vpop.f32.mrb[0].mxu0
        %6272 = vmatprep.mubr.bf16.mxu0 0
        %6273 = vmatmul.mubr.bf16.gmra.mrb[0].mxu0 %v6164
        %v6274 = vpop.f32.mrb[0].mxu0
        %v6275 = vadd.f32 0.0, %v6274
        %v6276 = vpop.f32.mrb[0].mxu0
        %v6277 = vpop.f32.mrb[0].mxu0
        %v6278 = vadd.f32 0.0, %v6277
        %v6279 = vpop.f32.mrb[0].mxu0
        %6280 = vmatprep.mubr.bf16.mxu0 0
        %6281 = vmatmul.mubr.bf16.gmra.mrb[0].mxu0 %v6167
        %v6282 = vpop.f32.mrb[0].mxu0
        %v6283 = vadd.f32 0.0, %v6282
        %v6284 = vpop.f32.mrb[0].mxu0
        %v6285 = vpop.f32.mrb[0].mxu0
        %v6286 = vadd.f32 0.0, %v6285
        %v6287 = vpop.f32.mrb[0].mxu0
        %6288 = vmatprep.mubr.bf16.mxu0 0
        %6289 = vmatmul.mubr.bf16.gmra.mrb[0].mxu0 %v6170
        %v6290 = vpop.f32.mrb[0].mxu0
        %v6291 = vadd.f32 0.0, %v6290
        %v6292 = vpop.f32.mrb[0].mxu0
        %v6293 = vpop.f32.mrb[0].mxu0
        %v6294 = vadd.f32 0.0, %v6293
        %v6295 = vpop.f32.mrb[0].mxu0
        %6296 = vmatprep.mubr.bf16.mxu0 0
        %6297 = vmatmul.mubr.bf16.gmra.mrb[0].mxu0 %v6173
        %v6298 = vpop.f32.mrb[0].mxu0
        %v6299 = vadd.f32 0.0, %v6298
        %v6300 = vpop.f32.mrb[0].mxu0
        %v6301 = vpop.f32.mrb[0].mxu0
        %v6302 = vadd.f32 0.0, %v6301
        %v6303 = vpop.f32.mrb[0].mxu0
        %6304 = vmatprep.mubr.bf16.mxu0 0
        %6305 = vmatmul.mubr.bf16.gmra.mrb[0].mxu0 %v6176
        %v6306 = vpop.f32.mrb[0].mxu0
        %v6307 = vadd.f32 0.0, %v6306
        %v6308 = vpop.f32.mrb[0].mxu0
        %v6309 = vpop.f32.mrb[0].mxu0
        %v6310 = vadd.f32 0.0, %v6309
        %v6311 = vpop.f32.mrb[0].mxu0
        %6312 = vmatprep.mubr.bf16.mxu0 0
        %6313 = vmatmul.mubr.bf16.gmra.mrb[0].mxu0 %v6179
        %v6314 = vpop.f32.mrb[0].mxu0
        %v6315 = vadd.f32 0.0, %v6314
        %v6316 = vpop.f32.mrb[0].mxu0
        %v6317 = vpop.f32.mrb[0].mxu0
        %v6318 = vadd.f32 0.0, %v6317
        %v6319 = vpop.f32.mrb[0].mxu0
        %6320 = vmatprep.mubr.bf16.mxu0 0
        %6321 = vmatmul.mubr.bf16.gmra.mrb[0].mxu0 %v6182
        %v6322 = vpop.f32.mrb[0].mxu0
        %v6323 = vadd.f32 0.0, %v6322
        %v6324 = vpop.f32.mrb[0].mxu0
        %v6325 = vpop.f32.mrb[0].mxu0
        %v6326 = vadd.f32 0.0, %v6325
        %v6327 = vpop.f32.mrb[0].mxu0
        %6328 = vmatprep.mubr.bf16.mxu0 0
        %6329 = vmatmul.mubr.bf16.gmra.mrb[0].mxu0 %v6185
        %v6330 = vpop.f32.mrb[0].mxu0
        %v6331 = vadd.f32 0.0, %v6330
        %v6332 = vpop.f32.mrb[0].mxu0
        %v6333 = vpop.f32.mrb[0].mxu0
        %v6334 = vadd.f32 0.0, %v6333
        %v6335 = vpop.f32.mrb[0].mxu0
        %6336 = vmatprep.mubr.bf16.mxu0 0
        %6337 = vmatmul.mubr.bf16.gmra.mrb[0].mxu0 %v6188
        %v6338 = vpop.f32.mrb[0].mxu0
        %v6339 = vadd.f32 0.0, %v6338
        %v6340 = vpop.f32.mrb[0].mxu0
        %v6341 = vpop.f32.mrb[0].mxu0
        %v6342 = vadd.f32 0.0, %v6341
        %v6343 = vpop.f32.mrb[0].mxu0
        %6344 = vmatprep.mubr.bf16.mxu0 0
        %6345 = vmatmul.mubr.bf16.gmra.mrb[0].mxu0 %v6191
        %v6346 = vpop.f32.mrb[0].mxu0
        %v6347 = vadd.f32 0.0, %v6346
        %v6348 = vpop.f32.mrb[0].mxu0
        %v6349 = vpop.f32.mrb[0].mxu0
        %v6350 = vadd.f32 0.0, %v6349
        %v6351 = vpop.f32.mrb[0].mxu0
        %6352 = vmatprep.mubr.bf16.mxu0 0
        %6353 = vmatmul.mubr.bf16.gmra.mrb[0].mxu0 %v6194
        %v6354 = vpop.f32.mrb[0].mxu0
        %v6355 = vadd.f32 0.0, %v6354
        %v6356 = vpop.f32.mrb[0].mxu0
        %v6357 = vpop.f32.mrb[0].mxu0
        %v6358 = vadd.f32 0.0, %v6357
        %v6359 = vpop.f32.mrb[0].mxu0
        %6360 = vdwg.mxu0
        %v6361 = vld [vmem:[%s8] sm:$0x1]
        %v6363 = vlaneseq
        %v6364 = vshrl.u32 %v6363, 7
        %v6365 = vsub.s32 0, %v6364
        %v6366 = vrot.slane %v6361, %v6365
        %v6368 = vmul.f32 %v6235, %v6366
        %v6369 = vmul.f32 %v6238, %v6366
        %v6370 = vmul.f32 %v6243, %v6366
        %v6371 = vmul.f32 %v6246, %v6366
        %v6372 = vmul.f32 %v6251, %v6366
        %v6373 = vmul.f32 %v6254, %v6366
        %v6374 = vmul.f32 %v6259, %v6366
        %v6375 = vmul.f32 %v6262, %v6366
        %v6376 = vmul.f32 %v6267, %v6366
        %v6377 = vmul.f32 %v6270, %v6366
        %v6378 = vmul.f32 %v6275, %v6366
        %v6379 = vmul.f32 %v6278, %v6366
        %v6380 = vmul.f32 %v6283, %v6366
        %v6381 = vmul.f32 %v6286, %v6366
        %v6382 = vmul.f32 %v6291, %v6366
        %v6383 = vmul.f32 %v6294, %v6366
        %v6384 = vmul.f32 %v6299, %v6366
        %v6385 = vmul.f32 %v6302, %v6366
        %v6386 = vmul.f32 %v6307, %v6366
        %v6387 = vmul.f32 %v6310, %v6366
        %v6388 = vmul.f32 %v6315, %v6366
        %v6389 = vmul.f32 %v6318, %v6366
        %v6390 = vmul.f32 %v6323, %v6366
        %v6391 = vmul.f32 %v6326, %v6366
        %v6392 = vmul.f32 %v6331, %v6366
        %v6393 = vmul.f32 %v6334, %v6366
        %v6394 = vmul.f32 %v6339, %v6366
        %v6395 = vmul.f32 %v6342, %v6366
        %v6396 = vmul.f32 %v6347, %v6366
        %v6397 = vmul.f32 %v6350, %v6366
        %v6398 = vmul.f32 %v6355, %v6366
        %v6399 = vmul.f32 %v6358, %v6366
        %v6400 = vld [vmem:[%s9] sm:$0x1]
        %v6402 = vlaneseq
        %v6403 = vshrl.u32 %v6402, 7
        %v6404 = vsub.s32 0, %v6403
        %v6405 = vrot.slane %v6400, %v6404
        %v6407 = vadd.f32 %v6368, %v6405
        %v6408 = vadd.f32 %v6369, %v6405
        %v6409 = vadd.f32 %v6370, %v6405
        %v6410 = vadd.f32 %v6371, %v6405
        %v6411 = vadd.f32 %v6372, %v6405
        %v6412 = vadd.f32 %v6373, %v6405
        %v6413 = vadd.f32 %v6374, %v6405
        %v6414 = vadd.f32 %v6375, %v6405
        %v6415 = vadd.f32 %v6376, %v6405
        %v6416 = vadd.f32 %v6377, %v6405
        %v6417 = vadd.f32 %v6378, %v6405
        %v6418 = vadd.f32 %v6379, %v6405
        %v6419 = vadd.f32 %v6380, %v6405
        %v6420 = vadd.f32 %v6381, %v6405
        %v6421 = vadd.f32 %v6382, %v6405
        %v6422 = vadd.f32 %v6383, %v6405
        %v6423 = vadd.f32 %v6384, %v6405
        %v6424 = vadd.f32 %v6385, %v6405
        %v6425 = vadd.f32 %v6386, %v6405
        %v6426 = vadd.f32 %v6387, %v6405
        %v6427 = vadd.f32 %v6388, %v6405
        %v6428 = vadd.f32 %v6389, %v6405
        %v6429 = vadd.f32 %v6390, %v6405
        %v6430 = vadd.f32 %v6391, %v6405
        %v6431 = vadd.f32 %v6392, %v6405
        %v6432 = vadd.f32 %v6393, %v6405
        %v6433 = vadd.f32 %v6394, %v6405
        %v6434 = vadd.f32 %v6395, %v6405
        %v6435 = vadd.f32 %v6396, %v6405
        %v6436 = vadd.f32 %v6397, %v6405
        %v6437 = vadd.f32 %v6398, %v6405
        %v6438 = vadd.f32 %v6399, %v6405
        %v6439 = vpack.c.bf16 %v6408, %v6407
        %v6440 = vpack.c.bf16 %v6410, %v6409
        %v6441 = vpack.c.bf16 %v6412, %v6411
        %v6442 = vpack.c.bf16 %v6414, %v6413
        %v6443 = vpack.c.bf16 %v6416, %v6415
        %v6444 = vpack.c.bf16 %v6418, %v6417
        %v6445 = vpack.c.bf16 %v6420, %v6419
        %v6446 = vpack.c.bf16 %v6422, %v6421
        %v6447 = vpack.c.bf16 %v6424, %v6423
        %v6448 = vpack.c.bf16 %v6426, %v6425
        %v6449 = vpack.c.bf16 %v6428, %v6427
        %v6450 = vpack.c.bf16 %v6430, %v6429
        %v6451 = vpack.c.bf16 %v6432, %v6431
        %v6452 = vpack.c.bf16 %v6434, %v6433
        %v6453 = vpack.c.bf16 %v6436, %v6435
        %v6454 = vpack.c.bf16 %v6438, %v6437
        %v6471 = vunpack.c.l.b16 %v6439
        %v6472 = vunpack.c.h.b16 %v6439
        %v6473 = vunpack.c.l.b16 %v6440
        %v6474 = vunpack.c.h.b16 %v6440
        %v6475 = vunpack.c.l.b16 %v6441
        %v6476 = vunpack.c.h.b16 %v6441
        %v6477 = vunpack.c.l.b16 %v6442
        %v6478 = vunpack.c.h.b16 %v6442
        %v6479 = vunpack.c.l.b16 %v6443
        %v6480 = vunpack.c.h.b16 %v6443
        %v6481 = vunpack.c.l.b16 %v6444
        %v6482 = vunpack.c.h.b16 %v6444
        %v6483 = vunpack.c.l.b16 %v6445
        %v6484 = vunpack.c.h.b16 %v6445
        %v6485 = vunpack.c.l.b16 %v6446
        %v6486 = vunpack.c.h.b16 %v6446
        %v6487 = vunpack.c.l.b16 %v6447
        %v6488 = vunpack.c.h.b16 %v6447
        %v6489 = vunpack.c.l.b16 %v6448
        %v6490 = vunpack.c.h.b16 %v6448
        %v6491 = vunpack.c.l.b16 %v6449
        %v6492 = vunpack.c.h.b16 %v6449
        %v6493 = vunpack.c.l.b16 %v6450
        %v6494 = vunpack.c.h.b16 %v6450
        %v6495 = vunpack.c.l.b16 %v6451
        %v6496 = vunpack.c.h.b16 %v6451
        %v6497 = vunpack.c.l.b16 %v6452
        %v6498 = vunpack.c.h.b16 %v6452
        %v6499 = vunpack.c.l.b16 %v6453
        %v6500 = vunpack.c.h.b16 %v6453
        %v6501 = vunpack.c.l.b16 %v6454
        %v6502 = vunpack.c.h.b16 %v6454
        %v6503 = vpack.c.b16 %v6471, %v6471
        %v6504 = vpack.c.b16 %v6472, %v6472
        %v6505 = vpack.c.b16 %v6473, %v6473
        %v6506 = vpack.c.b16 %v6474, %v6474
        %v6507 = vpack.c.b16 %v6475, %v6475
        %v6508 = vpack.c.b16 %v6476, %v6476
        %v6509 = vpack.c.b16 %v6477, %v6477
        %v6510 = vpack.c.b16 %v6478, %v6478
        %v6511 = vpack.c.b16 %v6479, %v6479
        %v6512 = vpack.c.b16 %v6480, %v6480
        %v6513 = vpack.c.b16 %v6481, %v6481
        %v6514 = vpack.c.b16 %v6482, %v6482
        %v6515 = vpack.c.b16 %v6483, %v6483
        %v6516 = vpack.c.b16 %v6484, %v6484
        %v6517 = vpack.c.b16 %v6485, %v6485
        %v6518 = vpack.c.b16 %v6486, %v6486
        %v6519 = vpack.c.b16 %v6487, %v6487
        %v6520 = vpack.c.b16 %v6488, %v6488
        %v6521 = vpack.c.b16 %v6489, %v6489
        %v6522 = vpack.c.b16 %v6490, %v6490
        %v6523 = vpack.c.b16 %v6491, %v6491
        %v6524 = vpack.c.b16 %v6492, %v6492
        %v6525 = vpack.c.b16 %v6493, %v6493
        %v6526 = vpack.c.b16 %v6494, %v6494
        %v6527 = vpack.c.b16 %v6495, %v6495
        %v6528 = vpack.c.b16 %v6496, %v6496
        %v6529 = vpack.c.b16 %v6497, %v6497
        %v6530 = vpack.c.b16 %v6498, %v6498
        %v6531 = vpack.c.b16 %v6499, %v6499
        %v6532 = vpack.c.b16 %v6500, %v6500
        %v6533 = vpack.c.b16 %v6501, %v6501
        %v6534 = vpack.c.b16 %v6502, %v6502
        %vm6567 = vcmask 60416
        %6568 = vst.msk [vmem:[%s422] sm:$0xf] %vm6567, %v6503
        %6569 = vst.msk [vmem:[%s422 + $0x4] sm:$0xf] %vm6567, %v6504
        %6570 = vst.msk [vmem:[%s422 + $0x8] sm:$0xf] %vm6567, %v6505
        %6571 = vst.msk [vmem:[%s422 + $0xc] sm:$0xf] %vm6567, %v6506
        %6572 = vst.msk [vmem:[%s422 + $0x10] sm:$0xf] %vm6567, %v6507
        %6573 = vst.msk [vmem:[%s422 + $0x14] sm:$0xf] %vm6567, %v6508
        %6574 = vst.msk [vmem:[%s422 + $0x18] sm:$0xf] %vm6567, %v6509
        %6575 = vst.msk [vmem:[%s422 + $0x1c] sm:$0xf] %vm6567, %v6510
        %6576 = vst.msk [vmem:[%s422 + $0x20] sm:$0xf] %vm6567, %v6511
        %6577 = vst.msk [vmem:[%s422 + $0x24] sm:$0xf] %vm6567, %v6512
        %6578 = vst.msk [vmem:[%s422 + $0x28] sm:$0xf] %vm6567, %v6513
        %6579 = vst.msk [vmem:[%s422 + $0x2c] sm:$0xf] %vm6567, %v6514
        %6580 = vst.msk [vmem:[%s422 + $0x30] sm:$0xf] %vm6567, %v6515
        %6581 = vst.msk [vmem:[%s422 + $0x34] sm:$0xf] %vm6567, %v6516
        %6582 = vst.msk [vmem:[%s422 + $0x38] sm:$0xf] %vm6567, %v6517
        %6583 = vst.msk [vmem:[%s422 + $0x3c] sm:$0xf] %vm6567, %v6518
        %6584 = vst.msk [vmem:[%s422 + $0x40] sm:$0xf] %vm6567, %v6519
        %6585 = vst.msk [vmem:[%s422 + $0x44] sm:$0xf] %vm6567, %v6520
        %6586 = vst.msk [vmem:[%s422 + $0x48] sm:$0xf] %vm6567, %v6521
        %6587 = vst.msk [vmem:[%s422 + $0x4c] sm:$0xf] %vm6567, %v6522
        %6588 = vst.msk [vmem:[%s422 + $0x50] sm:$0xf] %vm6567, %v6523
        %6589 = vst.msk [vmem:[%s422 + $0x54] sm:$0xf] %vm6567, %v6524
        %6590 = vst.msk [vmem:[%s422 + $0x58] sm:$0xf] %vm6567, %v6525
        %6591 = vst.msk [vmem:[%s422 + $0x5c] sm:$0xf] %vm6567, %v6526
        %6592 = vst.msk [vmem:[%s422 + $0x60] sm:$0xf] %vm6567, %v6527
        %6593 = vst.msk [vmem:[%s422 + $0x64] sm:$0xf] %vm6567, %v6528
        %6594 = vst.msk [vmem:[%s422 + $0x68] sm:$0xf] %vm6567, %v6529
        %6595 = vst.msk [vmem:[%s422 + $0x6c] sm:$0xf] %vm6567, %v6530
        %6596 = vst.msk [vmem:[%s422 + $0x70] sm:$0xf] %vm6567, %v6531
        %6597 = vst.msk [vmem:[%s422 + $0x74] sm:$0xf] %vm6567, %v6532
        %6598 = vst.msk [vmem:[%s422 + $0x78] sm:$0xf] %vm6567, %v6533
        %6599 = vst.msk [vmem:[%s422 + $0x7c] sm:$0xf] %vm6567, %v6534
        %v6600 = vsel %vm4821, %v6407, 0.0
        %v6601 = vsel %vm4821, %v6408, 0.0
        %v6602 = vadd.f32 %v6600, %v6601
        %v6603 = vsel %vm4821, %v6409, 0.0
        %v6604 = vadd.f32 %v6602, %v6603
        %v6605 = vsel %vm4821, %v6410, 0.0
        %v6606 = vadd.f32 %v6604, %v6605
        %v6607 = vsel %vm4821, %v6411, 0.0
        %v6608 = vadd.f32 %v6606, %v6607
        %v6609 = vsel %vm4821, %v6412, 0.0
        %v6610 = vadd.f32 %v6608, %v6609
        %v6611 = vsel %vm4821, %v6413, 0.0
        %v6612 = vadd.f32 %v6610, %v6611
        %v6613 = vsel %vm4821, %v6414, 0.0
        %v6614 = vadd.f32 %v6612, %v6613
        %v6615 = vsel %vm4821, %v6415, 0.0
        %v6616 = vadd.f32 %v6614, %v6615
        %v6617 = vsel %vm4821, %v6416, 0.0
        %v6618 = vadd.f32 %v6616, %v6617
        %v6619 = vsel %vm4821, %v6417, 0.0
        %v6620 = vadd.f32 %v6618, %v6619
        %v6621 = vsel %vm4821, %v6418, 0.0
        %v6622 = vadd.f32 %v6620, %v6621
        %v6623 = vsel %vm4821, %v6419, 0.0
        %v6624 = vadd.f32 %v6622, %v6623
        %v6625 = vsel %vm4821, %v6420, 0.0
        %v6626 = vadd.f32 %v6624, %v6625
        %v6627 = vsel %vm4821, %v6421, 0.0
        %v6628 = vadd.f32 %v6626, %v6627
        %v6629 = vsel %vm4821, %v6422, 0.0
        %v6630 = vadd.f32 %v6628, %v6629
        %v6631 = vsel %vm4821, %v6423, 0.0
        %v6632 = vadd.f32 %v6630, %v6631
        %v6633 = vsel %vm4821, %v6424, 0.0
        %v6634 = vadd.f32 %v6632, %v6633
        %v6635 = vsel %vm4821, %v6425, 0.0
        %v6636 = vadd.f32 %v6634, %v6635
        %v6637 = vsel %vm4821, %v6426, 0.0
        %v6638 = vadd.f32 %v6636, %v6637
        %v6639 = vsel %vm4821, %v6427, 0.0
        %v6640 = vadd.f32 %v6638, %v6639
        %v6641 = vsel %vm4821, %v6428, 0.0
        %v6642 = vadd.f32 %v6640, %v6641
        %v6643 = vsel %vm4821, %v6429, 0.0
        %v6644 = vadd.f32 %v6642, %v6643
        %v6645 = vsel %vm4821, %v6430, 0.0
        %v6646 = vadd.f32 %v6644, %v6645
        %v6647 = vsel %vm4821, %v6431, 0.0
        %v6648 = vadd.f32 %v6646, %v6647
        %v6649 = vsel %vm4821, %v6432, 0.0
        %v6650 = vadd.f32 %v6648, %v6649
        %v6651 = vsel %vm4821, %v6433, 0.0
        %v6652 = vadd.f32 %v6650, %v6651
        %v6653 = vsel %vm4821, %v6434, 0.0
        %v6654 = vadd.f32 %v6652, %v6653
        %v6655 = vsel %vm4821, %v6435, 0.0
        %v6656 = vadd.f32 %v6654, %v6655
        %v6657 = vsel %vm4821, %v6436, 0.0
        %v6658 = vadd.f32 %v6656, %v6657
        %v6659 = vsel %vm4821, %v6437, 0.0
        %v6660 = vadd.f32 %v6658, %v6659
        %v6661 = vsel %vm4821, %v6438, 0.0
        %v6662 = vadd.f32 %v6660, %v6661
        %v6663 = vrot.slane %v6662, 4
        %v6664 = vadd.f32 %v6662, %v6663
        %v6665 = vrot.slane %v6664, 2
        %v6666 = vadd.f32 %v6664, %v6665
        %v6667 = vrot.slane %v6666, 1
        %v6668 = vadd.f32 %v6666, %v6667
        %6669 = vst.msk [vmem:[%s407] sm:$0x1] %vm4877, %v6668
        %s6670 = smul.u32 16, %s31
        %p6671 = scmp.lt.s32.totalorder %s30, 1
        %s6672 = scalar_select %p6671, %s30, 1
        %p6673 = scmp.lt.s32.totalorder %s6670, 15
        %s6674 = scalar_select %p6673, %s6670, 15
        %s6675 = smul.addr %s6674, 2
        %s6676 = smul.addr %s6672, 32
        %s6677 = sadd.s32 %s6675, %s6676
        %s6678 = smul.addr %s6677, 4
        %s6679 = scalar_lea.vmem %s10, %s6678
        %s6680 = sand.u32 %s291, 1
        %s6681 = scalar_lea.sflag [#allocation4], %s6680
        %s6682 = sand.u32 %s291, 1
        %s6683 = scalar_lea.vmem [#allocation3], %s6682
        // Predicated region
        $region65: #{tpu_custom_call.1} parent=59 // pred_check
          %p6684 = pneg %p273
        $region66: #{tpu_custom_call.1} parent=59 // pred_check_branch
          %6686 = sbr.rel (%p6684) target = $region68
        $region67: #{tpu_custom_call.1} parent=59 // pred_region
          %s6687 = smul.u32 16, %s31
        $region68: #{tpu_custom_call.1} parent=59 // pred_fallthru
          _
        // Predicated region
        $region69: #{tpu_custom_call.1} parent=59 // pred_check
          %p6688 = pneg %p301
        $region70: #{tpu_custom_call.1} parent=59 // pred_check_branch
          %6690 = sbr.rel (%p6688) target = $region72
        $region71: #{tpu_custom_call.1} parent=59 // pred_region
          %s6692 = ssub.s32 16, 16
          %6693 = vsyncadd %s6681, %s6692
          %s6694 = sadd.s32 %s31, %s30
          %s6695 = smul.addr %s6694, 16
          %s6696 = scalar_lea.hbm %s11, %s6695
          %s6698 = sshll.u32 %s6683, 4
          %s6699 = int_to_ptr.vmem [resolvable:$true] %s6698
          %6701 = dma.vmem_to_hbm [thread:$0]  %s6699, 16, %s6696, %s6681
        $region72: #{tpu_custom_call.1} parent=59 // pred_fallthru
          _
      $region60: #{tpu_custom_call.1} parent=5 // pred_fallthru
        _
      %p6702 = scmp.le.s32.totalorder 2, %s21
      // Predicated region
      $region73: #{tpu_custom_call.1} parent=5 // pred_check
        %p6703 = pneg %p6702
      $region74: #{tpu_custom_call.1} parent=5 // pred_check_branch
        %6705 = sbr.rel (%p6703) target = $region76
      $region75: #{tpu_custom_call.1} parent=5 // pred_region
        %s6706 = ssub.s32 %s21, 2
        // Predicated region
        $region77: #{tpu_custom_call.1} parent=75 // pred_check
          %p6707 = pneg %p279
        $region78: #{tpu_custom_call.1} parent=75 // pred_check_branch
          %6709 = sbr.rel (%p6707) target = $region80
        $region79: #{tpu_custom_call.1} parent=75 // pred_region
          %s6710 = smul.u32 16, %s33
          %p6711 = scmp.lt.s32.totalorder %s32, 1
          %s6712 = scalar_select %p6711, %s32, 1
          %p6713 = scmp.lt.s32.totalorder %s6710, 15
          %s6714 = scalar_select %p6713, %s6710, 15
          %s6715 = smul.addr %s6714, 2
          %s6716 = smul.addr %s6712, 32
          %s6717 = sadd.s32 %s6715, %s6716
          %s6718 = smul.addr %s6717, 4
          %s6719 = scalar_lea.vmem %s10, %s6718
        $region80: #{tpu_custom_call.1} parent=75 // pred_fallthru
          _
        // Predicated region
        $region81: #{tpu_custom_call.1} parent=75 // pred_check
          %p6720 = pneg %p307
        $region82: #{tpu_custom_call.1} parent=75 // pred_check_branch
          %6722 = sbr.rel (%p6720) target = $region84
        $region83: #{tpu_custom_call.1} parent=75 // pred_region
          %s6723 = sand.u32 %s292, 1
          %s6724 = scalar_lea.sflag [#allocation4], %s6723
          %s6725 = sand.u32 %s292, 1
          %s6726 = scalar_lea.vmem [#allocation3], %s6725
          %6727 = dma.done %s6724, 16
        $region84: #{tpu_custom_call.1} parent=75 // pred_fallthru
          _
      $region76: #{tpu_custom_call.1} parent=5 // pred_fallthru
        _
    $region6: #{tpu_custom_call.1} parent=1 // loop_footer
      %s25 = sadd.s32 1, %s21
    $region7: #{tpu_custom_call.1} parent=1 // loop_footer_branch
      %20 = sbr.rel target = $region3
    $region8: #{tpu_custom_call.1} parent=1 // loop_exit
      _
    %6728 = vsyncpa [#allocation4], 1
    %s6729 = scalar_lea.sflag [#allocation4], 1
    %6730 = vsyncpa %s6729, 1

</llo_original>
